<compile_context>
chip_gen: v7x
topology: tpu7x:2x2x1
jax: 0.10.0
libtpu: 0.0.40
codegen_flags: <defaults>
</compile_context>

<pallas_src>
import functools

import jax
import jax.numpy as jnp
import numpy as np
from jax import lax
from jax.experimental import pallas as pl
from jax.experimental.pallas import tpu as pltpu


def _simple_block_kernel(xt_ref, xtop_ref, xbot_ref, w3t_ref, w1t_ref, b_ref, m_ref,
                         o_ref, f_ref, *, W, FS):
    # xt_ref  : (C, TH*W)        bf16  spatial tile: channels on sublanes, pixels on lanes
    # xtop_ref: (C, W)           bf16  image row just above the tile (clamped at the top)
    # xbot_ref: (C, W)           bf16  image row just below the tile (clamped at bottom)
    # w3t_ref : (9, C, C)        bf16  conv1 weights [tap, cout, cin], BN1 scale folded in
    # w1t_ref : (C, C)           bf16  conv2 weights [cout, cin], BN2 scale folded in
    # b_ref   : (2, C, 1)        f32   folded BN biases (bias1, bias2)
    # m_ref   : (2, 1, TH*W)     bf16  0/1 lane masks for the left/right image border
    # o_ref   : (C, TH*W)        bf16  lane-dense output tile
    # f_ref   : (C, 2*FS+TH*W)   bf16  scratch: vertically padded, row-major-flat window
    C, THW = o_ref.shape
    h = pl.program_id(1)
    nh = pl.num_programs(1)

    tile = xt_ref[...]                                       # (C, THW)
    top = xtop_ref[...]                                      # (C, W)
    bot = xbot_ref[...]                                      # (C, W)
    top = jnp.where(h > 0, top, jnp.zeros_like(top))         # zero-pad at image top
    bot = jnp.where(h + 1 < nh, bot, jnp.zeros_like(bot))    # zero-pad at image bottom

    # Assemble the vertically padded window (flattened row-major) in VMEM scratch:
    #   f[:, FS-W-1]            = 0            (corner slack, masked below anyway)
    #   f[:, FS-W   : FS]       = row above the tile
    #   f[:, FS     : FS+THW]   = tile rows    (lane-aligned store, FS % 128 == 0)
    #   f[:, FS+THW : FS+THW+W] = row below the tile
    #   f[:, FS+THW+W]          = 0            (corner slack)
    zc = jnp.zeros((C, 1), f_ref.dtype)
    f_ref[:, pl.ds(FS - W - 1, 1)] = zc
    f_ref[:, pl.ds(FS - W, W)] = top
    f_ref[:, pl.ds(FS, THW)] = tile
    f_ref[:, pl.ds(FS + THW, W)] = bot
    f_ref[:, pl.ds(FS + THW + W, 1)] = zc

    # With the window flattened row-major, every 3x3 tap is a contiguous lane slice of f
    # at a static offset; only the horizontal (dx) image border needs masking.
    not_left = m_ref[0]      # 0 where w == 0     (dx == 0 taps would read column -1)
    not_right = m_ref[1]     # 0 where w == W - 1 (dx == 2 taps would read column W)

    # conv1 (+ folded BN1 scale): 9 per-tap MXU matmuls, bf16 operands, f32 accumulation.
    acc = jnp.zeros((C, THW), jnp.float32)
    for dy in range(3):
        for dx in range(3):
            start = FS + (dy - 1) * W + dx - 1
            a = f_ref[:, pl.ds(start, THW)]                  # (C, THW) bf16
            if dx == 0:
                a = a * not_left
            elif dx == 2:
                a = a * not_right
            acc = acc + jnp.dot(w3t_ref[3 * dy + dx], a,
                                preferred_element_type=jnp.float32)

    # bn1 bias + relu (f32 on the VPU)
    y = jnp.maximum(acc + b_ref[0], 0.0)

    # conv2 (1x1, + folded BN2 scale): single MXU matmul, bf16 operands, f32 accumulation.
    y2 = jnp.dot(w1t_ref[...], y.astype(jnp.bfloat16),
                 preferred_element_type=jnp.float32)

    # bn2 bias + residual + relu (no_relu = False); lane-dense bf16 store.
    out = jnp.maximum(y2 + b_ref[1] + tile.astype(jnp.float32), 0.0)
    o_ref[...] = out.astype(o_ref.dtype)


def _pick_tile_h(H, W, target_lanes=512):
    """Divisor of H with tile_h*W a multiple of 128 (unmasked, lane-dense blocks),
    closest to ~target_lanes pixels per grid step; tile_h = H (full dim) as fallback."""
    best_th, best_score = H, None
    for th in range(1, H + 1):
        if H % th:
            continue
        if (th * W) % 128 and th != H:
            continue
        score = abs(th * W - target_lanes)
        if best_score is None or score < best_score:
            best_th, best_score = th, score
    return best_th


def simple_block(x, w3, scale1, bias1, w1, scale2, bias2, *, tile_h=None):
    """SimpleBlock forward (inplanes == planes, stride=1, no downsample, eval-mode BN).

    x: (N, C, H, W) f32 (NCHW, PyTorch layout)
    w3: (9, C, C)  conv1 3x3 weights, tap index = dy*3 + dx, layout [tap, cin, cout]
    w1: (C, C)     conv2 1x1 weights, layout [cin, cout]
    scale*/bias*: (C,) folded (eval-mode) BatchNorm scale / bias
    Returns (N, C, H, W) bf16.
    """
    N, C, H, W = x.shape
    HW = H * W
    if tile_h is None:
        tile_h = _pick_tile_h(H, W)
    assert H % tile_h == 0
    THW = tile_h * W
    num_h = H // tile_h
    FS = ((W + 1 + 127) // 128) * 128   # front slack so the tile store is lane-aligned

    # bf16 activations / weights for the MXU; fold BN scales into the conv weights and
    # keep only the (f32) biases in-kernel.
    xb = x.astype(jnp.bfloat16)
    x_flat = xb.reshape(N, C, HW)                 # pixels on the lane dim
    x_rows = xb.reshape(N, C, H, 1, W)            # per-row view for the halo blocks
    w3t = jnp.transpose(w3 * scale1[None, None, :], (0, 2, 1)).astype(jnp.bfloat16)
    w1t = jnp.transpose(w1 * scale2[None, :], (1, 0)).astype(jnp.bfloat16)
    b = jnp.stack([bias1, bias2]).astype(jnp.float32).reshape(2, C, 1)

    # 0/1 lane masks for the left/right image border (position within an image row).
    wcol = np.arange(THW) % W
    masks = np.stack([(wcol != 0), (wcol != W - 1)]).astype(np.float32).reshape(2, 1, THW)
    masks = jnp.asarray(masks, jnp.bfloat16)

    kernel = functools.partial(_simple_block_kernel, W=W, FS=FS)

    out = pl.pallas_call(
        kernel,
        out_shape=jax.ShapeDtypeStruct((N, C, HW), jnp.bfloat16),
        grid_spec=pltpu.PrefetchScalarGridSpec(
            num_scalar_prefetch=0,
            grid=(N, num_h),
            in_specs=[
                # spatial tile: (C, TH*W), channels on sublanes, TH*W pixels on lanes
                pl.BlockSpec((None, C, THW), lambda n, h: (n, 0, h)),
                # single image row above / below the tile (row index clamped in the
                # index_map; masked to zero in-kernel at the image border)
                pl.BlockSpec((None, C, None, None, W),
                             lambda n, h: (n, 0, jnp.maximum(h * tile_h - 1, 0), 0, 0)),
                pl.BlockSpec((None, C, None, None, W),
                             lambda n, h: (n, 0, jnp.minimum((h + 1) * tile_h, H - 1), 0, 0)),
                # weights / biases / masks: constant index maps -> stay VMEM-resident
                pl.BlockSpec((9, C, C), lambda n, h: (0, 0, 0)),
                pl.BlockSpec((C, C), lambda n, h: (0, 0)),
                pl.BlockSpec((2, C, 1), lambda n, h: (0, 0, 0)),
                pl.BlockSpec((2, 1, THW), lambda n, h: (0, 0, 0)),
            ],
            out_specs=pl.BlockSpec((None, C, THW), lambda n, h: (n, 0, h)),
            scratch_shapes=[pltpu.VMEM((C, 2 * FS + THW), jnp.bfloat16)],
        ),
        compiler_params=pltpu.CompilerParams(
            dimension_semantics=("parallel", "parallel"),
        ),
    )(x_flat, x_rows, x_rows, w3t, w1t, b, masks)

    return out.reshape(N, C, H, W)   # free row-major reshape back to NCHW


def reference(x, w3, scale1, bias1, w1, scale2, bias2):
    """Pure-JAX f32 NCHW reference (XLA conv) matching SimpleBlock.forward (eval BN)."""
    N, C, H, W = x.shape
    w3_hwio = w3.reshape(3, 3, C, C)                     # (dy, dx, cin, cout)
    y = lax.conv_general_dilated(x, w3_hwio, (1, 1), 'SAME',
                                 dimension_numbers=('NCHW', 'HWIO', 'NCHW'))
    y = y * scale1[None, :, None, None] + bias1[None, :, None, None]
    y = jnp.maximum(y, 0.0)
    y = jnp.einsum('nchw,cd->ndhw', y, w1)
    y = y * scale2[None, :, None, None] + bias2[None, :, None, None]
    y = y + x
    return jnp.maximum(y, 0.0)


if __name__ == "__main__":
    # inplanes == planes == C, stride = 1, downsample = None, no_relu = False
    N, C, H, W = 2, 32, 16, 16
    eps = 1e-5

    key = jax.random.PRNGKey(0)
    ks = jax.random.split(key, 12)

    x = jax.random.normal(ks[0], (N, C, H, W), jnp.float32)

    # conv weights (deterministic synthetic init)
    w3 = 0.05 * jax.random.normal(ks[1], (9, C, C), jnp.float32)   # [tap, cin, cout]
    w1 = 0.05 * jax.random.normal(ks[2], (C, C), jnp.float32)      # [cin, cout]

    # BatchNorm params / running stats (deterministic, non-trivial)
    gamma1 = 1.0 + 0.1 * jax.random.normal(ks[3], (C,), jnp.float32)
    beta1 = 0.1 * jax.random.normal(ks[4], (C,), jnp.float32)
    mean1 = 0.1 * jax.random.normal(ks[5], (C,), jnp.float32)
    var1 = jnp.abs(1.0 + 0.1 * jax.random.normal(ks[6], (C,), jnp.float32))

    gamma2 = 1.0 + 0.1 * jax.random.normal(ks[7], (C,), jnp.float32)
    beta2 = 0.1 * jax.random.normal(ks[8], (C,), jnp.float32)
    mean2 = 0.1 * jax.random.normal(ks[9], (C,), jnp.float32)
    var2 = jnp.abs(1.0 + 0.1 * jax.random.normal(ks[10], (C,), jnp.float32))

    # fold BN (eval mode) into per-channel scale / bias
    scale1 = gamma1 / jnp.sqrt(var1 + eps)
    bias1 = beta1 - mean1 * scale1
    scale2 = gamma2 / jnp.sqrt(var2 + eps)
    bias2 = beta2 - mean2 * scale2

    out = simple_block(x, w3, scale1, bias1, w1, scale2, bias2)
    out = jax.block_until_ready(out)

    ref = reference(x, w3, scale1, bias1, w1, scale2, bias2)
    ref = jax.block_until_ready(ref)

    # bf16 MXU operands + bf16 output vs. f32 reference -> loosened tolerance
    np.testing.assert_allclose(np.asarray(out.astype(jnp.float32)), np.asarray(ref),
                               rtol=2e-2, atol=2e-2)
    print("KERNEL_OK")
</pallas_src>

<mosaic_0001>
module attributes {stable_mosaic.version = 11 : i64} {
  func.func @_simple_block_kernel(%arg0: i32, %arg1: i32, %arg2: memref<1x32x256xbf16, #tpu.memory_space<vmem>>, %arg3: memref<1x32x1x1x16xbf16, #tpu.memory_space<vmem>>, %arg4: memref<1x32x1x1x16xbf16, #tpu.memory_space<vmem>>, %arg5: memref<9x32x32xbf16, #tpu.memory_space<vmem>>, %arg6: memref<32x32xbf16, #tpu.memory_space<vmem>>, %arg7: memref<2x32x1xf32, #tpu.memory_space<vmem>>, %arg8: memref<2x1x256xbf16, #tpu.memory_space<vmem>>, %arg9: memref<1x32x256xbf16, #tpu.memory_space<vmem>>, %arg10: memref<32x512xbf16, #tpu.memory_space<vmem>>) attributes {dimension_semantics = [#tpu.dimension_semantics<parallel>, #tpu.dimension_semantics<parallel>], iteration_bounds = array<i64: 2, 1>, scalar_prefetch = 0 : i64, scratch_operands = 1 : i64, tpu.core_type = #tpu.core_type<tc>, window_params = [{transform_indices = @transform_0, window_bounds = array<i64: 1, 32, 256>}, {transform_indices = @transform_1, window_bounds = array<i64: 1, 32, 1, 1, 16>}, {transform_indices = @transform_2, window_bounds = array<i64: 1, 32, 1, 1, 16>}, {pipeline_mode = #tpu.pipeline_mode<synchronous>, transform_indices = @transform_3, window_bounds = array<i64: 9, 32, 32>}, {pipeline_mode = #tpu.pipeline_mode<synchronous>, transform_indices = @transform_4, window_bounds = array<i64: 32, 32>}, {pipeline_mode = #tpu.pipeline_mode<synchronous>, transform_indices = @transform_5, window_bounds = array<i64: 2, 32, 1>}, {pipeline_mode = #tpu.pipeline_mode<synchronous>, transform_indices = @transform_6, window_bounds = array<i64: 2, 1, 256>}, {transform_indices = @transform_7, window_bounds = array<i64: 1, 32, 256>}]} {
    %c0 = arith.constant 0 : index
    %c0_0 = arith.constant 0 : index
    %c0_1 = arith.constant 0 : index
    %0 = vector.load %arg2[%c0, %c0_0, %c0_1] : memref<1x32x256xbf16, #tpu.memory_space<vmem>>, vector<1x32x256xbf16>
    %1 = vector.shape_cast %0 : vector<1x32x256xbf16> to vector<32x256xbf16>
    %c0_2 = arith.constant 0 : index
    %c0_3 = arith.constant 0 : index
    %c0_4 = arith.constant 0 : index
    %c0_5 = arith.constant 0 : index
    %c0_6 = arith.constant 0 : index
    %2 = vector.load %arg3[%c0_2, %c0_3, %c0_4, %c0_5, %c0_6] : memref<1x32x1x1x16xbf16, #tpu.memory_space<vmem>>, vector<1x32x1x1x16xbf16>
    %3 = vector.shape_cast %2 : vector<1x32x1x1x16xbf16> to vector<32x16xbf16>
    %c0_7 = arith.constant 0 : index
    %c0_8 = arith.constant 0 : index
    %c0_9 = arith.constant 0 : index
    %c0_10 = arith.constant 0 : index
    %c0_11 = arith.constant 0 : index
    %4 = vector.load %arg4[%c0_7, %c0_8, %c0_9, %c0_10, %c0_11] : memref<1x32x1x1x16xbf16, #tpu.memory_space<vmem>>, vector<1x32x1x1x16xbf16>
    %5 = vector.shape_cast %4 : vector<1x32x1x1x16xbf16> to vector<32x16xbf16>
    %c0_i32 = arith.constant 0 : i32
    %6 = arith.cmpi sgt, %arg1, %c0_i32 : i32
    %cst = arith.constant 0.000000e+00 : bf16
    %7 = vector.broadcast %cst : bf16 to vector<32x16xbf16>
    %8 = arith.select %6, %3, %7 : vector<32x16xbf16>
    %c1_i32 = arith.constant 1 : i32
    %9 = arith.addi %arg1, %c1_i32 : i32
    %c1_i32_12 = arith.constant 1 : i32
    %10 = arith.cmpi slt, %9, %c1_i32_12 : i32
    %cst_13 = arith.constant 0.000000e+00 : bf16
    %11 = vector.broadcast %cst_13 : bf16 to vector<32x16xbf16>
    %12 = arith.select %10, %5, %11 : vector<32x16xbf16>
    %cst_14 = arith.constant 0.000000e+00 : bf16
    %13 = vector.broadcast %cst_14 : bf16 to vector<32x1xbf16>
    %c0_15 = arith.constant 0 : index
    %c111 = arith.constant 111 : index
    %14 = vector.load %arg10[%c0_15, %c111] : memref<32x512xbf16, #tpu.memory_space<vmem>>, vector<32x1xbf16>
    tpu.vector_store %arg10[%c0_15, %c111], %13 {strides = array<i32>} : memref<32x512xbf16, #tpu.memory_space<vmem>>, vector<32x1xbf16>,
    %c0_16 = arith.constant 0 : index
    %c112 = arith.constant 112 : index
    %15 = vector.load %arg10[%c0_16, %c112] : memref<32x512xbf16, #tpu.memory_space<vmem>>, vector<32x16xbf16>
    tpu.vector_store %arg10[%c0_16, %c112], %8 {strides = array<i32>} : memref<32x512xbf16, #tpu.memory_space<vmem>>, vector<32x16xbf16>,
    %c0_17 = arith.constant 0 : index
    %c128 = arith.constant 128 : index
    %16 = vector.load %arg10[%c0_17, %c128] : memref<32x512xbf16, #tpu.memory_space<vmem>>, vector<32x256xbf16>
    tpu.vector_store %arg10[%c0_17, %c128], %1 {strides = array<i32>} : memref<32x512xbf16, #tpu.memory_space<vmem>>, vector<32x256xbf16>,
    %c0_18 = arith.constant 0 : index
    %c384 = arith.constant 384 : index
    %17 = vector.load %arg10[%c0_18, %c384] : memref<32x512xbf16, #tpu.memory_space<vmem>>, vector<32x16xbf16>
    tpu.vector_store %arg10[%c0_18, %c384], %12 {strides = array<i32>} : memref<32x512xbf16, #tpu.memory_space<vmem>>, vector<32x16xbf16>,
    %c0_19 = arith.constant 0 : index
    %c400 = arith.constant 400 : index
    %18 = vector.load %arg10[%c0_19, %c400] : memref<32x512xbf16, #tpu.memory_space<vmem>>, vector<32x1xbf16>
    tpu.vector_store %arg10[%c0_19, %c400], %13 {strides = array<i32>} : memref<32x512xbf16, #tpu.memory_space<vmem>>, vector<32x1xbf16>,
    %c0_20 = arith.constant 0 : index
    %c0_21 = arith.constant 0 : index
    %c0_22 = arith.constant 0 : index
    %19 = vector.load %arg8[%c0_20, %c0_21, %c0_22] : memref<2x1x256xbf16, #tpu.memory_space<vmem>>, vector<1x1x256xbf16>
    %20 = vector.shape_cast %19 : vector<1x1x256xbf16> to vector<1x256xbf16>
    %c1 = arith.constant 1 : index
    %c0_23 = arith.constant 0 : index
    %c0_24 = arith.constant 0 : index
    %21 = vector.load %arg8[%c1, %c0_23, %c0_24] : memref<2x1x256xbf16, #tpu.memory_space<vmem>>, vector<1x1x256xbf16>
    %22 = vector.shape_cast %21 : vector<1x1x256xbf16> to vector<1x256xbf16>
    %cst_25 = arith.constant 0.000000e+00 : f32
    %23 = vector.broadcast %cst_25 : f32 to vector<32x256xf32>
    %c0_26 = arith.constant 0 : index
    %c111_27 = arith.constant 111 : index
    %24 = vector.load %arg10[%c0_26, %c111_27] : memref<32x512xbf16, #tpu.memory_space<vmem>>, vector<32x256xbf16>
    %25 = vector.broadcast %20 : vector<1x256xbf16> to vector<32x256xbf16>
    %26 = arith.mulf %24, %25 : vector<32x256xbf16>
    %c0_28 = arith.constant 0 : index
    %c0_29 = arith.constant 0 : index
    %c0_30 = arith.constant 0 : index
    %27 = vector.load %arg5[%c0_28, %c0_29, %c0_30] : memref<9x32x32xbf16, #tpu.memory_space<vmem>>, vector<1x32x32xbf16>
    %28 = vector.shape_cast %27 : vector<1x32x32xbf16> to vector<32x32xbf16>
    %cst_31 = arith.constant dense<0.000000e+00> : vector<32x256xf32>
    %29 = tpu.matmul %28, %26, %cst_31 {dimension_numbers = #tpu.dot_dimension_numbers<[1], [0], [0], [1], [0, 0, 1, 1], [], []>} : vector<32x32xbf16>, vector<32x256xbf16>, vector<32x256xf32> -> vector<32x256xf32>
    %30 = arith.addf %23, %29 : vector<32x256xf32>
    %c0_32 = arith.constant 0 : index
    %c112_33 = arith.constant 112 : index
    %31 = vector.load %arg10[%c0_32, %c112_33] : memref<32x512xbf16, #tpu.memory_space<vmem>>, vector<32x256xbf16>
    %c1_34 = arith.constant 1 : index
    %c0_35 = arith.constant 0 : index
    %c0_36 = arith.constant 0 : index
    %32 = vector.load %arg5[%c1_34, %c0_35, %c0_36] : memref<9x32x32xbf16, #tpu.memory_space<vmem>>, vector<1x32x32xbf16>
    %33 = vector.shape_cast %32 : vector<1x32x32xbf16> to vector<32x32xbf16>
    %cst_37 = arith.constant dense<0.000000e+00> : vector<32x256xf32>
    %34 = tpu.matmul %33, %31, %cst_37 {dimension_numbers = #tpu.dot_dimension_numbers<[1], [0], [0], [1], [0, 0, 1, 1], [], []>} : vector<32x32xbf16>, vector<32x256xbf16>, vector<32x256xf32> -> vector<32x256xf32>
    %35 = arith.addf %30, %34 : vector<32x256xf32>
    %c0_38 = arith.constant 0 : index
    %c113 = arith.constant 113 : index
    %36 = vector.load %arg10[%c0_38, %c113] : memref<32x512xbf16, #tpu.memory_space<vmem>>, vector<32x256xbf16>
    %37 = vector.broadcast %22 : vector<1x256xbf16> to vector<32x256xbf16>
    %38 = arith.mulf %36, %37 : vector<32x256xbf16>
    %c2 = arith.constant 2 : index
    %c0_39 = arith.constant 0 : index
    %c0_40 = arith.constant 0 : index
    %39 = vector.load %arg5[%c2, %c0_39, %c0_40] : memref<9x32x32xbf16, #tpu.memory_space<vmem>>, vector<1x32x32xbf16>
    %40 = vector.shape_cast %39 : vector<1x32x32xbf16> to vector<32x32xbf16>
    %cst_41 = arith.constant dense<0.000000e+00> : vector<32x256xf32>
    %41 = tpu.matmul %40, %38, %cst_41 {dimension_numbers = #tpu.dot_dimension_numbers<[1], [0], [0], [1], [0, 0, 1, 1], [], []>} : vector<32x32xbf16>, vector<32x256xbf16>, vector<32x256xf32> -> vector<32x256xf32>
    %42 = arith.addf %35, %41 : vector<32x256xf32>
    %c0_42 = arith.constant 0 : index
    %c127 = arith.constant 127 : index
    %43 = vector.load %arg10[%c0_42, %c127] : memref<32x512xbf16, #tpu.memory_space<vmem>>, vector<32x256xbf16>
    %44 = vector.broadcast %20 : vector<1x256xbf16> to vector<32x256xbf16>
    %45 = arith.mulf %43, %44 : vector<32x256xbf16>
    %c3 = arith.constant 3 : index
    %c0_43 = arith.constant 0 : index
    %c0_44 = arith.constant 0 : index
    %46 = vector.load %arg5[%c3, %c0_43, %c0_44] : memref<9x32x32xbf16, #tpu.memory_space<vmem>>, vector<1x32x32xbf16>
    %47 = vector.shape_cast %46 : vector<1x32x32xbf16> to vector<32x32xbf16>
    %cst_45 = arith.constant dense<0.000000e+00> : vector<32x256xf32>
    %48 = tpu.matmul %47, %45, %cst_45 {dimension_numbers = #tpu.dot_dimension_numbers<[1], [0], [0], [1], [0, 0, 1, 1], [], []>} : vector<32x32xbf16>, vector<32x256xbf16>, vector<32x256xf32> -> vector<32x256xf32>
    %49 = arith.addf %42, %48 : vector<32x256xf32>
    %c0_46 = arith.constant 0 : index
    %c128_47 = arith.constant 128 : index
    %50 = vector.load %arg10[%c0_46, %c128_47] : memref<32x512xbf16, #tpu.memory_space<vmem>>, vector<32x256xbf16>
    %c4 = arith.constant 4 : index
    %c0_48 = arith.constant 0 : index
    %c0_49 = arith.constant 0 : index
    %51 = vector.load %arg5[%c4, %c0_48, %c0_49] : memref<9x32x32xbf16, #tpu.memory_space<vmem>>, vector<1x32x32xbf16>
    %52 = vector.shape_cast %51 : vector<1x32x32xbf16> to vector<32x32xbf16>
    %cst_50 = arith.constant dense<0.000000e+00> : vector<32x256xf32>
    %53 = tpu.matmul %52, %50, %cst_50 {dimension_numbers = #tpu.dot_dimension_numbers<[1], [0], [0], [1], [0, 0, 1, 1], [], []>} : vector<32x32xbf16>, vector<32x256xbf16>, vector<32x256xf32> -> vector<32x256xf32>
    %54 = arith.addf %49, %53 : vector<32x256xf32>
    %c0_51 = arith.constant 0 : index
    %c129 = arith.constant 129 : index
    %55 = vector.load %arg10[%c0_51, %c129] : memref<32x512xbf16, #tpu.memory_space<vmem>>, vector<32x256xbf16>
    %56 = vector.broadcast %22 : vector<1x256xbf16> to vector<32x256xbf16>
    %57 = arith.mulf %55, %56 : vector<32x256xbf16>
    %c5 = arith.constant 5 : index
    %c0_52 = arith.constant 0 : index
    %c0_53 = arith.constant 0 : index
    %58 = vector.load %arg5[%c5, %c0_52, %c0_53] : memref<9x32x32xbf16, #tpu.memory_space<vmem>>, vector<1x32x32xbf16>
    %59 = vector.shape_cast %58 : vector<1x32x32xbf16> to vector<32x32xbf16>
    %cst_54 = arith.constant dense<0.000000e+00> : vector<32x256xf32>
    %60 = tpu.matmul %59, %57, %cst_54 {dimension_numbers = #tpu.dot_dimension_numbers<[1], [0], [0], [1], [0, 0, 1, 1], [], []>} : vector<32x32xbf16>, vector<32x256xbf16>, vector<32x256xf32> -> vector<32x256xf32>
    %61 = arith.addf %54, %60 : vector<32x256xf32>
    %c0_55 = arith.constant 0 : index
    %c143 = arith.constant 143 : index
    %62 = vector.load %arg10[%c0_55, %c143] : memref<32x512xbf16, #tpu.memory_space<vmem>>, vector<32x256xbf16>
    %63 = vector.broadcast %20 : vector<1x256xbf16> to vector<32x256xbf16>
    %64 = arith.mulf %62, %63 : vector<32x256xbf16>
    %c6 = arith.constant 6 : index
    %c0_56 = arith.constant 0 : index
    %c0_57 = arith.constant 0 : index
    %65 = vector.load %arg5[%c6, %c0_56, %c0_57] : memref<9x32x32xbf16, #tpu.memory_space<vmem>>, vector<1x32x32xbf16>
    %66 = vector.shape_cast %65 : vector<1x32x32xbf16> to vector<32x32xbf16>
    %cst_58 = arith.constant dense<0.000000e+00> : vector<32x256xf32>
    %67 = tpu.matmul %66, %64, %cst_58 {dimension_numbers = #tpu.dot_dimension_numbers<[1], [0], [0], [1], [0, 0, 1, 1], [], []>} : vector<32x32xbf16>, vector<32x256xbf16>, vector<32x256xf32> -> vector<32x256xf32>
    %68 = arith.addf %61, %67 : vector<32x256xf32>
    %c0_59 = arith.constant 0 : index
    %c144 = arith.constant 144 : index
    %69 = vector.load %arg10[%c0_59, %c144] : memref<32x512xbf16, #tpu.memory_space<vmem>>, vector<32x256xbf16>
    %c7 = arith.constant 7 : index
    %c0_60 = arith.constant 0 : index
    %c0_61 = arith.constant 0 : index
    %70 = vector.load %arg5[%c7, %c0_60, %c0_61] : memref<9x32x32xbf16, #tpu.memory_space<vmem>>, vector<1x32x32xbf16>
    %71 = vector.shape_cast %70 : vector<1x32x32xbf16> to vector<32x32xbf16>
    %cst_62 = arith.constant dense<0.000000e+00> : vector<32x256xf32>
    %72 = tpu.matmul %71, %69, %cst_62 {dimension_numbers = #tpu.dot_dimension_numbers<[1], [0], [0], [1], [0, 0, 1, 1], [], []>} : vector<32x32xbf16>, vector<32x256xbf16>, vector<32x256xf32> -> vector<32x256xf32>
    %73 = arith.addf %68, %72 : vector<32x256xf32>
    %c0_63 = arith.constant 0 : index
    %c145 = arith.constant 145 : index
    %74 = vector.load %arg10[%c0_63, %c145] : memref<32x512xbf16, #tpu.memory_space<vmem>>, vector<32x256xbf16>
    %75 = vector.broadcast %22 : vector<1x256xbf16> to vector<32x256xbf16>
    %76 = arith.mulf %74, %75 : vector<32x256xbf16>
    %c8 = arith.constant 8 : index
    %c0_64 = arith.constant 0 : index
    %c0_65 = arith.constant 0 : index
    %77 = vector.load %arg5[%c8, %c0_64, %c0_65] : memref<9x32x32xbf16, #tpu.memory_space<vmem>>, vector<1x32x32xbf16>
    %78 = vector.shape_cast %77 : vector<1x32x32xbf16> to vector<32x32xbf16>
    %cst_66 = arith.constant dense<0.000000e+00> : vector<32x256xf32>
    %79 = tpu.matmul %78, %76, %cst_66 {dimension_numbers = #tpu.dot_dimension_numbers<[1], [0], [0], [1], [0, 0, 1, 1], [], []>} : vector<32x32xbf16>, vector<32x256xbf16>, vector<32x256xf32> -> vector<32x256xf32>
    %80 = arith.addf %73, %79 : vector<32x256xf32>
    %c0_67 = arith.constant 0 : index
    %c0_68 = arith.constant 0 : index
    %c0_69 = arith.constant 0 : index
    %81 = vector.load %arg7[%c0_67, %c0_68, %c0_69] : memref<2x32x1xf32, #tpu.memory_space<vmem>>, vector<1x32x1xf32>
    %82 = vector.shape_cast %81 : vector<1x32x1xf32> to vector<32x1xf32>
    %83 = vector.broadcast %82 : vector<32x1xf32> to vector<32x256xf32>
    %84 = arith.addf %80, %83 : vector<32x256xf32>
    %cst_70 = arith.constant 0.000000e+00 : f32
    %85 = vector.broadcast %cst_70 : f32 to vector<32x256xf32>
    %86 = arith.maximumf %84, %85 : vector<32x256xf32>
    %c0_71 = arith.constant 0 : index
    %c0_72 = arith.constant 0 : index
    %87 = vector.load %arg6[%c0_71, %c0_72] : memref<32x32xbf16, #tpu.memory_space<vmem>>, vector<32x32xbf16>
    %88 = arith.truncf %86 : vector<32x256xf32> to vector<32x256xbf16>
    %cst_73 = arith.constant dense<0.000000e+00> : vector<32x256xf32>
    %89 = tpu.matmul %87, %88, %cst_73 {dimension_numbers = #tpu.dot_dimension_numbers<[1], [0], [0], [1], [0, 0, 1, 1], [], []>} : vector<32x32xbf16>, vector<32x256xbf16>, vector<32x256xf32> -> vector<32x256xf32>
    %c1_74 = arith.constant 1 : index
    %c0_75 = arith.constant 0 : index
    %c0_76 = arith.constant 0 : index
    %90 = vector.load %arg7[%c1_74, %c0_75, %c0_76] : memref<2x32x1xf32, #tpu.memory_space<vmem>>, vector<1x32x1xf32>
    %91 = vector.shape_cast %90 : vector<1x32x1xf32> to vector<32x1xf32>
    %92 = vector.broadcast %91 : vector<32x1xf32> to vector<32x256xf32>
    %93 = arith.addf %89, %92 : vector<32x256xf32>
    %94 = arith.extf %1 : vector<32x256xbf16> to vector<32x256xf32>
    %95 = arith.addf %93, %94 : vector<32x256xf32>
    %cst_77 = arith.constant 0.000000e+00 : f32
    %96 = vector.broadcast %cst_77 : f32 to vector<32x256xf32>
    %97 = arith.maximumf %95, %96 : vector<32x256xf32>
    %98 = arith.truncf %97 : vector<32x256xf32> to vector<32x256xbf16>
    %c0_78 = arith.constant 0 : index
    %c0_79 = arith.constant 0 : index
    %c0_80 = arith.constant 0 : index
    %99 = vector.load %arg9[%c0_78, %c0_79, %c0_80] : memref<1x32x256xbf16, #tpu.memory_space<vmem>>, vector<1x32x256xbf16>
    %100 = vector.shape_cast %99 : vector<1x32x256xbf16> to vector<32x256xbf16>
    %101 = vector.shape_cast %98 : vector<32x256xbf16> to vector<1x32x256xbf16>
    tpu.vector_store %arg9[%c0_78, %c0_79, %c0_80], %101 {strides = array<i32>} : memref<1x32x256xbf16, #tpu.memory_space<vmem>>, vector<1x32x256xbf16>,
    return
  }
  func.func @transform_0(%arg0: i32, %arg1: i32) -> (i32, i32, i32) {
    %c0_i32 = arith.constant 0 : i32
    %c0_i32_0 = arith.constant 0 : i32
    return %arg0, %c0_i32, %arg1 : i32, i32, i32
  }
  func.func @transform_1(%arg0: i32, %arg1: i32) -> (i32, i32, i32, i32, i32) {
    %c16_i32 = arith.constant 16 : i32
    %0 = arith.muli %arg1, %c16_i32 : i32
    %c1_i32 = arith.constant 1 : i32
    %1 = arith.subi %0, %c1_i32 : i32
    %c0_i32 = arith.constant 0 : i32
    %2 = arith.maxsi %1, %c0_i32 : i32
    %c0_i32_0 = arith.constant 0 : i32
    %c0_i32_1 = arith.constant 0 : i32
    %c0_i32_2 = arith.constant 0 : i32
    %c0_i32_3 = arith.constant 0 : i32
    return %arg0, %c0_i32_0, %2, %c0_i32_1, %c0_i32_2 : i32, i32, i32, i32, i32
  }
  func.func @transform_2(%arg0: i32, %arg1: i32) -> (i32, i32, i32, i32, i32) {
    %c1_i32 = arith.constant 1 : i32
    %0 = arith.addi %arg1, %c1_i32 : i32
    %c16_i32 = arith.constant 16 : i32
    %1 = arith.muli %0, %c16_i32 : i32
    %c15_i32 = arith.constant 15 : i32
    %2 = arith.minsi %1, %c15_i32 : i32
    %c0_i32 = arith.constant 0 : i32
    %c0_i32_0 = arith.constant 0 : i32
    %c0_i32_1 = arith.constant 0 : i32
    %c0_i32_2 = arith.constant 0 : i32
    return %arg0, %c0_i32, %2, %c0_i32_0, %c0_i32_1 : i32, i32, i32, i32, i32
  }
  func.func @transform_3(%arg0: i32, %arg1: i32) -> (i32, i32, i32) {
    %c0_i32 = arith.constant 0 : i32
    %c0_i32_0 = arith.constant 0 : i32
    %c0_i32_1 = arith.constant 0 : i32
    %c0_i32_2 = arith.constant 0 : i32
    return %c0_i32, %c0_i32_0, %c0_i32_1 : i32, i32, i32
  }
  func.func @transform_4(%arg0: i32, %arg1: i32) -> (i32, i32) {
    %c0_i32 = arith.constant 0 : i32
    %c0_i32_0 = arith.constant 0 : i32
    %c0_i32_1 = arith.constant 0 : i32
    return %c0_i32, %c0_i32_0 : i32, i32
  }
  func.func @transform_5(%arg0: i32, %arg1: i32) -> (i32, i32, i32) {
    %c0_i32 = arith.constant 0 : i32
    %c0_i32_0 = arith.constant 0 : i32
    %c0_i32_1 = arith.constant 0 : i32
    %c0_i32_2 = arith.constant 0 : i32
    return %c0_i32, %c0_i32_0, %c0_i32_1 : i32, i32, i32
  }
  func.func @transform_6(%arg0: i32, %arg1: i32) -> (i32, i32, i32) {
    %c0_i32 = arith.constant 0 : i32
    %c0_i32_0 = arith.constant 0 : i32
    %c0_i32_1 = arith.constant 0 : i32
    %c0_i32_2 = arith.constant 0 : i32
    return %c0_i32, %c0_i32_0, %c0_i32_1 : i32, i32, i32
  }
  func.func @transform_7(%arg0: i32, %arg1: i32) -> (i32, i32, i32) {
    %c0_i32 = arith.constant 0 : i32
    %c0_i32_0 = arith.constant 0 : i32
    return %arg0, %c0_i32, %arg1 : i32, i32, i32
  }
}

</mosaic_0001>

<llo_original>
// kernel: tpu_custom_call.1
$region0: #{tpu_custom_call.1}
  #allocation0 [shape = 'u32[]', space=smem, size = 0x4, offset = 0x4, fixed_abs, tag = 'smem constant byte address 0x4 - core index']
  #allocation1 [shape = 'u32[144,128]{1,0:T(1,128)}', space=vmem, size = 0x12000, scoped, tag = 'internal scratch']
  #allocation2 [shape = 'bf16[32,512]{1,0:T(16,128)(2,1)}', space=vmem, size = 0x8000, scoped, tag = 'scratch operand']
  %s0 = inlined_call_operand.vmem [shape: bf16[2,32,256], index: 0, kind: input, shape index: {}]
  %s1 = inlined_call_operand.vmem [shape: bf16[2,32,16,1,16], index: 1, kind: input, shape index: {}]
  %s2 = inlined_call_operand.vmem [shape: bf16[2,32,16,1,16], index: 2, kind: input, shape index: {}]
  %s3 = inlined_call_operand.vmem [shape: bf16[9,32,32], index: 3, kind: input, shape index: {}]
  %s4 = inlined_call_operand.vmem [shape: bf16[32,32], index: 4, kind: input, shape index: {}]
  %s5 = inlined_call_operand.vmem [shape: f32[2,32,1], index: 5, kind: input, shape index: {}]
  %s6 = inlined_call_operand.vmem [shape: bf16[2,1,256], index: 6, kind: input, shape index: {}]
  %s7 = inlined_call_operand.hbm [shape: bf16[2,32,256], index: 7, kind: output, shape index: {}]
  %s8 = sld [smem:[#allocation0]]
  $region143: #{tpu_custom_call.1} parent=0
    _
  %s10 = ssub.s32 1, %s8
  %s11 = scalar_select 0, %s10, %s8
  $region1: #{tpu_custom_call.1} parent=0
    #allocation3 [shape = 'u8[32768]{0}', space=vmem, size = 0x8000, scoped, tag = 'input window, operand 1']
    #allocation4 [shape = 'u8[32768]{0}', space=vmem, size = 0x8000, scoped, tag = 'input window, operand 2']
    #allocation5 [shape = 'u8[32768]{0}', space=vmem, size = 0x8000, scoped, tag = 'output window, operand 0']
    #allocation6 [shape = 's32[2]{0}', space=sflag, size = 0x8, scoped, tag = 'scoped memory for tpu_custom_call.1']
    %12 = vsyncpa [#allocation6], 0
    %s13 = scalar_lea.sflag [#allocation6], 1
    %14 = vsyncpa %s13, 0
    loop: start=0, step=1, limit=4
    $region2: #{tpu_custom_call.1} parent=1 // loop_pre_header
      _
    $region3: #{tpu_custom_call.1} parent=1 // loop_header
      %s16 = sphi 0, %s20
      %p17 = scmp.ge.s32.totalorder %s16, 4
      %s23 = sphi 0, %s35
      %s24 = sphi 0, %s31
      %s25 = sphi 0, %s23
      %s26 = sphi 0, %s24
      %s27 = sphi 0, %s25
      %s28 = sphi 0, %s26
      %s40 = sphi 0, %s42
      %s43 = sphi 0, %s40
      %s44 = sphi 0, %s43
      %s60 = sphi 0, %s44
      %s76 = sphi 0, %s78
      %s79 = sphi 0, %s76
      %s80 = sphi 0, %s79
      %s96 = sphi 0, %s80
      %s112 = sphi 0, %s114
      %s115 = sphi 0, %s112
      %s116 = sphi 0, %s115
      %s132 = sphi 0, %s116
      %s136 = sphi 0, %s136
      %s138 = sphi 0, %s136
      %s139 = sphi 0, %s138
      %s153 = sphi 0, %s139
      %s157 = sphi 0, %s157
      %s159 = sphi 0, %s157
      %s160 = sphi 0, %s159
      %s174 = sphi 0, %s160
      %s178 = sphi 0, %s178
      %s180 = sphi 0, %s178
      %s181 = sphi 0, %s180
      %s195 = sphi 0, %s181
      %s199 = sphi 0, %s199
      %s201 = sphi 0, %s199
      %s202 = sphi 0, %s201
      %s216 = sphi 0, %s202
      %s224 = sphi 0, %s226
      %s227 = sphi 0, %s224
      %s228 = sphi 0, %s227
      %s244 = sphi 0, %s228
    $region4: #{tpu_custom_call.1} parent=1 // loop_header_branch
      %19 = sbr.rel (%p17) target = $region8
    $region5: #{tpu_custom_call.1} parent=1 // loop_body
      %s21 = ssub.s32 %s16, 1
      %s22 = ssub.s32 %s16, 2
      %s29 = sadd.s32 1, %s24
      %p30 = scmp.ge.s32.totalorder %s29, 1
      %s31 = scalar_select %p30, 0, %s29
      %s32 = sadd.s32 1, %s23
      %s33 = scalar_select %p30, %s32, %s23
      %p34 = scmp.ge.s32.totalorder %s33, 2
      %s35 = scalar_select %p34, 0, %s33
      %s36 = ssub.s32 %s23, %s35
      %s37 = ssub.s32 %s24, %s31
      %s38 = sor.u32 %s36, %s37
      %p39 = scmp.eq.s32.totalorder %s38, 0
      %s41 = sadd.s32 %s40, 1
      %s42 = scalar_select %p39, %s40, %s41
      %p45 = pneg %p39
      %p46 = scmp.eq.s32.totalorder %s16, 1
      %p47 = por %p45, %p46
      %p48 = scmp.ne.s32.totalorder %s40, %s43
      %p49 = scmp.eq.s32.totalorder %s16, 0
      %p50 = por %p48, %p49
      %p51 = scmp.ne.s32.totalorder %s40, %s43
      %p52 = scmp.eq.s32.totalorder %s21, 1
      %p53 = por %p51, %p52
      %p54 = scmp.ne.s32.totalorder %s43, %s44
      %p55 = scmp.eq.s32.totalorder %s21, 0
      %p56 = por %p54, %p55
      %p57 = scmp.ne.s32.totalorder %s43, %s44
      %p58 = scmp.eq.s32.totalorder %s22, 1
      %p59 = por %p57, %p58
      %p61 = scmp.ne.s32.totalorder %s44, %s60
      %p62 = scmp.eq.s32.totalorder %s22, 0
      %p63 = por %p61, %p62
      %s64 = smul.u32 %s24, 16
      %s65 = ssub.s32 %s64, 1
      %p66 = scmp.gt.s32.totalorder %s65, 0
      %s67 = scalar_select %p66, %s65, 0
      %s68 = smul.u32 %s31, 16
      %s69 = ssub.s32 %s68, 1
      %p70 = scmp.gt.s32.totalorder %s69, 0
      %s71 = scalar_select %p70, %s69, 0
      %s72 = ssub.s32 %s23, %s35
      %s73 = ssub.s32 %s67, %s71
      %s74 = sor.u32 %s72, %s73
      %p75 = scmp.eq.s32.totalorder %s74, 0
      %s77 = sadd.s32 %s76, 1
      %s78 = scalar_select %p75, %s76, %s77
      %p81 = pneg %p75
      %p82 = scmp.eq.s32.totalorder %s16, 1
      %p83 = por %p81, %p82
      %p84 = scmp.ne.s32.totalorder %s76, %s79
      %p85 = scmp.eq.s32.totalorder %s16, 0
      %p86 = por %p84, %p85
      %p87 = scmp.ne.s32.totalorder %s76, %s79
      %p88 = scmp.eq.s32.totalorder %s21, 1
      %p89 = por %p87, %p88
      %p90 = scmp.ne.s32.totalorder %s79, %s80
      %p91 = scmp.eq.s32.totalorder %s21, 0
      %p92 = por %p90, %p91
      %p93 = scmp.ne.s32.totalorder %s79, %s80
      %p94 = scmp.eq.s32.totalorder %s22, 1
      %p95 = por %p93, %p94
      %p97 = scmp.ne.s32.totalorder %s80, %s96
      %p98 = scmp.eq.s32.totalorder %s22, 0
      %p99 = por %p97, %p98
      %s100 = sadd.s32 %s24, 1
      %s101 = smul.u32 %s100, 16
      %p102 = scmp.lt.s32.totalorder %s101, 15
      %s103 = scalar_select %p102, %s101, 15
      %s104 = sadd.s32 %s31, 1
      %s105 = smul.u32 %s104, 16
      %p106 = scmp.lt.s32.totalorder %s105, 15
      %s107 = scalar_select %p106, %s105, 15
      %s108 = ssub.s32 %s23, %s35
      %s109 = ssub.s32 %s103, %s107
      %s110 = sor.u32 %s108, %s109
      %p111 = scmp.eq.s32.totalorder %s110, 0
      %s113 = sadd.s32 %s112, 1
      %s114 = scalar_select %p111, %s112, %s113
      %p117 = pneg %p111
      %p118 = scmp.eq.s32.totalorder %s16, 1
      %p119 = por %p117, %p118
      %p120 = scmp.ne.s32.totalorder %s112, %s115
      %p121 = scmp.eq.s32.totalorder %s16, 0
      %p122 = por %p120, %p121
      %p123 = scmp.ne.s32.totalorder %s112, %s115
      %p124 = scmp.eq.s32.totalorder %s21, 1
      %p125 = por %p123, %p124
      %p126 = scmp.ne.s32.totalorder %s115, %s116
      %p127 = scmp.eq.s32.totalorder %s21, 0
      %p128 = por %p126, %p127
      %p129 = scmp.ne.s32.totalorder %s115, %s116
      %p130 = scmp.eq.s32.totalorder %s22, 1
      %p131 = por %p129, %p130
      %p133 = scmp.ne.s32.totalorder %s116, %s132
      %p134 = scmp.eq.s32.totalorder %s22, 0
      %p135 = por %p133, %p134
      %s137 = sadd.s32 %s136, 1
      %p140 = scmp.eq.s32.totalorder %s16, 1
      %p141 = scmp.ne.s32.totalorder %s136, %s138
      %p142 = scmp.eq.s32.totalorder %s16, 0
      %p143 = por %p141, %p142
      %p144 = scmp.ne.s32.totalorder %s136, %s138
      %p145 = scmp.eq.s32.totalorder %s21, 1
      %p146 = por %p144, %p145
      %p147 = scmp.ne.s32.totalorder %s138, %s139
      %p148 = scmp.eq.s32.totalorder %s21, 0
      %p149 = por %p147, %p148
      %p150 = scmp.ne.s32.totalorder %s138, %s139
      %p151 = scmp.eq.s32.totalorder %s22, 1
      %p152 = por %p150, %p151
      %p154 = scmp.ne.s32.totalorder %s139, %s153
      %p155 = scmp.eq.s32.totalorder %s22, 0
      %p156 = por %p154, %p155
      %s158 = sadd.s32 %s157, 1
      %p161 = scmp.eq.s32.totalorder %s16, 1
      %p162 = scmp.ne.s32.totalorder %s157, %s159
      %p163 = scmp.eq.s32.totalorder %s16, 0
      %p164 = por %p162, %p163
      %p165 = scmp.ne.s32.totalorder %s157, %s159
      %p166 = scmp.eq.s32.totalorder %s21, 1
      %p167 = por %p165, %p166
      %p168 = scmp.ne.s32.totalorder %s159, %s160
      %p169 = scmp.eq.s32.totalorder %s21, 0
      %p170 = por %p168, %p169
      %p171 = scmp.ne.s32.totalorder %s159, %s160
      %p172 = scmp.eq.s32.totalorder %s22, 1
      %p173 = por %p171, %p172
      %p175 = scmp.ne.s32.totalorder %s160, %s174
      %p176 = scmp.eq.s32.totalorder %s22, 0
      %p177 = por %p175, %p176
      %s179 = sadd.s32 %s178, 1
      %p182 = scmp.eq.s32.totalorder %s16, 1
      %p183 = scmp.ne.s32.totalorder %s178, %s180
      %p184 = scmp.eq.s32.totalorder %s16, 0
      %p185 = por %p183, %p184
      %p186 = scmp.ne.s32.totalorder %s178, %s180
      %p187 = scmp.eq.s32.totalorder %s21, 1
      %p188 = por %p186, %p187
      %p189 = scmp.ne.s32.totalorder %s180, %s181
      %p190 = scmp.eq.s32.totalorder %s21, 0
      %p191 = por %p189, %p190
      %p192 = scmp.ne.s32.totalorder %s180, %s181
      %p193 = scmp.eq.s32.totalorder %s22, 1
      %p194 = por %p192, %p193
      %p196 = scmp.ne.s32.totalorder %s181, %s195
      %p197 = scmp.eq.s32.totalorder %s22, 0
      %p198 = por %p196, %p197
      %s200 = sadd.s32 %s199, 1
      %p203 = scmp.eq.s32.totalorder %s16, 1
      %p204 = scmp.ne.s32.totalorder %s199, %s201
      %p205 = scmp.eq.s32.totalorder %s16, 0
      %p206 = por %p204, %p205
      %p207 = scmp.ne.s32.totalorder %s199, %s201
      %p208 = scmp.eq.s32.totalorder %s21, 1
      %p209 = por %p207, %p208
      %p210 = scmp.ne.s32.totalorder %s201, %s202
      %p211 = scmp.eq.s32.totalorder %s21, 0
      %p212 = por %p210, %p211
      %p213 = scmp.ne.s32.totalorder %s201, %s202
      %p214 = scmp.eq.s32.totalorder %s22, 1
      %p215 = por %p213, %p214
      %p217 = scmp.ne.s32.totalorder %s202, %s216
      %p218 = scmp.eq.s32.totalorder %s22, 0
      %p219 = por %p217, %p218
      %s220 = ssub.s32 %s23, %s35
      %s221 = ssub.s32 %s24, %s31
      %s222 = sor.u32 %s220, %s221
      %p223 = scmp.eq.s32.totalorder %s222, 0
      %s225 = sadd.s32 %s224, 1
      %s226 = scalar_select %p223, %s224, %s225
      %p229 = pneg %p223
      %p230 = scmp.eq.s32.totalorder %s16, 1
      %p231 = por %p229, %p230
      %p232 = scmp.ne.s32.totalorder %s224, %s227
      %p233 = scmp.eq.s32.totalorder %s16, 0
      %p234 = por %p232, %p233
      %p235 = scmp.ne.s32.totalorder %s224, %s227
      %p236 = scmp.eq.s32.totalorder %s21, 1
      %p237 = por %p235, %p236
      %p238 = scmp.ne.s32.totalorder %s227, %s228
      %p239 = scmp.eq.s32.totalorder %s21, 0
      %p240 = por %p238, %p239
      %p241 = scmp.ne.s32.totalorder %s227, %s228
      %p242 = scmp.eq.s32.totalorder %s22, 1
      %p243 = por %p241, %p242
      %p245 = scmp.ne.s32.totalorder %s228, %s244
      %p246 = scmp.eq.s32.totalorder %s22, 0
      %p247 = por %p245, %p246
      %p248 = scmp.le.s32.totalorder 1, %s16
      %p249 = scmp.lt.s32.totalorder %s16, 3
      %p250 = pnand %p248, %p249
      %p251 = pneg %p250
      // Predicated region
      $region9: #{tpu_custom_call.1} parent=5 // pred_check
        _
      $region10: #{tpu_custom_call.1} parent=5 // pred_check_branch
        %253 = sbr.rel (%p250) target = $region12
      $region11: #{tpu_custom_call.1} parent=5 // pred_region
        %s254 = ssub.s32 %s16, 1
        // Predicated region
        $region13: #{tpu_custom_call.1} parent=11 // pred_check
          %p255 = pneg %p149
        $region14: #{tpu_custom_call.1} parent=11 // pred_check_branch
          %257 = sbr.rel (%p255) target = $region16
        $region15: #{tpu_custom_call.1} parent=11 // pred_region
          _
        $region16: #{tpu_custom_call.1} parent=11 // pred_fallthru
          _
        // Predicated region
        $region17: #{tpu_custom_call.1} parent=11 // pred_check
          %p258 = pneg %p170
        $region18: #{tpu_custom_call.1} parent=11 // pred_check_branch
          %260 = sbr.rel (%p258) target = $region20
        $region19: #{tpu_custom_call.1} parent=11 // pred_region
          _
        $region20: #{tpu_custom_call.1} parent=11 // pred_fallthru
          _
        // Predicated region
        $region21: #{tpu_custom_call.1} parent=11 // pred_check
          %p261 = pneg %p191
        $region22: #{tpu_custom_call.1} parent=11 // pred_check_branch
          %263 = sbr.rel (%p261) target = $region24
        $region23: #{tpu_custom_call.1} parent=11 // pred_region
          _
        $region24: #{tpu_custom_call.1} parent=11 // pred_fallthru
          _
        // Predicated region
        $region25: #{tpu_custom_call.1} parent=11 // pred_check
          %p264 = pneg %p212
        $region26: #{tpu_custom_call.1} parent=11 // pred_check_branch
          %266 = sbr.rel (%p264) target = $region28
        $region27: #{tpu_custom_call.1} parent=11 // pred_region
          _
        $region28: #{tpu_custom_call.1} parent=11 // pred_fallthru
          _
      $region12: #{tpu_custom_call.1} parent=5 // pred_fallthru
        _
      %p267 = scmp.lt.s32.totalorder %s16, 2
      // Predicated region
      $region29: #{tpu_custom_call.1} parent=5 // pred_check
        %p268 = pneg %p267
      $region30: #{tpu_custom_call.1} parent=5 // pred_check_branch
        %270 = sbr.rel (%p268) target = $region32
      $region31: #{tpu_custom_call.1} parent=5 // pred_region
        // Predicated region
        $region33: #{tpu_custom_call.1} parent=31 // pred_check
          %p271 = pneg %p50
        $region34: #{tpu_custom_call.1} parent=31 // pred_check_branch
          %273 = sbr.rel (%p271) target = $region36
        $region35: #{tpu_custom_call.1} parent=31 // pred_region
          %s274 = smul.u32 2, %s24
          %p275 = scmp.lt.s32.totalorder %s23, 1
          %s276 = scalar_select %p275, %s23, 1
          %p277 = scmp.lt.s32.totalorder %s274, 1
          %s278 = scalar_select %p277, %s274, 1
          %s279 = smul.addr %s276, 8
          %s280 = sadd.s32 %s278, %s279
          %s281 = smul.addr %s280, 4
          %s282 = scalar_lea.vmem %s0, %s281
          %s283 = smul.u32 2, %s24
        $region36: #{tpu_custom_call.1} parent=31 // pred_fallthru
          _
        // Predicated region
        $region37: #{tpu_custom_call.1} parent=31 // pred_check
          %p284 = pneg %p86
        $region38: #{tpu_custom_call.1} parent=31 // pred_check_branch
          %286 = sbr.rel (%p284) target = $region40
        $region39: #{tpu_custom_call.1} parent=31 // pred_region
          %s287 = sand.u32 %s76, 1
          %s288 = sand.u32 %s76, 1
          %s289 = smul.addr %s288, 32
          %s290 = scalar_lea.vmem [#allocation3], %s289
          %s291 = smul.u32 %s24, 16
          %s292 = ssub.s32 %s291, 1
          %p293 = scmp.gt.s32.totalorder %s292, 0
          %s294 = scalar_select %p293, %s292, 0
          %s295 = smul.addr %s23, 512
          %s296 = sadd.s32 %s294, %s295
          %s297 = scalar_lea.vmem %s1, %s296
          // Predicated region
          $region41: #{tpu_custom_call.1} parent=39 // pred_check
            _
          $region42: #{tpu_custom_call.1} parent=39 // pred_check_branch
            %299 = sbr.rel (0) target = $region44
          $region43: #{tpu_custom_call.1} parent=39 // pred_region
            // Predicated region
            $region45: #{tpu_custom_call.1} parent=43 // pred_check
              _
            $region46: #{tpu_custom_call.1} parent=43 // pred_check_branch
              %301 = sbr.rel target = $region48
            $region47: #{tpu_custom_call.1} parent=43 // pred_region
              // Predicated region
              $region60: #{tpu_custom_call.1} parent=47 // pred_check
                _
              $region61: #{tpu_custom_call.1} parent=47 // pred_check_branch
                %378 = sbr.rel (0) target = $region63
              $region62: #{tpu_custom_call.1} parent=47 // pred_region
                loop: start=0, step=1, limit=1
                $region64: #{tpu_custom_call.1} parent=62 // loop_pre_header
                  _
                $region65: #{tpu_custom_call.1} parent=62 // loop_header
                  %s380 = sphi 0, %s384
                  %p381 = scmp.ge.s32.totalorder %s380, 1
                  %s385 = sphi %s297, %s297
                  %s386 = sphi %s290, %s290
                $region66: #{tpu_custom_call.1} parent=62 // loop_header_branch
                  %383 = sbr.rel (%p381) target = $region70
                $region67: #{tpu_custom_call.1} parent=62 // loop_body
                  _
                $region68: #{tpu_custom_call.1} parent=62 // loop_footer
                  %s384 = sadd.s32 1, %s380
                $region69: #{tpu_custom_call.1} parent=62 // loop_footer_branch
                  %379 = sbr.rel target = $region65
                $region70: #{tpu_custom_call.1} parent=62 // loop_exit
                  _
                loop: start=0, step=1, limit=1
                $region71: #{tpu_custom_call.1} parent=62 // loop_pre_header
                  _
                $region72: #{tpu_custom_call.1} parent=62 // loop_header
                  %s389 = sphi 0, %s393
                  %p390 = scmp.ge.s32.totalorder %s389, 1
                  %s394 = sphi %s297, %s297
                  %s395 = sphi %s290, %s290
                $region73: #{tpu_custom_call.1} parent=62 // loop_header_branch
                  %392 = sbr.rel (%p390) target = $region77
                $region74: #{tpu_custom_call.1} parent=62 // loop_body
                  %v396 = vld [vmem:[%s394] sm:$0x1]
                  %397 = vst [vmem:[%s395] sm:$0x1] %v396
                  %v398 = vld [vmem:[%s394 + $0x10] sm:$0x1]
                  %399 = vst [vmem:[%s395 + $0x1] sm:$0x1] %v398
                  %v400 = vld [vmem:[%s394 + $0x20] sm:$0x1]
                  %401 = vst [vmem:[%s395 + $0x2] sm:$0x1] %v400
                  %v402 = vld [vmem:[%s394 + $0x30] sm:$0x1]
                  %403 = vst [vmem:[%s395 + $0x3] sm:$0x1] %v402
                  %v404 = vld [vmem:[%s394 + $0x40] sm:$0x1]
                  %405 = vst [vmem:[%s395 + $0x4] sm:$0x1] %v404
                  %v406 = vld [vmem:[%s394 + $0x50] sm:$0x1]
                  %407 = vst [vmem:[%s395 + $0x5] sm:$0x1] %v406
                  %v408 = vld [vmem:[%s394 + $0x60] sm:$0x1]
                  %409 = vst [vmem:[%s395 + $0x6] sm:$0x1] %v408
                  %v410 = vld [vmem:[%s394 + $0x70] sm:$0x1]
                  %411 = vst [vmem:[%s395 + $0x7] sm:$0x1] %v410
                  %v412 = vld [vmem:[%s394 + $0x80] sm:$0x1]
                  %413 = vst [vmem:[%s395 + $0x8] sm:$0x1] %v412
                  %v414 = vld [vmem:[%s394 + $0x90] sm:$0x1]
                  %415 = vst [vmem:[%s395 + $0x9] sm:$0x1] %v414
                  %v416 = vld [vmem:[%s394 + $0xa0] sm:$0x1]
                  %417 = vst [vmem:[%s395 + $0xa] sm:$0x1] %v416
                  %v418 = vld [vmem:[%s394 + $0xb0] sm:$0x1]
                  %419 = vst [vmem:[%s395 + $0xb] sm:$0x1] %v418
                  %v420 = vld [vmem:[%s394 + $0xc0] sm:$0x1]
                  %421 = vst [vmem:[%s395 + $0xc] sm:$0x1] %v420
                  %v422 = vld [vmem:[%s394 + $0xd0] sm:$0x1]
                  %423 = vst [vmem:[%s395 + $0xd] sm:$0x1] %v422
                  %v424 = vld [vmem:[%s394 + $0xe0] sm:$0x1]
                  %425 = vst [vmem:[%s395 + $0xe] sm:$0x1] %v424
                  %v426 = vld [vmem:[%s394 + $0xf0] sm:$0x1]
                  %427 = vst [vmem:[%s395 + $0xf] sm:$0x1] %v426
                  %v428 = vld [vmem:[%s394 + $0x100] sm:$0x1]
                  %429 = vst [vmem:[%s395 + $0x10] sm:$0x1] %v428
                  %v430 = vld [vmem:[%s394 + $0x110] sm:$0x1]
                  %431 = vst [vmem:[%s395 + $0x11] sm:$0x1] %v430
                  %v432 = vld [vmem:[%s394 + $0x120] sm:$0x1]
                  %433 = vst [vmem:[%s395 + $0x12] sm:$0x1] %v432
                  %v434 = vld [vmem:[%s394 + $0x130] sm:$0x1]
                  %435 = vst [vmem:[%s395 + $0x13] sm:$0x1] %v434
                  %v436 = vld [vmem:[%s394 + $0x140] sm:$0x1]
                  %437 = vst [vmem:[%s395 + $0x14] sm:$0x1] %v436
                  %v438 = vld [vmem:[%s394 + $0x150] sm:$0x1]
                  %439 = vst [vmem:[%s395 + $0x15] sm:$0x1] %v438
                  %v440 = vld [vmem:[%s394 + $0x160] sm:$0x1]
                  %441 = vst [vmem:[%s395 + $0x16] sm:$0x1] %v440
                  %v442 = vld [vmem:[%s394 + $0x170] sm:$0x1]
                  %443 = vst [vmem:[%s395 + $0x17] sm:$0x1] %v442
                  %v444 = vld [vmem:[%s394 + $0x180] sm:$0x1]
                  %445 = vst [vmem:[%s395 + $0x18] sm:$0x1] %v444
                  %v446 = vld [vmem:[%s394 + $0x190] sm:$0x1]
                  %447 = vst [vmem:[%s395 + $0x19] sm:$0x1] %v446
                  %v448 = vld [vmem:[%s394 + $0x1a0] sm:$0x1]
                  %449 = vst [vmem:[%s395 + $0x1a] sm:$0x1] %v448
                  %v450 = vld [vmem:[%s394 + $0x1b0] sm:$0x1]
                  %451 = vst [vmem:[%s395 + $0x1b] sm:$0x1] %v450
                  %v452 = vld [vmem:[%s394 + $0x1c0] sm:$0x1]
                  %453 = vst [vmem:[%s395 + $0x1c] sm:$0x1] %v452
                  %v454 = vld [vmem:[%s394 + $0x1d0] sm:$0x1]
                  %455 = vst [vmem:[%s395 + $0x1d] sm:$0x1] %v454
                  %v456 = vld [vmem:[%s394 + $0x1e0] sm:$0x1]
                  %457 = vst [vmem:[%s395 + $0x1e] sm:$0x1] %v456
                  %v458 = vld [vmem:[%s394 + $0x1f0] sm:$0x1]
                  %459 = vst [vmem:[%s395 + $0x1f] sm:$0x1] %v458
                $region75: #{tpu_custom_call.1} parent=62 // loop_footer
                  %s393 = sadd.s32 1, %s389
                $region76: #{tpu_custom_call.1} parent=62 // loop_footer_branch
                  %388 = sbr.rel target = $region72
                $region77: #{tpu_custom_call.1} parent=62 // loop_exit
                  _
              $region63: #{tpu_custom_call.1} parent=47 // pred_fallthru
                _
            $region48: #{tpu_custom_call.1} parent=43 // pred_fallthru
              _
            // Predicated region
            $region49: #{tpu_custom_call.1} parent=43 // pred_check
              _
            $region50: #{tpu_custom_call.1} parent=43 // pred_check_branch
              %303 = sbr.rel (0) target = $region52
            $region51: #{tpu_custom_call.1} parent=43 // pred_region
              loop: start=0, step=1, limit=1
              $region53: #{tpu_custom_call.1} parent=51 // loop_pre_header
                _
              $region54: #{tpu_custom_call.1} parent=51 // loop_header
                %s306 = sphi 0, %s310
                %p307 = scmp.ge.s32.totalorder %s306, 1
                %s311 = sphi %s297, %s297
                %s312 = sphi %s290, %s290
              $region55: #{tpu_custom_call.1} parent=51 // loop_header_branch
                %309 = sbr.rel (%p307) target = $region59
              $region56: #{tpu_custom_call.1} parent=51 // loop_body
                %v313 = vld [vmem:[%s311] sm:$0x1]
                %314 = vst [vmem:[%s312] sm:$0x1] %v313
                %v315 = vld [vmem:[%s311 + $0x10] sm:$0x1]
                %316 = vst [vmem:[%s312 + $0x1] sm:$0x1] %v315
                %v317 = vld [vmem:[%s311 + $0x20] sm:$0x1]
                %318 = vst [vmem:[%s312 + $0x2] sm:$0x1] %v317
                %v319 = vld [vmem:[%s311 + $0x30] sm:$0x1]
                %320 = vst [vmem:[%s312 + $0x3] sm:$0x1] %v319
                %v321 = vld [vmem:[%s311 + $0x40] sm:$0x1]
                %322 = vst [vmem:[%s312 + $0x4] sm:$0x1] %v321
                %v323 = vld [vmem:[%s311 + $0x50] sm:$0x1]
                %324 = vst [vmem:[%s312 + $0x5] sm:$0x1] %v323
                %v325 = vld [vmem:[%s311 + $0x60] sm:$0x1]
                %326 = vst [vmem:[%s312 + $0x6] sm:$0x1] %v325
                %v327 = vld [vmem:[%s311 + $0x70] sm:$0x1]
                %328 = vst [vmem:[%s312 + $0x7] sm:$0x1] %v327
                %v329 = vld [vmem:[%s311 + $0x80] sm:$0x1]
                %330 = vst [vmem:[%s312 + $0x8] sm:$0x1] %v329
                %v331 = vld [vmem:[%s311 + $0x90] sm:$0x1]
                %332 = vst [vmem:[%s312 + $0x9] sm:$0x1] %v331
                %v333 = vld [vmem:[%s311 + $0xa0] sm:$0x1]
                %334 = vst [vmem:[%s312 + $0xa] sm:$0x1] %v333
                %v335 = vld [vmem:[%s311 + $0xb0] sm:$0x1]
                %336 = vst [vmem:[%s312 + $0xb] sm:$0x1] %v335
                %v337 = vld [vmem:[%s311 + $0xc0] sm:$0x1]
                %338 = vst [vmem:[%s312 + $0xc] sm:$0x1] %v337
                %v339 = vld [vmem:[%s311 + $0xd0] sm:$0x1]
                %340 = vst [vmem:[%s312 + $0xd] sm:$0x1] %v339
                %v341 = vld [vmem:[%s311 + $0xe0] sm:$0x1]
                %342 = vst [vmem:[%s312 + $0xe] sm:$0x1] %v341
                %v343 = vld [vmem:[%s311 + $0xf0] sm:$0x1]
                %344 = vst [vmem:[%s312 + $0xf] sm:$0x1] %v343
                %v345 = vld [vmem:[%s311 + $0x100] sm:$0x1]
                %346 = vst [vmem:[%s312 + $0x10] sm:$0x1] %v345
                %v347 = vld [vmem:[%s311 + $0x110] sm:$0x1]
                %348 = vst [vmem:[%s312 + $0x11] sm:$0x1] %v347
                %v349 = vld [vmem:[%s311 + $0x120] sm:$0x1]
                %350 = vst [vmem:[%s312 + $0x12] sm:$0x1] %v349
                %v351 = vld [vmem:[%s311 + $0x130] sm:$0x1]
                %352 = vst [vmem:[%s312 + $0x13] sm:$0x1] %v351
                %v353 = vld [vmem:[%s311 + $0x140] sm:$0x1]
                %354 = vst [vmem:[%s312 + $0x14] sm:$0x1] %v353
                %v355 = vld [vmem:[%s311 + $0x150] sm:$0x1]
                %356 = vst [vmem:[%s312 + $0x15] sm:$0x1] %v355
                %v357 = vld [vmem:[%s311 + $0x160] sm:$0x1]
                %358 = vst [vmem:[%s312 + $0x16] sm:$0x1] %v357
                %v359 = vld [vmem:[%s311 + $0x170] sm:$0x1]
                %360 = vst [vmem:[%s312 + $0x17] sm:$0x1] %v359
                %v361 = vld [vmem:[%s311 + $0x180] sm:$0x1]
                %362 = vst [vmem:[%s312 + $0x18] sm:$0x1] %v361
                %v363 = vld [vmem:[%s311 + $0x190] sm:$0x1]
                %364 = vst [vmem:[%s312 + $0x19] sm:$0x1] %v363
                %v365 = vld [vmem:[%s311 + $0x1a0] sm:$0x1]
                %366 = vst [vmem:[%s312 + $0x1a] sm:$0x1] %v365
                %v367 = vld [vmem:[%s311 + $0x1b0] sm:$0x1]
                %368 = vst [vmem:[%s312 + $0x1b] sm:$0x1] %v367
                %v369 = vld [vmem:[%s311 + $0x1c0] sm:$0x1]
                %370 = vst [vmem:[%s312 + $0x1c] sm:$0x1] %v369
                %v371 = vld [vmem:[%s311 + $0x1d0] sm:$0x1]
                %372 = vst [vmem:[%s312 + $0x1d] sm:$0x1] %v371
                %v373 = vld [vmem:[%s311 + $0x1e0] sm:$0x1]
                %374 = vst [vmem:[%s312 + $0x1e] sm:$0x1] %v373
                %v375 = vld [vmem:[%s311 + $0x1f0] sm:$0x1]
                %376 = vst [vmem:[%s312 + $0x1f] sm:$0x1] %v375
              $region57: #{tpu_custom_call.1} parent=51 // loop_footer
                %s310 = sadd.s32 1, %s306
              $region58: #{tpu_custom_call.1} parent=51 // loop_footer_branch
                %305 = sbr.rel target = $region54
              $region59: #{tpu_custom_call.1} parent=51 // loop_exit
                _
            $region52: #{tpu_custom_call.1} parent=43 // pred_fallthru
              _
          $region44: #{tpu_custom_call.1} parent=39 // pred_fallthru
            _
          %460 = vnop
        $region40: #{tpu_custom_call.1} parent=31 // pred_fallthru
          _
        // Predicated region
        $region78: #{tpu_custom_call.1} parent=31 // pred_check
          %p461 = pneg %p122
        $region79: #{tpu_custom_call.1} parent=31 // pred_check_branch
          %463 = sbr.rel (%p461) target = $region81
        $region80: #{tpu_custom_call.1} parent=31 // pred_region
          %s464 = sand.u32 %s112, 1
          %s465 = sand.u32 %s112, 1
          %s466 = smul.addr %s465, 32
          %s467 = scalar_lea.vmem [#allocation4], %s466
          %s468 = sadd.s32 %s24, 1
          %s469 = smul.u32 %s468, 16
          %p470 = scmp.lt.s32.totalorder %s469, 15
          %s471 = scalar_select %p470, %s469, 15
          %s472 = smul.addr %s23, 512
          %s473 = sadd.s32 %s471, %s472
          %s474 = scalar_lea.vmem %s2, %s473
          // Predicated region
          $region82: #{tpu_custom_call.1} parent=80 // pred_check
            _
          $region83: #{tpu_custom_call.1} parent=80 // pred_check_branch
            %476 = sbr.rel (0) target = $region85
          $region84: #{tpu_custom_call.1} parent=80 // pred_region
            // Predicated region
            $region86: #{tpu_custom_call.1} parent=84 // pred_check
              _
            $region87: #{tpu_custom_call.1} parent=84 // pred_check_branch
              %478 = sbr.rel target = $region89
            $region88: #{tpu_custom_call.1} parent=84 // pred_region
              // Predicated region
              $region101: #{tpu_custom_call.1} parent=88 // pred_check
                _
              $region102: #{tpu_custom_call.1} parent=88 // pred_check_branch
                %555 = sbr.rel (0) target = $region104
              $region103: #{tpu_custom_call.1} parent=88 // pred_region
                loop: start=0, step=1, limit=1
                $region105: #{tpu_custom_call.1} parent=103 // loop_pre_header
                  _
                $region106: #{tpu_custom_call.1} parent=103 // loop_header
                  %s557 = sphi 0, %s561
                  %p558 = scmp.ge.s32.totalorder %s557, 1
                  %s562 = sphi %s474, %s474
                  %s563 = sphi %s467, %s467
                $region107: #{tpu_custom_call.1} parent=103 // loop_header_branch
                  %560 = sbr.rel (%p558) target = $region111
                $region108: #{tpu_custom_call.1} parent=103 // loop_body
                  _
                $region109: #{tpu_custom_call.1} parent=103 // loop_footer
                  %s561 = sadd.s32 1, %s557
                $region110: #{tpu_custom_call.1} parent=103 // loop_footer_branch
                  %556 = sbr.rel target = $region106
                $region111: #{tpu_custom_call.1} parent=103 // loop_exit
                  _
                loop: start=0, step=1, limit=1
                $region112: #{tpu_custom_call.1} parent=103 // loop_pre_header
                  _
                $region113: #{tpu_custom_call.1} parent=103 // loop_header
                  %s566 = sphi 0, %s570
                  %p567 = scmp.ge.s32.totalorder %s566, 1
                  %s571 = sphi %s474, %s474
                  %s572 = sphi %s467, %s467
                $region114: #{tpu_custom_call.1} parent=103 // loop_header_branch
                  %569 = sbr.rel (%p567) target = $region118
                $region115: #{tpu_custom_call.1} parent=103 // loop_body
                  %v573 = vld [vmem:[%s571] sm:$0x1]
                  %574 = vst [vmem:[%s572] sm:$0x1] %v573
                  %v575 = vld [vmem:[%s571 + $0x10] sm:$0x1]
                  %576 = vst [vmem:[%s572 + $0x1] sm:$0x1] %v575
                  %v577 = vld [vmem:[%s571 + $0x20] sm:$0x1]
                  %578 = vst [vmem:[%s572 + $0x2] sm:$0x1] %v577
                  %v579 = vld [vmem:[%s571 + $0x30] sm:$0x1]
                  %580 = vst [vmem:[%s572 + $0x3] sm:$0x1] %v579
                  %v581 = vld [vmem:[%s571 + $0x40] sm:$0x1]
                  %582 = vst [vmem:[%s572 + $0x4] sm:$0x1] %v581
                  %v583 = vld [vmem:[%s571 + $0x50] sm:$0x1]
                  %584 = vst [vmem:[%s572 + $0x5] sm:$0x1] %v583
                  %v585 = vld [vmem:[%s571 + $0x60] sm:$0x1]
                  %586 = vst [vmem:[%s572 + $0x6] sm:$0x1] %v585
                  %v587 = vld [vmem:[%s571 + $0x70] sm:$0x1]
                  %588 = vst [vmem:[%s572 + $0x7] sm:$0x1] %v587
                  %v589 = vld [vmem:[%s571 + $0x80] sm:$0x1]
                  %590 = vst [vmem:[%s572 + $0x8] sm:$0x1] %v589
                  %v591 = vld [vmem:[%s571 + $0x90] sm:$0x1]
                  %592 = vst [vmem:[%s572 + $0x9] sm:$0x1] %v591
                  %v593 = vld [vmem:[%s571 + $0xa0] sm:$0x1]
                  %594 = vst [vmem:[%s572 + $0xa] sm:$0x1] %v593
                  %v595 = vld [vmem:[%s571 + $0xb0] sm:$0x1]
                  %596 = vst [vmem:[%s572 + $0xb] sm:$0x1] %v595
                  %v597 = vld [vmem:[%s571 + $0xc0] sm:$0x1]
                  %598 = vst [vmem:[%s572 + $0xc] sm:$0x1] %v597
                  %v599 = vld [vmem:[%s571 + $0xd0] sm:$0x1]
                  %600 = vst [vmem:[%s572 + $0xd] sm:$0x1] %v599
                  %v601 = vld [vmem:[%s571 + $0xe0] sm:$0x1]
                  %602 = vst [vmem:[%s572 + $0xe] sm:$0x1] %v601
                  %v603 = vld [vmem:[%s571 + $0xf0] sm:$0x1]
                  %604 = vst [vmem:[%s572 + $0xf] sm:$0x1] %v603
                  %v605 = vld [vmem:[%s571 + $0x100] sm:$0x1]
                  %606 = vst [vmem:[%s572 + $0x10] sm:$0x1] %v605
                  %v607 = vld [vmem:[%s571 + $0x110] sm:$0x1]
                  %608 = vst [vmem:[%s572 + $0x11] sm:$0x1] %v607
                  %v609 = vld [vmem:[%s571 + $0x120] sm:$0x1]
                  %610 = vst [vmem:[%s572 + $0x12] sm:$0x1] %v609
                  %v611 = vld [vmem:[%s571 + $0x130] sm:$0x1]
                  %612 = vst [vmem:[%s572 + $0x13] sm:$0x1] %v611
                  %v613 = vld [vmem:[%s571 + $0x140] sm:$0x1]
                  %614 = vst [vmem:[%s572 + $0x14] sm:$0x1] %v613
                  %v615 = vld [vmem:[%s571 + $0x150] sm:$0x1]
                  %616 = vst [vmem:[%s572 + $0x15] sm:$0x1] %v615
                  %v617 = vld [vmem:[%s571 + $0x160] sm:$0x1]
                  %618 = vst [vmem:[%s572 + $0x16] sm:$0x1] %v617
                  %v619 = vld [vmem:[%s571 + $0x170] sm:$0x1]
                  %620 = vst [vmem:[%s572 + $0x17] sm:$0x1] %v619
                  %v621 = vld [vmem:[%s571 + $0x180] sm:$0x1]
                  %622 = vst [vmem:[%s572 + $0x18] sm:$0x1] %v621
                  %v623 = vld [vmem:[%s571 + $0x190] sm:$0x1]
                  %624 = vst [vmem:[%s572 + $0x19] sm:$0x1] %v623
                  %v625 = vld [vmem:[%s571 + $0x1a0] sm:$0x1]
                  %626 = vst [vmem:[%s572 + $0x1a] sm:$0x1] %v625
                  %v627 = vld [vmem:[%s571 + $0x1b0] sm:$0x1]
                  %628 = vst [vmem:[%s572 + $0x1b] sm:$0x1] %v627
                  %v629 = vld [vmem:[%s571 + $0x1c0] sm:$0x1]
                  %630 = vst [vmem:[%s572 + $0x1c] sm:$0x1] %v629
                  %v631 = vld [vmem:[%s571 + $0x1d0] sm:$0x1]
                  %632 = vst [vmem:[%s572 + $0x1d] sm:$0x1] %v631
                  %v633 = vld [vmem:[%s571 + $0x1e0] sm:$0x1]
                  %634 = vst [vmem:[%s572 + $0x1e] sm:$0x1] %v633
                  %v635 = vld [vmem:[%s571 + $0x1f0] sm:$0x1]
                  %636 = vst [vmem:[%s572 + $0x1f] sm:$0x1] %v635
                $region116: #{tpu_custom_call.1} parent=103 // loop_footer
                  %s570 = sadd.s32 1, %s566
                $region117: #{tpu_custom_call.1} parent=103 // loop_footer_branch
                  %565 = sbr.rel target = $region113
                $region118: #{tpu_custom_call.1} parent=103 // loop_exit
                  _
              $region104: #{tpu_custom_call.1} parent=88 // pred_fallthru
                _
            $region89: #{tpu_custom_call.1} parent=84 // pred_fallthru
              _
            // Predicated region
            $region90: #{tpu_custom_call.1} parent=84 // pred_check
              _
            $region91: #{tpu_custom_call.1} parent=84 // pred_check_branch
              %480 = sbr.rel (0) target = $region93
            $region92: #{tpu_custom_call.1} parent=84 // pred_region
              loop: start=0, step=1, limit=1
              $region94: #{tpu_custom_call.1} parent=92 // loop_pre_header
                _
              $region95: #{tpu_custom_call.1} parent=92 // loop_header
                %s483 = sphi 0, %s487
                %p484 = scmp.ge.s32.totalorder %s483, 1
                %s488 = sphi %s474, %s474
                %s489 = sphi %s467, %s467
              $region96: #{tpu_custom_call.1} parent=92 // loop_header_branch
                %486 = sbr.rel (%p484) target = $region100
              $region97: #{tpu_custom_call.1} parent=92 // loop_body
                %v490 = vld [vmem:[%s488] sm:$0x1]
                %491 = vst [vmem:[%s489] sm:$0x1] %v490
                %v492 = vld [vmem:[%s488 + $0x10] sm:$0x1]
                %493 = vst [vmem:[%s489 + $0x1] sm:$0x1] %v492
                %v494 = vld [vmem:[%s488 + $0x20] sm:$0x1]
                %495 = vst [vmem:[%s489 + $0x2] sm:$0x1] %v494
                %v496 = vld [vmem:[%s488 + $0x30] sm:$0x1]
                %497 = vst [vmem:[%s489 + $0x3] sm:$0x1] %v496
                %v498 = vld [vmem:[%s488 + $0x40] sm:$0x1]
                %499 = vst [vmem:[%s489 + $0x4] sm:$0x1] %v498
                %v500 = vld [vmem:[%s488 + $0x50] sm:$0x1]
                %501 = vst [vmem:[%s489 + $0x5] sm:$0x1] %v500
                %v502 = vld [vmem:[%s488 + $0x60] sm:$0x1]
                %503 = vst [vmem:[%s489 + $0x6] sm:$0x1] %v502
                %v504 = vld [vmem:[%s488 + $0x70] sm:$0x1]
                %505 = vst [vmem:[%s489 + $0x7] sm:$0x1] %v504
                %v506 = vld [vmem:[%s488 + $0x80] sm:$0x1]
                %507 = vst [vmem:[%s489 + $0x8] sm:$0x1] %v506
                %v508 = vld [vmem:[%s488 + $0x90] sm:$0x1]
                %509 = vst [vmem:[%s489 + $0x9] sm:$0x1] %v508
                %v510 = vld [vmem:[%s488 + $0xa0] sm:$0x1]
                %511 = vst [vmem:[%s489 + $0xa] sm:$0x1] %v510
                %v512 = vld [vmem:[%s488 + $0xb0] sm:$0x1]
                %513 = vst [vmem:[%s489 + $0xb] sm:$0x1] %v512
                %v514 = vld [vmem:[%s488 + $0xc0] sm:$0x1]
                %515 = vst [vmem:[%s489 + $0xc] sm:$0x1] %v514
                %v516 = vld [vmem:[%s488 + $0xd0] sm:$0x1]
                %517 = vst [vmem:[%s489 + $0xd] sm:$0x1] %v516
                %v518 = vld [vmem:[%s488 + $0xe0] sm:$0x1]
                %519 = vst [vmem:[%s489 + $0xe] sm:$0x1] %v518
                %v520 = vld [vmem:[%s488 + $0xf0] sm:$0x1]
                %521 = vst [vmem:[%s489 + $0xf] sm:$0x1] %v520
                %v522 = vld [vmem:[%s488 + $0x100] sm:$0x1]
                %523 = vst [vmem:[%s489 + $0x10] sm:$0x1] %v522
                %v524 = vld [vmem:[%s488 + $0x110] sm:$0x1]
                %525 = vst [vmem:[%s489 + $0x11] sm:$0x1] %v524
                %v526 = vld [vmem:[%s488 + $0x120] sm:$0x1]
                %527 = vst [vmem:[%s489 + $0x12] sm:$0x1] %v526
                %v528 = vld [vmem:[%s488 + $0x130] sm:$0x1]
                %529 = vst [vmem:[%s489 + $0x13] sm:$0x1] %v528
                %v530 = vld [vmem:[%s488 + $0x140] sm:$0x1]
                %531 = vst [vmem:[%s489 + $0x14] sm:$0x1] %v530
                %v532 = vld [vmem:[%s488 + $0x150] sm:$0x1]
                %533 = vst [vmem:[%s489 + $0x15] sm:$0x1] %v532
                %v534 = vld [vmem:[%s488 + $0x160] sm:$0x1]
                %535 = vst [vmem:[%s489 + $0x16] sm:$0x1] %v534
                %v536 = vld [vmem:[%s488 + $0x170] sm:$0x1]
                %537 = vst [vmem:[%s489 + $0x17] sm:$0x1] %v536
                %v538 = vld [vmem:[%s488 + $0x180] sm:$0x1]
                %539 = vst [vmem:[%s489 + $0x18] sm:$0x1] %v538
                %v540 = vld [vmem:[%s488 + $0x190] sm:$0x1]
                %541 = vst [vmem:[%s489 + $0x19] sm:$0x1] %v540
                %v542 = vld [vmem:[%s488 + $0x1a0] sm:$0x1]
                %543 = vst [vmem:[%s489 + $0x1a] sm:$0x1] %v542
                %v544 = vld [vmem:[%s488 + $0x1b0] sm:$0x1]
                %545 = vst [vmem:[%s489 + $0x1b] sm:$0x1] %v544
                %v546 = vld [vmem:[%s488 + $0x1c0] sm:$0x1]
                %547 = vst [vmem:[%s489 + $0x1c] sm:$0x1] %v546
                %v548 = vld [vmem:[%s488 + $0x1d0] sm:$0x1]
                %549 = vst [vmem:[%s489 + $0x1d] sm:$0x1] %v548
                %v550 = vld [vmem:[%s488 + $0x1e0] sm:$0x1]
                %551 = vst [vmem:[%s489 + $0x1e] sm:$0x1] %v550
                %v552 = vld [vmem:[%s488 + $0x1f0] sm:$0x1]
                %553 = vst [vmem:[%s489 + $0x1f] sm:$0x1] %v552
              $region98: #{tpu_custom_call.1} parent=92 // loop_footer
                %s487 = sadd.s32 1, %s483
              $region99: #{tpu_custom_call.1} parent=92 // loop_footer_branch
                %482 = sbr.rel target = $region95
              $region100: #{tpu_custom_call.1} parent=92 // loop_exit
                _
            $region93: #{tpu_custom_call.1} parent=84 // pred_fallthru
              _
          $region85: #{tpu_custom_call.1} parent=80 // pred_fallthru
            _
          %637 = vnop
        $region81: #{tpu_custom_call.1} parent=31 // pred_fallthru
          _
      $region32: #{tpu_custom_call.1} parent=5 // pred_fallthru
        _
      %p638 = scmp.le.s32.totalorder 1, %s16
      %p639 = scmp.lt.s32.totalorder %s16, 3
      %p640 = pnand %p638, %p639
      %p641 = pneg %p640
      // Predicated region
      $region119: #{tpu_custom_call.1} parent=5 // pred_check
        _
      $region120: #{tpu_custom_call.1} parent=5 // pred_check_branch
        %643 = sbr.rel (%p640) target = $region122
      $region121: #{tpu_custom_call.1} parent=5 // pred_region
        %s644 = ssub.s32 %s16, 1
        %s645 = sand.u32 %s79, 1
        %s646 = sand.u32 %s79, 1
        %s647 = smul.addr %s646, 32
        %s648 = scalar_lea.vmem [#allocation3], %s647
        // Predicated region
        $region123: #{tpu_custom_call.1} parent=121 // pred_check
          %p649 = pneg %p92
        $region124: #{tpu_custom_call.1} parent=121 // pred_check_branch
          %651 = sbr.rel (%p649) target = $region126
        $region125: #{tpu_custom_call.1} parent=121 // pred_region
          _
        $region126: #{tpu_custom_call.1} parent=121 // pred_fallthru
          _
        %s652 = sand.u32 %s115, 1
        %s653 = sand.u32 %s115, 1
        %s654 = smul.addr %s653, 32
        %s655 = scalar_lea.vmem [#allocation4], %s654
        // Predicated region
        $region127: #{tpu_custom_call.1} parent=121 // pred_check
          %p656 = pneg %p128
        $region128: #{tpu_custom_call.1} parent=121 // pred_check_branch
          %658 = sbr.rel (%p656) target = $region130
        $region129: #{tpu_custom_call.1} parent=121 // pred_region
          _
        $region130: #{tpu_custom_call.1} parent=121 // pred_fallthru
          _
        %s659 = smul.u32 2, %s26
        %p660 = scmp.lt.s32.totalorder %s25, 1
        %s661 = scalar_select %p660, %s25, 1
        %p662 = scmp.lt.s32.totalorder %s659, 1
        %s663 = scalar_select %p662, %s659, 1
        %s664 = smul.addr %s661, 8
        %s665 = sadd.s32 %s663, %s664
        %s666 = smul.addr %s665, 4
        %s667 = scalar_lea.vmem %s0, %s666
        %p668 = pneg %p56
        %p669 = pneg %p53
        %s670 = sand.u32 %s79, 1
        %s671 = sand.u32 %s79, 1
        %s672 = smul.addr %s671, 32
        %s673 = scalar_lea.vmem [#allocation3], %s672
        %p674 = pneg %p92
        %p675 = pneg %p89
        %s676 = sand.u32 %s115, 1
        %s677 = sand.u32 %s115, 1
        %s678 = smul.addr %s677, 32
        %s679 = scalar_lea.vmem [#allocation4], %s678
        %p680 = pneg %p128
        %p681 = pneg %p125
        %p682 = pneg %p149
        %p683 = pneg %p146
        %p684 = pneg %p170
        %p685 = pneg %p167
        %p686 = pneg %p191
        %p687 = pneg %p188
        %p688 = pneg %p212
        %p689 = pneg %p209
        %p690 = pneg %p240
        %p691 = pneg %p237
        %s692 = sand.u32 %s227, 1
        %s693 = scalar_lea.sflag [#allocation6], %s692
        %s694 = sand.u32 %s227, 1
        %s695 = smul.addr %s694, 32
        %s696 = scalar_lea.vmem [#allocation5], %s695
        %s697 = smul.u32 2, %s26
        %p698 = scmp.lt.s32.totalorder %s25, 1
        %s699 = scalar_select %p698, %s25, 1
        %p700 = scmp.lt.s32.totalorder %s697, 1
        %s701 = scalar_select %p700, %s697, 1
        %s702 = smul.addr %s699, 8
        %s703 = sadd.s32 %s701, %s702
        %s704 = smul.addr %s703, 4
        %s705 = scalar_lea.vmem %s0, %s704
        %s706 = smul.u32 2, %s26
        %s707 = smul.u32 %s26, 16
        %s708 = ssub.s32 %s707, 1
        %p709 = scmp.gt.s32.totalorder %s708, 0
        %s710 = scalar_select %p709, %s708, 0
        %s711 = sadd.s32 %s26, 1
        %s712 = smul.u32 %s711, 16
        %p713 = scmp.lt.s32.totalorder %s712, 15
        %s714 = scalar_select %p713, %s712, 15
        %s715 = smul.u32 2, %s26
        %v718 = vld [vmem:[%s705] sm:$0xff]
        %v719 = vld [vmem:[%s705 + $0x8] sm:$0xff]
        %v720 = vld [vmem:[%s705 + $0x10] sm:$0xff]
        %v721 = vld [vmem:[%s705 + $0x18] sm:$0xff]
        %v722 = vld [vmem:[%s648] sm:$0x1]
        %v723 = vld [vmem:[%s648 + $0x1] sm:$0x1]
        %v724 = vld [vmem:[%s648 + $0x2] sm:$0x1]
        %v725 = vld [vmem:[%s648 + $0x3] sm:$0x1]
        %v726 = vld [vmem:[%s648 + $0x4] sm:$0x1]
        %v727 = vld [vmem:[%s648 + $0x5] sm:$0x1]
        %v728 = vld [vmem:[%s648 + $0x6] sm:$0x1]
        %v729 = vld [vmem:[%s648 + $0x7] sm:$0x1]
        %v730 = vld [vmem:[%s648 + $0x8] sm:$0x1]
        %v731 = vld [vmem:[%s648 + $0x9] sm:$0x1]
        %v732 = vld [vmem:[%s648 + $0xa] sm:$0x1]
        %v733 = vld [vmem:[%s648 + $0xb] sm:$0x1]
        %v734 = vld [vmem:[%s648 + $0xc] sm:$0x1]
        %v735 = vld [vmem:[%s648 + $0xd] sm:$0x1]
        %v736 = vld [vmem:[%s648 + $0xe] sm:$0x1]
        %v737 = vld [vmem:[%s648 + $0xf] sm:$0x1]
        %v738 = vld [vmem:[%s648 + $0x10] sm:$0x1]
        %v739 = vld [vmem:[%s648 + $0x11] sm:$0x1]
        %v740 = vld [vmem:[%s648 + $0x12] sm:$0x1]
        %v741 = vld [vmem:[%s648 + $0x13] sm:$0x1]
        %v742 = vld [vmem:[%s648 + $0x14] sm:$0x1]
        %v743 = vld [vmem:[%s648 + $0x15] sm:$0x1]
        %v744 = vld [vmem:[%s648 + $0x16] sm:$0x1]
        %v745 = vld [vmem:[%s648 + $0x17] sm:$0x1]
        %v746 = vld [vmem:[%s648 + $0x18] sm:$0x1]
        %v747 = vld [vmem:[%s648 + $0x19] sm:$0x1]
        %v748 = vld [vmem:[%s648 + $0x1a] sm:$0x1]
        %v749 = vld [vmem:[%s648 + $0x1b] sm:$0x1]
        %v750 = vld [vmem:[%s648 + $0x1c] sm:$0x1]
        %v751 = vld [vmem:[%s648 + $0x1d] sm:$0x1]
        %v752 = vld [vmem:[%s648 + $0x1e] sm:$0x1]
        %v753 = vld [vmem:[%s648 + $0x1f] sm:$0x1]
        %v754 = vld [vmem:[%s655] sm:$0x1]
        %v755 = vld [vmem:[%s655 + $0x1] sm:$0x1]
        %v756 = vld [vmem:[%s655 + $0x2] sm:$0x1]
        %v757 = vld [vmem:[%s655 + $0x3] sm:$0x1]
        %v758 = vld [vmem:[%s655 + $0x4] sm:$0x1]
        %v759 = vld [vmem:[%s655 + $0x5] sm:$0x1]
        %v760 = vld [vmem:[%s655 + $0x6] sm:$0x1]
        %v761 = vld [vmem:[%s655 + $0x7] sm:$0x1]
        %v762 = vld [vmem:[%s655 + $0x8] sm:$0x1]
        %v763 = vld [vmem:[%s655 + $0x9] sm:$0x1]
        %v764 = vld [vmem:[%s655 + $0xa] sm:$0x1]
        %v765 = vld [vmem:[%s655 + $0xb] sm:$0x1]
        %v766 = vld [vmem:[%s655 + $0xc] sm:$0x1]
        %v767 = vld [vmem:[%s655 + $0xd] sm:$0x1]
        %v768 = vld [vmem:[%s655 + $0xe] sm:$0x1]
        %v769 = vld [vmem:[%s655 + $0xf] sm:$0x1]
        %v770 = vld [vmem:[%s655 + $0x10] sm:$0x1]
        %v771 = vld [vmem:[%s655 + $0x11] sm:$0x1]
        %v772 = vld [vmem:[%s655 + $0x12] sm:$0x1]
        %v773 = vld [vmem:[%s655 + $0x13] sm:$0x1]
        %v774 = vld [vmem:[%s655 + $0x14] sm:$0x1]
        %v775 = vld [vmem:[%s655 + $0x15] sm:$0x1]
        %v776 = vld [vmem:[%s655 + $0x16] sm:$0x1]
        %v777 = vld [vmem:[%s655 + $0x17] sm:$0x1]
        %v778 = vld [vmem:[%s655 + $0x18] sm:$0x1]
        %v779 = vld [vmem:[%s655 + $0x19] sm:$0x1]
        %v780 = vld [vmem:[%s655 + $0x1a] sm:$0x1]
        %v781 = vld [vmem:[%s655 + $0x1b] sm:$0x1]
        %v782 = vld [vmem:[%s655 + $0x1c] sm:$0x1]
        %v783 = vld [vmem:[%s655 + $0x1d] sm:$0x1]
        %v784 = vld [vmem:[%s655 + $0x1e] sm:$0x1]
        %v785 = vld [vmem:[%s655 + $0x1f] sm:$0x1]
        %p786 = scmp.gt.s32.totalorder %s26, 0
        %s787 = scalar_select %p786, 1, 0
        %v788 = vstv %s787
        %vm789 = vcmp.eq.s32.totalorder %v788, 1
        %v790 = vsel %vm789, 1, 0
        %v791 = vpack.c.b16 %v790, %v790
        %vm792 = vcmp.ne.s16.totalorder %v791, 0
        %v793 = vsel %vm792, %v722, 0
        %v794 = vsel %vm792, %v723, 0
        %v795 = vsel %vm792, %v724, 0
        %v796 = vsel %vm792, %v725, 0
        %v797 = vsel %vm792, %v726, 0
        %v798 = vsel %vm792, %v727, 0
        %v799 = vsel %vm792, %v728, 0
        %v800 = vsel %vm792, %v729, 0
        %v801 = vsel %vm792, %v730, 0
        %v802 = vsel %vm792, %v731, 0
        %v803 = vsel %vm792, %v732, 0
        %v804 = vsel %vm792, %v733, 0
        %v805 = vsel %vm792, %v734, 0
        %v806 = vsel %vm792, %v735, 0
        %v807 = vsel %vm792, %v736, 0
        %v808 = vsel %vm792, %v737, 0
        %v809 = vsel %vm792, %v738, 0
        %v810 = vsel %vm792, %v739, 0
        %v811 = vsel %vm792, %v740, 0
        %v812 = vsel %vm792, %v741, 0
        %v813 = vsel %vm792, %v742, 0
        %v814 = vsel %vm792, %v743, 0
        %v815 = vsel %vm792, %v744, 0
        %v816 = vsel %vm792, %v745, 0
        %v817 = vsel %vm792, %v746, 0
        %v818 = vsel %vm792, %v747, 0
        %v819 = vsel %vm792, %v748, 0
        %v820 = vsel %vm792, %v749, 0
        %v821 = vsel %vm792, %v750, 0
        %v822 = vsel %vm792, %v751, 0
        %v823 = vsel %vm792, %v752, 0
        %v824 = vsel %vm792, %v753, 0
        %s825 = sadd.s32 %s26, 1
        %p826 = scmp.lt.s32.totalorder %s825, 1
        %s827 = scalar_select %p826, 1, 0
        %v828 = vstv %s827
        %vm829 = vcmp.eq.s32.totalorder %v828, 1
        %v830 = vsel %vm829, 1, 0
        %v831 = vpack.c.b16 %v830, %v830
        %vm832 = vcmp.ne.s16.totalorder %v831, 0
        %v833 = vsel %vm832, %v754, 0
        %v834 = vsel %vm832, %v755, 0
        %v835 = vsel %vm832, %v756, 0
        %v836 = vsel %vm832, %v757, 0
        %v837 = vsel %vm832, %v758, 0
        %v838 = vsel %vm832, %v759, 0
        %v839 = vsel %vm832, %v760, 0
        %v840 = vsel %vm832, %v761, 0
        %v841 = vsel %vm832, %v762, 0
        %v842 = vsel %vm832, %v763, 0
        %v843 = vsel %vm832, %v764, 0
        %v844 = vsel %vm832, %v765, 0
        %v845 = vsel %vm832, %v766, 0
        %v846 = vsel %vm832, %v767, 0
        %v847 = vsel %vm832, %v768, 0
        %v848 = vsel %vm832, %v769, 0
        %v849 = vsel %vm832, %v770, 0
        %v850 = vsel %vm832, %v771, 0
        %v851 = vsel %vm832, %v772, 0
        %v852 = vsel %vm832, %v773, 0
        %v853 = vsel %vm832, %v774, 0
        %v854 = vsel %vm832, %v775, 0
        %v855 = vsel %vm832, %v776, 0
        %v856 = vsel %vm832, %v777, 0
        %v857 = vsel %vm832, %v778, 0
        %v858 = vsel %vm832, %v779, 0
        %v859 = vsel %vm832, %v780, 0
        %v860 = vsel %vm832, %v781, 0
        %v861 = vsel %vm832, %v782, 0
        %v862 = vsel %vm832, %v783, 0
        %v863 = vsel %vm832, %v784, 0
        %v864 = vsel %vm832, %v785, 0
        %vm865 = vcmask 917368
        %866 = vst.msk [vmem:[#allocation2] sm:$0xff] %vm865, 0
        %867 = vst.msk [vmem:[#allocation2 + $0x20] sm:$0xff] %vm865, 0
        %v901 = vunpack.c.l.s4 1966171168
        %v902 = vunpack.c.0.s8 %v901
        %v903 = vlaneseq
        %v904 = vshrl.u32 %v903, 7
        %v905 = vsub.s32 %v902, %v904
        %v906 = vrot.slane %v793, %v905
        %v908 = vunpack.c.l.s4 1966171168
        %v909 = vunpack.c.0.s8 %v908
        %v910 = vlaneseq
        %v911 = vshrl.u32 %v910, 7
        %v912 = vsub.s32 %v909, %v911
        %v913 = vrot.slane %v906, %v912
        %v915 = vunpack.c.l.s4 1966171168
        %v916 = vunpack.c.0.s8 %v915
        %v917 = vlaneseq
        %v918 = vshrl.u32 %v917, 7
        %v919 = vsub.s32 %v916, %v918
        %v920 = vrot.slane %v794, %v919
        %v922 = vunpack.c.l.s4 1966171168
        %v923 = vunpack.c.0.s8 %v922
        %v924 = vlaneseq
        %v925 = vshrl.u32 %v924, 7
        %v926 = vsub.s32 %v923, %v925
        %v927 = vrot.slane %v920, %v926
        %v929 = vunpack.c.l.s4 1966171168
        %v930 = vunpack.c.0.s8 %v929
        %v931 = vlaneseq
        %v932 = vshrl.u32 %v931, 7
        %v933 = vsub.s32 %v930, %v932
        %v934 = vrot.slane %v795, %v933
        %v936 = vunpack.c.l.s4 1966171168
        %v937 = vunpack.c.0.s8 %v936
        %v938 = vlaneseq
        %v939 = vshrl.u32 %v938, 7
        %v940 = vsub.s32 %v937, %v939
        %v941 = vrot.slane %v934, %v940
        %v943 = vunpack.c.l.s4 1966171168
        %v944 = vunpack.c.0.s8 %v943
        %v945 = vlaneseq
        %v946 = vshrl.u32 %v945, 7
        %v947 = vsub.s32 %v944, %v946
        %v948 = vrot.slane %v796, %v947
        %v950 = vunpack.c.l.s4 1966171168
        %v951 = vunpack.c.0.s8 %v950
        %v952 = vlaneseq
        %v953 = vshrl.u32 %v952, 7
        %v954 = vsub.s32 %v951, %v953
        %v955 = vrot.slane %v948, %v954
        %v957 = vunpack.c.l.s4 1966171168
        %v958 = vunpack.c.0.s8 %v957
        %v959 = vlaneseq
        %v960 = vshrl.u32 %v959, 7
        %v961 = vsub.s32 %v958, %v960
        %v962 = vrot.slane %v797, %v961
        %v964 = vunpack.c.l.s4 1966171168
        %v965 = vunpack.c.0.s8 %v964
        %v966 = vlaneseq
        %v967 = vshrl.u32 %v966, 7
        %v968 = vsub.s32 %v965, %v967
        %v969 = vrot.slane %v962, %v968
        %v971 = vunpack.c.l.s4 1966171168
        %v972 = vunpack.c.0.s8 %v971
        %v973 = vlaneseq
        %v974 = vshrl.u32 %v973, 7
        %v975 = vsub.s32 %v972, %v974
        %v976 = vrot.slane %v798, %v975
        %v978 = vunpack.c.l.s4 1966171168
        %v979 = vunpack.c.0.s8 %v978
        %v980 = vlaneseq
        %v981 = vshrl.u32 %v980, 7
        %v982 = vsub.s32 %v979, %v981
        %v983 = vrot.slane %v976, %v982
        %v985 = vunpack.c.l.s4 1966171168
        %v986 = vunpack.c.0.s8 %v985
        %v987 = vlaneseq
        %v988 = vshrl.u32 %v987, 7
        %v989 = vsub.s32 %v986, %v988
        %v990 = vrot.slane %v799, %v989
        %v992 = vunpack.c.l.s4 1966171168
        %v993 = vunpack.c.0.s8 %v992
        %v994 = vlaneseq
        %v995 = vshrl.u32 %v994, 7
        %v996 = vsub.s32 %v993, %v995
        %v997 = vrot.slane %v990, %v996
        %v999 = vunpack.c.l.s4 1966171168
        %v1000 = vunpack.c.0.s8 %v999
        %v1001 = vlaneseq
        %v1002 = vshrl.u32 %v1001, 7
        %v1003 = vsub.s32 %v1000, %v1002
        %v1004 = vrot.slane %v800, %v1003
        %v1006 = vunpack.c.l.s4 1966171168
        %v1007 = vunpack.c.0.s8 %v1006
        %v1008 = vlaneseq
        %v1009 = vshrl.u32 %v1008, 7
        %v1010 = vsub.s32 %v1007, %v1009
        %v1011 = vrot.slane %v1004, %v1010
        %v1013 = vunpack.c.l.s4 1966171168
        %v1014 = vunpack.c.0.s8 %v1013
        %v1015 = vlaneseq
        %v1016 = vshrl.u32 %v1015, 7
        %v1017 = vsub.s32 %v1014, %v1016
        %v1018 = vrot.slane %v801, %v1017
        %v1020 = vunpack.c.l.s4 1966171168
        %v1021 = vunpack.c.0.s8 %v1020
        %v1022 = vlaneseq
        %v1023 = vshrl.u32 %v1022, 7
        %v1024 = vsub.s32 %v1021, %v1023
        %v1025 = vrot.slane %v1018, %v1024
        %v1027 = vunpack.c.l.s4 1966171168
        %v1028 = vunpack.c.0.s8 %v1027
        %v1029 = vlaneseq
        %v1030 = vshrl.u32 %v1029, 7
        %v1031 = vsub.s32 %v1028, %v1030
        %v1032 = vrot.slane %v802, %v1031
        %v1034 = vunpack.c.l.s4 1966171168
        %v1035 = vunpack.c.0.s8 %v1034
        %v1036 = vlaneseq
        %v1037 = vshrl.u32 %v1036, 7
        %v1038 = vsub.s32 %v1035, %v1037
        %v1039 = vrot.slane %v1032, %v1038
        %v1041 = vunpack.c.l.s4 1966171168
        %v1042 = vunpack.c.0.s8 %v1041
        %v1043 = vlaneseq
        %v1044 = vshrl.u32 %v1043, 7
        %v1045 = vsub.s32 %v1042, %v1044
        %v1046 = vrot.slane %v803, %v1045
        %v1048 = vunpack.c.l.s4 1966171168
        %v1049 = vunpack.c.0.s8 %v1048
        %v1050 = vlaneseq
        %v1051 = vshrl.u32 %v1050, 7
        %v1052 = vsub.s32 %v1049, %v1051
        %v1053 = vrot.slane %v1046, %v1052
        %v1055 = vunpack.c.l.s4 1966171168
        %v1056 = vunpack.c.0.s8 %v1055
        %v1057 = vlaneseq
        %v1058 = vshrl.u32 %v1057, 7
        %v1059 = vsub.s32 %v1056, %v1058
        %v1060 = vrot.slane %v804, %v1059
        %v1062 = vunpack.c.l.s4 1966171168
        %v1063 = vunpack.c.0.s8 %v1062
        %v1064 = vlaneseq
        %v1065 = vshrl.u32 %v1064, 7
        %v1066 = vsub.s32 %v1063, %v1065
        %v1067 = vrot.slane %v1060, %v1066
        %v1069 = vunpack.c.l.s4 1966171168
        %v1070 = vunpack.c.0.s8 %v1069
        %v1071 = vlaneseq
        %v1072 = vshrl.u32 %v1071, 7
        %v1073 = vsub.s32 %v1070, %v1072
        %v1074 = vrot.slane %v805, %v1073
        %v1076 = vunpack.c.l.s4 1966171168
        %v1077 = vunpack.c.0.s8 %v1076
        %v1078 = vlaneseq
        %v1079 = vshrl.u32 %v1078, 7
        %v1080 = vsub.s32 %v1077, %v1079
        %v1081 = vrot.slane %v1074, %v1080
        %v1083 = vunpack.c.l.s4 1966171168
        %v1084 = vunpack.c.0.s8 %v1083
        %v1085 = vlaneseq
        %v1086 = vshrl.u32 %v1085, 7
        %v1087 = vsub.s32 %v1084, %v1086
        %v1088 = vrot.slane %v806, %v1087
        %v1090 = vunpack.c.l.s4 1966171168
        %v1091 = vunpack.c.0.s8 %v1090
        %v1092 = vlaneseq
        %v1093 = vshrl.u32 %v1092, 7
        %v1094 = vsub.s32 %v1091, %v1093
        %v1095 = vrot.slane %v1088, %v1094
        %v1097 = vunpack.c.l.s4 1966171168
        %v1098 = vunpack.c.0.s8 %v1097
        %v1099 = vlaneseq
        %v1100 = vshrl.u32 %v1099, 7
        %v1101 = vsub.s32 %v1098, %v1100
        %v1102 = vrot.slane %v807, %v1101
        %v1104 = vunpack.c.l.s4 1966171168
        %v1105 = vunpack.c.0.s8 %v1104
        %v1106 = vlaneseq
        %v1107 = vshrl.u32 %v1106, 7
        %v1108 = vsub.s32 %v1105, %v1107
        %v1109 = vrot.slane %v1102, %v1108
        %v1111 = vunpack.c.l.s4 1966171168
        %v1112 = vunpack.c.0.s8 %v1111
        %v1113 = vlaneseq
        %v1114 = vshrl.u32 %v1113, 7
        %v1115 = vsub.s32 %v1112, %v1114
        %v1116 = vrot.slane %v808, %v1115
        %v1118 = vunpack.c.l.s4 1966171168
        %v1119 = vunpack.c.0.s8 %v1118
        %v1120 = vlaneseq
        %v1121 = vshrl.u32 %v1120, 7
        %v1122 = vsub.s32 %v1119, %v1121
        %v1123 = vrot.slane %v1116, %v1122
        %v1125 = vunpack.c.l.s4 1966171168
        %v1126 = vunpack.c.0.s8 %v1125
        %v1127 = vlaneseq
        %v1128 = vshrl.u32 %v1127, 7
        %v1129 = vsub.s32 %v1126, %v1128
        %v1130 = vrot.slane %v809, %v1129
        %v1132 = vunpack.c.l.s4 1966171168
        %v1133 = vunpack.c.0.s8 %v1132
        %v1134 = vlaneseq
        %v1135 = vshrl.u32 %v1134, 7
        %v1136 = vsub.s32 %v1133, %v1135
        %v1137 = vrot.slane %v1130, %v1136
        %v1139 = vunpack.c.l.s4 1966171168
        %v1140 = vunpack.c.0.s8 %v1139
        %v1141 = vlaneseq
        %v1142 = vshrl.u32 %v1141, 7
        %v1143 = vsub.s32 %v1140, %v1142
        %v1144 = vrot.slane %v810, %v1143
        %v1146 = vunpack.c.l.s4 1966171168
        %v1147 = vunpack.c.0.s8 %v1146
        %v1148 = vlaneseq
        %v1149 = vshrl.u32 %v1148, 7
        %v1150 = vsub.s32 %v1147, %v1149
        %v1151 = vrot.slane %v1144, %v1150
        %v1153 = vunpack.c.l.s4 1966171168
        %v1154 = vunpack.c.0.s8 %v1153
        %v1155 = vlaneseq
        %v1156 = vshrl.u32 %v1155, 7
        %v1157 = vsub.s32 %v1154, %v1156
        %v1158 = vrot.slane %v811, %v1157
        %v1160 = vunpack.c.l.s4 1966171168
        %v1161 = vunpack.c.0.s8 %v1160
        %v1162 = vlaneseq
        %v1163 = vshrl.u32 %v1162, 7
        %v1164 = vsub.s32 %v1161, %v1163
        %v1165 = vrot.slane %v1158, %v1164
        %v1167 = vunpack.c.l.s4 1966171168
        %v1168 = vunpack.c.0.s8 %v1167
        %v1169 = vlaneseq
        %v1170 = vshrl.u32 %v1169, 7
        %v1171 = vsub.s32 %v1168, %v1170
        %v1172 = vrot.slane %v812, %v1171
        %v1174 = vunpack.c.l.s4 1966171168
        %v1175 = vunpack.c.0.s8 %v1174
        %v1176 = vlaneseq
        %v1177 = vshrl.u32 %v1176, 7
        %v1178 = vsub.s32 %v1175, %v1177
        %v1179 = vrot.slane %v1172, %v1178
        %v1181 = vunpack.c.l.s4 1966171168
        %v1182 = vunpack.c.0.s8 %v1181
        %v1183 = vlaneseq
        %v1184 = vshrl.u32 %v1183, 7
        %v1185 = vsub.s32 %v1182, %v1184
        %v1186 = vrot.slane %v813, %v1185
        %v1188 = vunpack.c.l.s4 1966171168
        %v1189 = vunpack.c.0.s8 %v1188
        %v1190 = vlaneseq
        %v1191 = vshrl.u32 %v1190, 7
        %v1192 = vsub.s32 %v1189, %v1191
        %v1193 = vrot.slane %v1186, %v1192
        %v1195 = vunpack.c.l.s4 1966171168
        %v1196 = vunpack.c.0.s8 %v1195
        %v1197 = vlaneseq
        %v1198 = vshrl.u32 %v1197, 7
        %v1199 = vsub.s32 %v1196, %v1198
        %v1200 = vrot.slane %v814, %v1199
        %v1202 = vunpack.c.l.s4 1966171168
        %v1203 = vunpack.c.0.s8 %v1202
        %v1204 = vlaneseq
        %v1205 = vshrl.u32 %v1204, 7
        %v1206 = vsub.s32 %v1203, %v1205
        %v1207 = vrot.slane %v1200, %v1206
        %v1209 = vunpack.c.l.s4 1966171168
        %v1210 = vunpack.c.0.s8 %v1209
        %v1211 = vlaneseq
        %v1212 = vshrl.u32 %v1211, 7
        %v1213 = vsub.s32 %v1210, %v1212
        %v1214 = vrot.slane %v815, %v1213
        %v1216 = vunpack.c.l.s4 1966171168
        %v1217 = vunpack.c.0.s8 %v1216
        %v1218 = vlaneseq
        %v1219 = vshrl.u32 %v1218, 7
        %v1220 = vsub.s32 %v1217, %v1219
        %v1221 = vrot.slane %v1214, %v1220
        %v1223 = vunpack.c.l.s4 1966171168
        %v1224 = vunpack.c.0.s8 %v1223
        %v1225 = vlaneseq
        %v1226 = vshrl.u32 %v1225, 7
        %v1227 = vsub.s32 %v1224, %v1226
        %v1228 = vrot.slane %v816, %v1227
        %v1230 = vunpack.c.l.s4 1966171168
        %v1231 = vunpack.c.0.s8 %v1230
        %v1232 = vlaneseq
        %v1233 = vshrl.u32 %v1232, 7
        %v1234 = vsub.s32 %v1231, %v1233
        %v1235 = vrot.slane %v1228, %v1234
        %v1237 = vunpack.c.l.s4 1966171168
        %v1238 = vunpack.c.0.s8 %v1237
        %v1239 = vlaneseq
        %v1240 = vshrl.u32 %v1239, 7
        %v1241 = vsub.s32 %v1238, %v1240
        %v1242 = vrot.slane %v817, %v1241
        %v1244 = vunpack.c.l.s4 1966171168
        %v1245 = vunpack.c.0.s8 %v1244
        %v1246 = vlaneseq
        %v1247 = vshrl.u32 %v1246, 7
        %v1248 = vsub.s32 %v1245, %v1247
        %v1249 = vrot.slane %v1242, %v1248
        %v1251 = vunpack.c.l.s4 1966171168
        %v1252 = vunpack.c.0.s8 %v1251
        %v1253 = vlaneseq
        %v1254 = vshrl.u32 %v1253, 7
        %v1255 = vsub.s32 %v1252, %v1254
        %v1256 = vrot.slane %v818, %v1255
        %v1258 = vunpack.c.l.s4 1966171168
        %v1259 = vunpack.c.0.s8 %v1258
        %v1260 = vlaneseq
        %v1261 = vshrl.u32 %v1260, 7
        %v1262 = vsub.s32 %v1259, %v1261
        %v1263 = vrot.slane %v1256, %v1262
        %v1265 = vunpack.c.l.s4 1966171168
        %v1266 = vunpack.c.0.s8 %v1265
        %v1267 = vlaneseq
        %v1268 = vshrl.u32 %v1267, 7
        %v1269 = vsub.s32 %v1266, %v1268
        %v1270 = vrot.slane %v819, %v1269
        %v1272 = vunpack.c.l.s4 1966171168
        %v1273 = vunpack.c.0.s8 %v1272
        %v1274 = vlaneseq
        %v1275 = vshrl.u32 %v1274, 7
        %v1276 = vsub.s32 %v1273, %v1275
        %v1277 = vrot.slane %v1270, %v1276
        %v1279 = vunpack.c.l.s4 1966171168
        %v1280 = vunpack.c.0.s8 %v1279
        %v1281 = vlaneseq
        %v1282 = vshrl.u32 %v1281, 7
        %v1283 = vsub.s32 %v1280, %v1282
        %v1284 = vrot.slane %v820, %v1283
        %v1286 = vunpack.c.l.s4 1966171168
        %v1287 = vunpack.c.0.s8 %v1286
        %v1288 = vlaneseq
        %v1289 = vshrl.u32 %v1288, 7
        %v1290 = vsub.s32 %v1287, %v1289
        %v1291 = vrot.slane %v1284, %v1290
        %v1293 = vunpack.c.l.s4 1966171168
        %v1294 = vunpack.c.0.s8 %v1293
        %v1295 = vlaneseq
        %v1296 = vshrl.u32 %v1295, 7
        %v1297 = vsub.s32 %v1294, %v1296
        %v1298 = vrot.slane %v821, %v1297
        %v1300 = vunpack.c.l.s4 1966171168
        %v1301 = vunpack.c.0.s8 %v1300
        %v1302 = vlaneseq
        %v1303 = vshrl.u32 %v1302, 7
        %v1304 = vsub.s32 %v1301, %v1303
        %v1305 = vrot.slane %v1298, %v1304
        %v1307 = vunpack.c.l.s4 1966171168
        %v1308 = vunpack.c.0.s8 %v1307
        %v1309 = vlaneseq
        %v1310 = vshrl.u32 %v1309, 7
        %v1311 = vsub.s32 %v1308, %v1310
        %v1312 = vrot.slane %v822, %v1311
        %v1314 = vunpack.c.l.s4 1966171168
        %v1315 = vunpack.c.0.s8 %v1314
        %v1316 = vlaneseq
        %v1317 = vshrl.u32 %v1316, 7
        %v1318 = vsub.s32 %v1315, %v1317
        %v1319 = vrot.slane %v1312, %v1318
        %v1321 = vunpack.c.l.s4 1966171168
        %v1322 = vunpack.c.0.s8 %v1321
        %v1323 = vlaneseq
        %v1324 = vshrl.u32 %v1323, 7
        %v1325 = vsub.s32 %v1322, %v1324
        %v1326 = vrot.slane %v823, %v1325
        %v1328 = vunpack.c.l.s4 1966171168
        %v1329 = vunpack.c.0.s8 %v1328
        %v1330 = vlaneseq
        %v1331 = vshrl.u32 %v1330, 7
        %v1332 = vsub.s32 %v1329, %v1331
        %v1333 = vrot.slane %v1326, %v1332
        %v1335 = vunpack.c.l.s4 1966171168
        %v1336 = vunpack.c.0.s8 %v1335
        %v1337 = vlaneseq
        %v1338 = vshrl.u32 %v1337, 7
        %v1339 = vsub.s32 %v1336, %v1338
        %v1340 = vrot.slane %v824, %v1339
        %v1342 = vunpack.c.l.s4 1966171168
        %v1343 = vunpack.c.0.s8 %v1342
        %v1344 = vlaneseq
        %v1345 = vshrl.u32 %v1344, 7
        %v1346 = vsub.s32 %v1343, %v1345
        %v1347 = vrot.slane %v1340, %v1346
        %v1348 = vunpack.c.l.b16 %v913
        %v1349 = vunpack.c.l.b16 %v927
        %v1350 = vunpack.c.l.b16 %v941
        %v1351 = vunpack.c.l.b16 %v955
        %v1352 = vunpack.c.l.b16 %v969
        %v1353 = vunpack.c.l.b16 %v983
        %v1354 = vunpack.c.l.b16 %v997
        %v1355 = vunpack.c.l.b16 %v1011
        %v1356 = vunpack.c.l.b16 %v1025
        %v1357 = vunpack.c.l.b16 %v1039
        %v1358 = vunpack.c.l.b16 %v1053
        %v1359 = vunpack.c.l.b16 %v1067
        %v1360 = vunpack.c.l.b16 %v1081
        %v1361 = vunpack.c.l.b16 %v1095
        %v1362 = vunpack.c.l.b16 %v1109
        %v1363 = vunpack.c.l.b16 %v1123
        %v1364 = vunpack.c.l.b16 %v1137
        %v1365 = vunpack.c.l.b16 %v1151
        %v1366 = vunpack.c.l.b16 %v1165
        %v1367 = vunpack.c.l.b16 %v1179
        %v1368 = vunpack.c.l.b16 %v1193
        %v1369 = vunpack.c.l.b16 %v1207
        %v1370 = vunpack.c.l.b16 %v1221
        %v1371 = vunpack.c.l.b16 %v1235
        %v1372 = vunpack.c.l.b16 %v1249
        %v1373 = vunpack.c.l.b16 %v1263
        %v1374 = vunpack.c.l.b16 %v1277
        %v1375 = vunpack.c.l.b16 %v1291
        %v1376 = vunpack.c.l.b16 %v1305
        %v1377 = vunpack.c.l.b16 %v1319
        %v1378 = vunpack.c.l.b16 %v1333
        %v1379 = vunpack.c.l.b16 %v1347
        %v1380 = vrot.slane %v1349, 7
        %vm1381 = vcmask 1041409
        %v1382 = vsel %vm1381, %v1380, %v1348
        %v1383 = vrot.slane %v1350, 6
        %vm1384 = vcmask 1042434
        %v1385 = vsel %vm1384, %v1383, %v1382
        %v1386 = vrot.slane %v1351, 5
        %vm1387 = vcmask 1043459
        %v1388 = vsel %vm1387, %v1386, %v1385
        %v1389 = vrot.slane %v1352, 4
        %vm1390 = vcmask 1044484
        %v1391 = vsel %vm1390, %v1389, %v1388
        %v1392 = vrot.slane %v1353, 3
        %vm1393 = vcmask 1045509
        %v1394 = vsel %vm1393, %v1392, %v1391
        %v1395 = vrot.slane %v1354, 2
        %vm1396 = vcmask 1046534
        %v1397 = vsel %vm1396, %v1395, %v1394
        %v1398 = vrot.slane %v1355, 1
        %vm1399 = vcmask 1047559
        %v1400 = vsel %vm1399, %v1398, %v1397
        %v1401 = vrot.slane %v1357, 7
        %v1402 = vsel %vm1381, %v1401, %v1356
        %v1403 = vrot.slane %v1358, 6
        %v1404 = vsel %vm1384, %v1403, %v1402
        %v1405 = vrot.slane %v1359, 5
        %v1406 = vsel %vm1387, %v1405, %v1404
        %v1407 = vrot.slane %v1360, 4
        %v1408 = vsel %vm1390, %v1407, %v1406
        %v1409 = vrot.slane %v1361, 3
        %v1410 = vsel %vm1393, %v1409, %v1408
        %v1411 = vrot.slane %v1362, 2
        %v1412 = vsel %vm1396, %v1411, %v1410
        %v1413 = vrot.slane %v1363, 1
        %v1414 = vsel %vm1399, %v1413, %v1412
        %v1415 = vrot.slane %v1365, 7
        %v1416 = vsel %vm1381, %v1415, %v1364
        %v1417 = vrot.slane %v1366, 6
        %v1418 = vsel %vm1384, %v1417, %v1416
        %v1419 = vrot.slane %v1367, 5
        %v1420 = vsel %vm1387, %v1419, %v1418
        %v1421 = vrot.slane %v1368, 4
        %v1422 = vsel %vm1390, %v1421, %v1420
        %v1423 = vrot.slane %v1369, 3
        %v1424 = vsel %vm1393, %v1423, %v1422
        %v1425 = vrot.slane %v1370, 2
        %v1426 = vsel %vm1396, %v1425, %v1424
        %v1427 = vrot.slane %v1371, 1
        %v1428 = vsel %vm1399, %v1427, %v1426
        %v1429 = vrot.slane %v1373, 7
        %v1430 = vsel %vm1381, %v1429, %v1372
        %v1431 = vrot.slane %v1374, 6
        %v1432 = vsel %vm1384, %v1431, %v1430
        %v1433 = vrot.slane %v1375, 5
        %v1434 = vsel %vm1387, %v1433, %v1432
        %v1435 = vrot.slane %v1376, 4
        %v1436 = vsel %vm1390, %v1435, %v1434
        %v1437 = vrot.slane %v1377, 3
        %v1438 = vsel %vm1393, %v1437, %v1436
        %v1439 = vrot.slane %v1378, 2
        %v1440 = vsel %vm1396, %v1439, %v1438
        %v1441 = vrot.slane %v1379, 1
        %v1442 = vsel %vm1399, %v1441, %v1440
        %v1443 = vpack.c.b16 %v1414, %v1400
        %v1444 = vpack.c.b16 %v1442, %v1428
        %1445 = vrot.lane.b32.xlu0 %v1443, 112
        %v1446 = vpop.permute.xlu0 %1445
        %1447 = vrot.lane.b32.xlu0 %v1444, 112
        %v1448 = vpop.permute.xlu0 %1447
        %vm1451 = vcmask 1048448
        %1452 = vst.msk [vmem:[#allocation2] sm:$0xff] %vm1451, %v1446
        %1453 = vst.msk [vmem:[#allocation2 + $0x20] sm:$0xff] %vm1451, %v1448
        %v1458 = vunpack.c.l.b16 %v718
        %v1459 = vunpack.c.h.b16 %v718
        %v1460 = vunpack.c.l.b16 %v719
        %v1461 = vunpack.c.h.b16 %v719
        %v1462 = vunpack.c.l.b16 %v720
        %v1463 = vunpack.c.h.b16 %v720
        %v1464 = vunpack.c.l.b16 %v721
        %v1465 = vunpack.c.h.b16 %v721
        %v1466 = vpack.c.b16 %v1460, %v1458
        %v1467 = vpack.c.b16 %v1461, %v1459
        %v1468 = vpack.c.b16 %v1464, %v1462
        %v1469 = vpack.c.b16 %v1465, %v1463
        %1474 = vst [vmem:[#allocation2 + $0x8] sm:$0xff] %v1466
        %1475 = vst [vmem:[#allocation2 + $0x10] sm:$0xff] %v1467
        %1476 = vst [vmem:[#allocation2 + $0x28] sm:$0xff] %v1468
        %1477 = vst [vmem:[#allocation2 + $0x30] sm:$0xff] %v1469
        %v1511 = vunpack.c.l.s4 1966171168
        %v1512 = vunpack.c.0.s8 %v1511
        %v1513 = vlaneseq
        %v1514 = vshrl.u32 %v1513, 7
        %v1515 = vsub.s32 %v1512, %v1514
        %v1516 = vrot.slane %v833, %v1515
        %v1518 = vunpack.c.l.s4 1966171168
        %v1519 = vunpack.c.0.s8 %v1518
        %v1520 = vlaneseq
        %v1521 = vshrl.u32 %v1520, 7
        %v1522 = vsub.s32 %v1519, %v1521
        %v1523 = vrot.slane %v1516, %v1522
        %v1525 = vunpack.c.l.s4 1966171168
        %v1526 = vunpack.c.0.s8 %v1525
        %v1527 = vlaneseq
        %v1528 = vshrl.u32 %v1527, 7
        %v1529 = vsub.s32 %v1526, %v1528
        %v1530 = vrot.slane %v834, %v1529
        %v1532 = vunpack.c.l.s4 1966171168
        %v1533 = vunpack.c.0.s8 %v1532
        %v1534 = vlaneseq
        %v1535 = vshrl.u32 %v1534, 7
        %v1536 = vsub.s32 %v1533, %v1535
        %v1537 = vrot.slane %v1530, %v1536
        %v1539 = vunpack.c.l.s4 1966171168
        %v1540 = vunpack.c.0.s8 %v1539
        %v1541 = vlaneseq
        %v1542 = vshrl.u32 %v1541, 7
        %v1543 = vsub.s32 %v1540, %v1542
        %v1544 = vrot.slane %v835, %v1543
        %v1546 = vunpack.c.l.s4 1966171168
        %v1547 = vunpack.c.0.s8 %v1546
        %v1548 = vlaneseq
        %v1549 = vshrl.u32 %v1548, 7
        %v1550 = vsub.s32 %v1547, %v1549
        %v1551 = vrot.slane %v1544, %v1550
        %v1553 = vunpack.c.l.s4 1966171168
        %v1554 = vunpack.c.0.s8 %v1553
        %v1555 = vlaneseq
        %v1556 = vshrl.u32 %v1555, 7
        %v1557 = vsub.s32 %v1554, %v1556
        %v1558 = vrot.slane %v836, %v1557
        %v1560 = vunpack.c.l.s4 1966171168
        %v1561 = vunpack.c.0.s8 %v1560
        %v1562 = vlaneseq
        %v1563 = vshrl.u32 %v1562, 7
        %v1564 = vsub.s32 %v1561, %v1563
        %v1565 = vrot.slane %v1558, %v1564
        %v1567 = vunpack.c.l.s4 1966171168
        %v1568 = vunpack.c.0.s8 %v1567
        %v1569 = vlaneseq
        %v1570 = vshrl.u32 %v1569, 7
        %v1571 = vsub.s32 %v1568, %v1570
        %v1572 = vrot.slane %v837, %v1571
        %v1574 = vunpack.c.l.s4 1966171168
        %v1575 = vunpack.c.0.s8 %v1574
        %v1576 = vlaneseq
        %v1577 = vshrl.u32 %v1576, 7
        %v1578 = vsub.s32 %v1575, %v1577
        %v1579 = vrot.slane %v1572, %v1578
        %v1581 = vunpack.c.l.s4 1966171168
        %v1582 = vunpack.c.0.s8 %v1581
        %v1583 = vlaneseq
        %v1584 = vshrl.u32 %v1583, 7
        %v1585 = vsub.s32 %v1582, %v1584
        %v1586 = vrot.slane %v838, %v1585
        %v1588 = vunpack.c.l.s4 1966171168
        %v1589 = vunpack.c.0.s8 %v1588
        %v1590 = vlaneseq
        %v1591 = vshrl.u32 %v1590, 7
        %v1592 = vsub.s32 %v1589, %v1591
        %v1593 = vrot.slane %v1586, %v1592
        %v1595 = vunpack.c.l.s4 1966171168
        %v1596 = vunpack.c.0.s8 %v1595
        %v1597 = vlaneseq
        %v1598 = vshrl.u32 %v1597, 7
        %v1599 = vsub.s32 %v1596, %v1598
        %v1600 = vrot.slane %v839, %v1599
        %v1602 = vunpack.c.l.s4 1966171168
        %v1603 = vunpack.c.0.s8 %v1602
        %v1604 = vlaneseq
        %v1605 = vshrl.u32 %v1604, 7
        %v1606 = vsub.s32 %v1603, %v1605
        %v1607 = vrot.slane %v1600, %v1606
        %v1609 = vunpack.c.l.s4 1966171168
        %v1610 = vunpack.c.0.s8 %v1609
        %v1611 = vlaneseq
        %v1612 = vshrl.u32 %v1611, 7
        %v1613 = vsub.s32 %v1610, %v1612
        %v1614 = vrot.slane %v840, %v1613
        %v1616 = vunpack.c.l.s4 1966171168
        %v1617 = vunpack.c.0.s8 %v1616
        %v1618 = vlaneseq
        %v1619 = vshrl.u32 %v1618, 7
        %v1620 = vsub.s32 %v1617, %v1619
        %v1621 = vrot.slane %v1614, %v1620
        %v1623 = vunpack.c.l.s4 1966171168
        %v1624 = vunpack.c.0.s8 %v1623
        %v1625 = vlaneseq
        %v1626 = vshrl.u32 %v1625, 7
        %v1627 = vsub.s32 %v1624, %v1626
        %v1628 = vrot.slane %v841, %v1627
        %v1630 = vunpack.c.l.s4 1966171168
        %v1631 = vunpack.c.0.s8 %v1630
        %v1632 = vlaneseq
        %v1633 = vshrl.u32 %v1632, 7
        %v1634 = vsub.s32 %v1631, %v1633
        %v1635 = vrot.slane %v1628, %v1634
        %v1637 = vunpack.c.l.s4 1966171168
        %v1638 = vunpack.c.0.s8 %v1637
        %v1639 = vlaneseq
        %v1640 = vshrl.u32 %v1639, 7
        %v1641 = vsub.s32 %v1638, %v1640
        %v1642 = vrot.slane %v842, %v1641
        %v1644 = vunpack.c.l.s4 1966171168
        %v1645 = vunpack.c.0.s8 %v1644
        %v1646 = vlaneseq
        %v1647 = vshrl.u32 %v1646, 7
        %v1648 = vsub.s32 %v1645, %v1647
        %v1649 = vrot.slane %v1642, %v1648
        %v1651 = vunpack.c.l.s4 1966171168
        %v1652 = vunpack.c.0.s8 %v1651
        %v1653 = vlaneseq
        %v1654 = vshrl.u32 %v1653, 7
        %v1655 = vsub.s32 %v1652, %v1654
        %v1656 = vrot.slane %v843, %v1655
        %v1658 = vunpack.c.l.s4 1966171168
        %v1659 = vunpack.c.0.s8 %v1658
        %v1660 = vlaneseq
        %v1661 = vshrl.u32 %v1660, 7
        %v1662 = vsub.s32 %v1659, %v1661
        %v1663 = vrot.slane %v1656, %v1662
        %v1665 = vunpack.c.l.s4 1966171168
        %v1666 = vunpack.c.0.s8 %v1665
        %v1667 = vlaneseq
        %v1668 = vshrl.u32 %v1667, 7
        %v1669 = vsub.s32 %v1666, %v1668
        %v1670 = vrot.slane %v844, %v1669
        %v1672 = vunpack.c.l.s4 1966171168
        %v1673 = vunpack.c.0.s8 %v1672
        %v1674 = vlaneseq
        %v1675 = vshrl.u32 %v1674, 7
        %v1676 = vsub.s32 %v1673, %v1675
        %v1677 = vrot.slane %v1670, %v1676
        %v1679 = vunpack.c.l.s4 1966171168
        %v1680 = vunpack.c.0.s8 %v1679
        %v1681 = vlaneseq
        %v1682 = vshrl.u32 %v1681, 7
        %v1683 = vsub.s32 %v1680, %v1682
        %v1684 = vrot.slane %v845, %v1683
        %v1686 = vunpack.c.l.s4 1966171168
        %v1687 = vunpack.c.0.s8 %v1686
        %v1688 = vlaneseq
        %v1689 = vshrl.u32 %v1688, 7
        %v1690 = vsub.s32 %v1687, %v1689
        %v1691 = vrot.slane %v1684, %v1690
        %v1693 = vunpack.c.l.s4 1966171168
        %v1694 = vunpack.c.0.s8 %v1693
        %v1695 = vlaneseq
        %v1696 = vshrl.u32 %v1695, 7
        %v1697 = vsub.s32 %v1694, %v1696
        %v1698 = vrot.slane %v846, %v1697
        %v1700 = vunpack.c.l.s4 1966171168
        %v1701 = vunpack.c.0.s8 %v1700
        %v1702 = vlaneseq
        %v1703 = vshrl.u32 %v1702, 7
        %v1704 = vsub.s32 %v1701, %v1703
        %v1705 = vrot.slane %v1698, %v1704
        %v1707 = vunpack.c.l.s4 1966171168
        %v1708 = vunpack.c.0.s8 %v1707
        %v1709 = vlaneseq
        %v1710 = vshrl.u32 %v1709, 7
        %v1711 = vsub.s32 %v1708, %v1710
        %v1712 = vrot.slane %v847, %v1711
        %v1714 = vunpack.c.l.s4 1966171168
        %v1715 = vunpack.c.0.s8 %v1714
        %v1716 = vlaneseq
        %v1717 = vshrl.u32 %v1716, 7
        %v1718 = vsub.s32 %v1715, %v1717
        %v1719 = vrot.slane %v1712, %v1718
        %v1721 = vunpack.c.l.s4 1966171168
        %v1722 = vunpack.c.0.s8 %v1721
        %v1723 = vlaneseq
        %v1724 = vshrl.u32 %v1723, 7
        %v1725 = vsub.s32 %v1722, %v1724
        %v1726 = vrot.slane %v848, %v1725
        %v1728 = vunpack.c.l.s4 1966171168
        %v1729 = vunpack.c.0.s8 %v1728
        %v1730 = vlaneseq
        %v1731 = vshrl.u32 %v1730, 7
        %v1732 = vsub.s32 %v1729, %v1731
        %v1733 = vrot.slane %v1726, %v1732
        %v1735 = vunpack.c.l.s4 1966171168
        %v1736 = vunpack.c.0.s8 %v1735
        %v1737 = vlaneseq
        %v1738 = vshrl.u32 %v1737, 7
        %v1739 = vsub.s32 %v1736, %v1738
        %v1740 = vrot.slane %v849, %v1739
        %v1742 = vunpack.c.l.s4 1966171168
        %v1743 = vunpack.c.0.s8 %v1742
        %v1744 = vlaneseq
        %v1745 = vshrl.u32 %v1744, 7
        %v1746 = vsub.s32 %v1743, %v1745
        %v1747 = vrot.slane %v1740, %v1746
        %v1749 = vunpack.c.l.s4 1966171168
        %v1750 = vunpack.c.0.s8 %v1749
        %v1751 = vlaneseq
        %v1752 = vshrl.u32 %v1751, 7
        %v1753 = vsub.s32 %v1750, %v1752
        %v1754 = vrot.slane %v850, %v1753
        %v1756 = vunpack.c.l.s4 1966171168
        %v1757 = vunpack.c.0.s8 %v1756
        %v1758 = vlaneseq
        %v1759 = vshrl.u32 %v1758, 7
        %v1760 = vsub.s32 %v1757, %v1759
        %v1761 = vrot.slane %v1754, %v1760
        %v1763 = vunpack.c.l.s4 1966171168
        %v1764 = vunpack.c.0.s8 %v1763
        %v1765 = vlaneseq
        %v1766 = vshrl.u32 %v1765, 7
        %v1767 = vsub.s32 %v1764, %v1766
        %v1768 = vrot.slane %v851, %v1767
        %v1770 = vunpack.c.l.s4 1966171168
        %v1771 = vunpack.c.0.s8 %v1770
        %v1772 = vlaneseq
        %v1773 = vshrl.u32 %v1772, 7
        %v1774 = vsub.s32 %v1771, %v1773
        %v1775 = vrot.slane %v1768, %v1774
        %v1777 = vunpack.c.l.s4 1966171168
        %v1778 = vunpack.c.0.s8 %v1777
        %v1779 = vlaneseq
        %v1780 = vshrl.u32 %v1779, 7
        %v1781 = vsub.s32 %v1778, %v1780
        %v1782 = vrot.slane %v852, %v1781
        %v1784 = vunpack.c.l.s4 1966171168
        %v1785 = vunpack.c.0.s8 %v1784
        %v1786 = vlaneseq
        %v1787 = vshrl.u32 %v1786, 7
        %v1788 = vsub.s32 %v1785, %v1787
        %v1789 = vrot.slane %v1782, %v1788
        %v1791 = vunpack.c.l.s4 1966171168
        %v1792 = vunpack.c.0.s8 %v1791
        %v1793 = vlaneseq
        %v1794 = vshrl.u32 %v1793, 7
        %v1795 = vsub.s32 %v1792, %v1794
        %v1796 = vrot.slane %v853, %v1795
        %v1798 = vunpack.c.l.s4 1966171168
        %v1799 = vunpack.c.0.s8 %v1798
        %v1800 = vlaneseq
        %v1801 = vshrl.u32 %v1800, 7
        %v1802 = vsub.s32 %v1799, %v1801
        %v1803 = vrot.slane %v1796, %v1802
        %v1805 = vunpack.c.l.s4 1966171168
        %v1806 = vunpack.c.0.s8 %v1805
        %v1807 = vlaneseq
        %v1808 = vshrl.u32 %v1807, 7
        %v1809 = vsub.s32 %v1806, %v1808
        %v1810 = vrot.slane %v854, %v1809
        %v1812 = vunpack.c.l.s4 1966171168
        %v1813 = vunpack.c.0.s8 %v1812
        %v1814 = vlaneseq
        %v1815 = vshrl.u32 %v1814, 7
        %v1816 = vsub.s32 %v1813, %v1815
        %v1817 = vrot.slane %v1810, %v1816
        %v1819 = vunpack.c.l.s4 1966171168
        %v1820 = vunpack.c.0.s8 %v1819
        %v1821 = vlaneseq
        %v1822 = vshrl.u32 %v1821, 7
        %v1823 = vsub.s32 %v1820, %v1822
        %v1824 = vrot.slane %v855, %v1823
        %v1826 = vunpack.c.l.s4 1966171168
        %v1827 = vunpack.c.0.s8 %v1826
        %v1828 = vlaneseq
        %v1829 = vshrl.u32 %v1828, 7
        %v1830 = vsub.s32 %v1827, %v1829
        %v1831 = vrot.slane %v1824, %v1830
        %v1833 = vunpack.c.l.s4 1966171168
        %v1834 = vunpack.c.0.s8 %v1833
        %v1835 = vlaneseq
        %v1836 = vshrl.u32 %v1835, 7
        %v1837 = vsub.s32 %v1834, %v1836
        %v1838 = vrot.slane %v856, %v1837
        %v1840 = vunpack.c.l.s4 1966171168
        %v1841 = vunpack.c.0.s8 %v1840
        %v1842 = vlaneseq
        %v1843 = vshrl.u32 %v1842, 7
        %v1844 = vsub.s32 %v1841, %v1843
        %v1845 = vrot.slane %v1838, %v1844
        %v1847 = vunpack.c.l.s4 1966171168
        %v1848 = vunpack.c.0.s8 %v1847
        %v1849 = vlaneseq
        %v1850 = vshrl.u32 %v1849, 7
        %v1851 = vsub.s32 %v1848, %v1850
        %v1852 = vrot.slane %v857, %v1851
        %v1854 = vunpack.c.l.s4 1966171168
        %v1855 = vunpack.c.0.s8 %v1854
        %v1856 = vlaneseq
        %v1857 = vshrl.u32 %v1856, 7
        %v1858 = vsub.s32 %v1855, %v1857
        %v1859 = vrot.slane %v1852, %v1858
        %v1861 = vunpack.c.l.s4 1966171168
        %v1862 = vunpack.c.0.s8 %v1861
        %v1863 = vlaneseq
        %v1864 = vshrl.u32 %v1863, 7
        %v1865 = vsub.s32 %v1862, %v1864
        %v1866 = vrot.slane %v858, %v1865
        %v1868 = vunpack.c.l.s4 1966171168
        %v1869 = vunpack.c.0.s8 %v1868
        %v1870 = vlaneseq
        %v1871 = vshrl.u32 %v1870, 7
        %v1872 = vsub.s32 %v1869, %v1871
        %v1873 = vrot.slane %v1866, %v1872
        %v1875 = vunpack.c.l.s4 1966171168
        %v1876 = vunpack.c.0.s8 %v1875
        %v1877 = vlaneseq
        %v1878 = vshrl.u32 %v1877, 7
        %v1879 = vsub.s32 %v1876, %v1878
        %v1880 = vrot.slane %v859, %v1879
        %v1882 = vunpack.c.l.s4 1966171168
        %v1883 = vunpack.c.0.s8 %v1882
        %v1884 = vlaneseq
        %v1885 = vshrl.u32 %v1884, 7
        %v1886 = vsub.s32 %v1883, %v1885
        %v1887 = vrot.slane %v1880, %v1886
        %v1889 = vunpack.c.l.s4 1966171168
        %v1890 = vunpack.c.0.s8 %v1889
        %v1891 = vlaneseq
        %v1892 = vshrl.u32 %v1891, 7
        %v1893 = vsub.s32 %v1890, %v1892
        %v1894 = vrot.slane %v860, %v1893
        %v1896 = vunpack.c.l.s4 1966171168
        %v1897 = vunpack.c.0.s8 %v1896
        %v1898 = vlaneseq
        %v1899 = vshrl.u32 %v1898, 7
        %v1900 = vsub.s32 %v1897, %v1899
        %v1901 = vrot.slane %v1894, %v1900
        %v1903 = vunpack.c.l.s4 1966171168
        %v1904 = vunpack.c.0.s8 %v1903
        %v1905 = vlaneseq
        %v1906 = vshrl.u32 %v1905, 7
        %v1907 = vsub.s32 %v1904, %v1906
        %v1908 = vrot.slane %v861, %v1907
        %v1910 = vunpack.c.l.s4 1966171168
        %v1911 = vunpack.c.0.s8 %v1910
        %v1912 = vlaneseq
        %v1913 = vshrl.u32 %v1912, 7
        %v1914 = vsub.s32 %v1911, %v1913
        %v1915 = vrot.slane %v1908, %v1914
        %v1917 = vunpack.c.l.s4 1966171168
        %v1918 = vunpack.c.0.s8 %v1917
        %v1919 = vlaneseq
        %v1920 = vshrl.u32 %v1919, 7
        %v1921 = vsub.s32 %v1918, %v1920
        %v1922 = vrot.slane %v862, %v1921
        %v1924 = vunpack.c.l.s4 1966171168
        %v1925 = vunpack.c.0.s8 %v1924
        %v1926 = vlaneseq
        %v1927 = vshrl.u32 %v1926, 7
        %v1928 = vsub.s32 %v1925, %v1927
        %v1929 = vrot.slane %v1922, %v1928
        %v1931 = vunpack.c.l.s4 1966171168
        %v1932 = vunpack.c.0.s8 %v1931
        %v1933 = vlaneseq
        %v1934 = vshrl.u32 %v1933, 7
        %v1935 = vsub.s32 %v1932, %v1934
        %v1936 = vrot.slane %v863, %v1935
        %v1938 = vunpack.c.l.s4 1966171168
        %v1939 = vunpack.c.0.s8 %v1938
        %v1940 = vlaneseq
        %v1941 = vshrl.u32 %v1940, 7
        %v1942 = vsub.s32 %v1939, %v1941
        %v1943 = vrot.slane %v1936, %v1942
        %v1945 = vunpack.c.l.s4 1966171168
        %v1946 = vunpack.c.0.s8 %v1945
        %v1947 = vlaneseq
        %v1948 = vshrl.u32 %v1947, 7
        %v1949 = vsub.s32 %v1946, %v1948
        %v1950 = vrot.slane %v864, %v1949
        %v1952 = vunpack.c.l.s4 1966171168
        %v1953 = vunpack.c.0.s8 %v1952
        %v1954 = vlaneseq
        %v1955 = vshrl.u32 %v1954, 7
        %v1956 = vsub.s32 %v1953, %v1955
        %v1957 = vrot.slane %v1950, %v1956
        %v1958 = vunpack.c.l.b16 %v1523
        %v1959 = vunpack.c.l.b16 %v1537
        %v1960 = vunpack.c.l.b16 %v1551
        %v1961 = vunpack.c.l.b16 %v1565
        %v1962 = vunpack.c.l.b16 %v1579
        %v1963 = vunpack.c.l.b16 %v1593
        %v1964 = vunpack.c.l.b16 %v1607
        %v1965 = vunpack.c.l.b16 %v1621
        %v1966 = vunpack.c.l.b16 %v1635
        %v1967 = vunpack.c.l.b16 %v1649
        %v1968 = vunpack.c.l.b16 %v1663
        %v1969 = vunpack.c.l.b16 %v1677
        %v1970 = vunpack.c.l.b16 %v1691
        %v1971 = vunpack.c.l.b16 %v1705
        %v1972 = vunpack.c.l.b16 %v1719
        %v1973 = vunpack.c.l.b16 %v1733
        %v1974 = vunpack.c.l.b16 %v1747
        %v1975 = vunpack.c.l.b16 %v1761
        %v1976 = vunpack.c.l.b16 %v1775
        %v1977 = vunpack.c.l.b16 %v1789
        %v1978 = vunpack.c.l.b16 %v1803
        %v1979 = vunpack.c.l.b16 %v1817
        %v1980 = vunpack.c.l.b16 %v1831
        %v1981 = vunpack.c.l.b16 %v1845
        %v1982 = vunpack.c.l.b16 %v1859
        %v1983 = vunpack.c.l.b16 %v1873
        %v1984 = vunpack.c.l.b16 %v1887
        %v1985 = vunpack.c.l.b16 %v1901
        %v1986 = vunpack.c.l.b16 %v1915
        %v1987 = vunpack.c.l.b16 %v1929
        %v1988 = vunpack.c.l.b16 %v1943
        %v1989 = vunpack.c.l.b16 %v1957
        %v1990 = vrot.slane %v1959, 7
        %v1991 = vsel %vm1381, %v1990, %v1958
        %v1992 = vrot.slane %v1960, 6
        %v1993 = vsel %vm1384, %v1992, %v1991
        %v1994 = vrot.slane %v1961, 5
        %v1995 = vsel %vm1387, %v1994, %v1993
        %v1996 = vrot.slane %v1962, 4
        %v1997 = vsel %vm1390, %v1996, %v1995
        %v1998 = vrot.slane %v1963, 3
        %v1999 = vsel %vm1393, %v1998, %v1997
        %v2000 = vrot.slane %v1964, 2
        %v2001 = vsel %vm1396, %v2000, %v1999
        %v2002 = vrot.slane %v1965, 1
        %v2003 = vsel %vm1399, %v2002, %v2001
        %v2004 = vrot.slane %v1967, 7
        %v2005 = vsel %vm1381, %v2004, %v1966
        %v2006 = vrot.slane %v1968, 6
        %v2007 = vsel %vm1384, %v2006, %v2005
        %v2008 = vrot.slane %v1969, 5
        %v2009 = vsel %vm1387, %v2008, %v2007
        %v2010 = vrot.slane %v1970, 4
        %v2011 = vsel %vm1390, %v2010, %v2009
        %v2012 = vrot.slane %v1971, 3
        %v2013 = vsel %vm1393, %v2012, %v2011
        %v2014 = vrot.slane %v1972, 2
        %v2015 = vsel %vm1396, %v2014, %v2013
        %v2016 = vrot.slane %v1973, 1
        %v2017 = vsel %vm1399, %v2016, %v2015
        %v2018 = vrot.slane %v1975, 7
        %v2019 = vsel %vm1381, %v2018, %v1974
        %v2020 = vrot.slane %v1976, 6
        %v2021 = vsel %vm1384, %v2020, %v2019
        %v2022 = vrot.slane %v1977, 5
        %v2023 = vsel %vm1387, %v2022, %v2021
        %v2024 = vrot.slane %v1978, 4
        %v2025 = vsel %vm1390, %v2024, %v2023
        %v2026 = vrot.slane %v1979, 3
        %v2027 = vsel %vm1393, %v2026, %v2025
        %v2028 = vrot.slane %v1980, 2
        %v2029 = vsel %vm1396, %v2028, %v2027
        %v2030 = vrot.slane %v1981, 1
        %v2031 = vsel %vm1399, %v2030, %v2029
        %v2032 = vrot.slane %v1983, 7
        %v2033 = vsel %vm1381, %v2032, %v1982
        %v2034 = vrot.slane %v1984, 6
        %v2035 = vsel %vm1384, %v2034, %v2033
        %v2036 = vrot.slane %v1985, 5
        %v2037 = vsel %vm1387, %v2036, %v2035
        %v2038 = vrot.slane %v1986, 4
        %v2039 = vsel %vm1390, %v2038, %v2037
        %v2040 = vrot.slane %v1987, 3
        %v2041 = vsel %vm1393, %v2040, %v2039
        %v2042 = vrot.slane %v1988, 2
        %v2043 = vsel %vm1396, %v2042, %v2041
        %v2044 = vrot.slane %v1989, 1
        %v2045 = vsel %vm1399, %v2044, %v2043
        %v2046 = vpack.c.b16 %v2017, %v2003
        %v2047 = vpack.c.b16 %v2045, %v2031
        %vm2050 = vcmask 130048
        %2051 = vst.msk [vmem:[#allocation2 + $0x18] sm:$0xff] %vm2050, %v2046
        %2052 = vst.msk [vmem:[#allocation2 + $0x38] sm:$0xff] %vm2050, %v2047
        %vm2053 = vcmask 138368
        %2054 = vst.msk [vmem:[#allocation2 + $0x18] sm:$0xff] %vm2053, 0
        %2055 = vst.msk [vmem:[#allocation2 + $0x38] sm:$0xff] %vm2053, 0
        %v2056 = vld [vmem:[%s6] sm:$0x3]
        %s2057 = scalar_lea.vmem %s6, 2
        %v2058 = vld [vmem:[%s2057] sm:$0x3]
        %v2059 = vld [vmem:[#allocation2] sm:$0xff]
        %v2060 = vld [vmem:[#allocation2 + $0x8] sm:$0xff]
        %v2061 = vld [vmem:[#allocation2 + $0x10] sm:$0xff]
        %v2062 = vld [vmem:[#allocation2 + $0x20] sm:$0xff]
        %v2063 = vld [vmem:[#allocation2 + $0x28] sm:$0xff]
        %v2064 = vld [vmem:[#allocation2 + $0x30] sm:$0xff]
        %v2067 = vunpack.c.l.s4 1966171168
        %v2068 = vunpack.c.0.s8 %v2067
        %v2069 = vlaneseq
        %v2070 = vshrl.u32 %v2069, 7
        %v2071 = vsub.s32 %v2068, %v2070
        %v2072 = vrot.slane %v2056, %v2071
        %v2073 = vcombine.high %v2072, %v2072
        %v2075 = vunpack.c.l.s4 1966171168
        %v2076 = vunpack.c.0.s8 %v2075
        %v2077 = vlaneseq
        %v2078 = vshrl.u32 %v2077, 7
        %v2079 = vsub.s32 %v2076, %v2078
        %v2080 = vrot.slane %v2072, %v2079
        %v2082 = vunpack.c.l.s4 1966171168
        %v2083 = vunpack.c.0.s8 %v2082
        %v2084 = vlaneseq
        %v2085 = vshrl.u32 %v2084, 7
        %v2086 = vsub.s32 %v2083, %v2085
        %v2087 = vrot.slane %v2073, %v2086
        %v2089 = vpack.i.b16 %v2080, %v2080
        %v2091 = vlaneseq
        %v2092 = vshrl.u32 %v2091, 7
        %v2093 = vsub.s32 0, %v2092
        %v2094 = vrot.slane %v2089, %v2093
        %v2096 = vpack.i.b16 %v2087, %v2087
        %v2098 = vlaneseq
        %v2099 = vshrl.u32 %v2098, 7
        %v2100 = vsub.s32 0, %v2099
        %v2101 = vrot.slane %v2096, %v2100
        %2104 = vrot.lane.b32.xlu0 %v2094, 111
        %v2105 = vpop.permute.xlu0 %2104
        %2106 = vrot.lane.b32.xlu0 %v2101, 111
        %v2107 = vpop.permute.xlu0 %2106
        %vm2108 = vcmask 908288
        %v2109 = vsel %vm2108, %v2105, %v2107
        %v2113 = vmul.bf16 %v2059, %v2105
        %v2114 = vmul.bf16 %v2060, %v2109
        %v2115 = vmul.bf16 %v2061, %v2107
        %v2116 = vmul.bf16 %v2062, %v2105
        %v2117 = vmul.bf16 %v2063, %v2109
        %v2118 = vmul.bf16 %v2064, %v2107
        %v2119 = vld [vmem:[%s3] sm:$0xf]
        %v2120 = vld [vmem:[%s3 + $0x4] sm:$0xf]
        %v2121 = vld [vmem:[%s3 + $0x8] sm:$0xf]
        %v2122 = vld [vmem:[%s3 + $0xc] sm:$0xf]
        %s2123 = scalar_lea.vmem %s3, 16
        %v2124 = vld [vmem:[%s2123] sm:$0xf]
        %v2125 = vld [vmem:[%s2123 + $0x4] sm:$0xf]
        %v2126 = vld [vmem:[%s2123 + $0x8] sm:$0xf]
        %v2127 = vld [vmem:[%s2123 + $0xc] sm:$0xf]
        %v2132 = vunpack.c.l.b16 %v2124
        %v2133 = vunpack.c.l.b16 %v2125
        %v2134 = vunpack.c.l.b16 %v2126
        %v2135 = vunpack.c.l.b16 %v2127
        %v2136 = vpack.c.b16 %v2133, %v2132
        %v2137 = vpack.c.b16 %v2135, %v2134
        %2144 = vrot.lane.b32.xlu0 %v2059, 16
        %v2145 = vpop.permute.xlu0 %2144
        %2146 = vrot.lane.b32.xlu0 %v2060, 16
        %v2147 = vpop.permute.xlu0 %2146
        %2148 = vrot.lane.b32.xlu0 %v2061, 16
        %v2149 = vpop.permute.xlu0 %2148
        %2150 = vrot.lane.b32.xlu0 %v2062, 16
        %v2151 = vpop.permute.xlu0 %2150
        %2152 = vrot.lane.b32.xlu0 %v2063, 16
        %v2153 = vpop.permute.xlu0 %2152
        %2154 = vrot.lane.b32.xlu0 %v2064, 16
        %v2155 = vpop.permute.xlu0 %2154
        %vm2156 = vcmask 130048
        %v2157 = vsel %vm2156, %v2145, %v2147
        %v2158 = vsel %vm2156, %v2147, %v2149
        %v2159 = vsel %vm2156, %v2151, %v2153
        %v2160 = vsel %vm2156, %v2153, %v2155
        %vm2165 = vcmask 261120
        %v2167 = vsel %vm2165, %v2136, 0
        %v2170 = vsel %vm2165, %v2137, 0
        %2172 = vmatprep.subr.bf16.mxu0 %v2158
        %2173 = vmatpush1.bf16.msra.mxu0 %v2157
        %2174 = vmatprep.subr.bf16.mxu0 %v2160
        %2175 = vmatpush1.bf16.msra.mxu0 %v2159
        %2176 = vmatprep.subr.bf16.mxu0 0
        %2177 = vmatpush1.bf16.msra.mxu0 0
        %2178 = vmatprep.subr.bf16.mxu0 0
        %2179 = vmatpush1.bf16.msra.mxu0 0
        %2180 = vmatprep.subr.bf16.mxu0 0
        %2181 = vmatpush1.bf16.msra.mxu0 0
        %2182 = vmatprep.subr.bf16.mxu0 0
        %2183 = vmatpush1.bf16.msra.mxu0 0
        %2184 = vmatprep.subr.bf16.mxu0 0
        %2185 = vmatpush1.bf16.msra.mxu0 0
        %2186 = vmatprep.subr.bf16.mxu0 0
        %2187 = vmatpush1.bf16.msra.mxu0 0
        %2188 = vmatprep.subr.bf16.mxu0 0
        %2189 = vmatpush1.bf16.msra.mxu0 0
        %2190 = vmatprep.subr.bf16.mxu0 0
        %2191 = vmatpush1.bf16.msra.mxu0 0
        %2192 = vmatprep.subr.bf16.mxu0 0
        %2193 = vmatpush1.bf16.msra.mxu0 0
        %2194 = vmatprep.subr.bf16.mxu0 0
        %2195 = vmatpush1.bf16.msra.mxu0 0
        %2196 = vmatprep.subr.bf16.mxu0 0
        %2197 = vmatpush1.bf16.msra.mxu0 0
        %2198 = vmatprep.subr.bf16.mxu0 0
        %2199 = vmatpush1.bf16.msra.mxu0 0
        %2200 = vmatprep.subr.bf16.mxu0 0
        %2201 = vmatpush1.bf16.msra.mxu0 0
        %2202 = vmatprep.subr.bf16.mxu0 0
        %2203 = vmatpush1.bf16.msra.mxu0 0
        %2204 = vmatprep.mubr.bf16.mxu0 0
        %2205 = vmatmul.mubr.bf16.gmra.mrb[0].mxu0 %v2167
        %v2206 = vpop.f32.mrb[0].mxu0
        %v2207 = vadd.f32 0.0, %v2206
        %v2208 = vpop.f32.mrb[0].mxu0
        %v2209 = vadd.f32 0.0, %v2208
        %v2210 = vpop.f32.mrb[0].mxu0
        %v2211 = vadd.f32 0.0, %v2210
        %v2212 = vpop.f32.mrb[0].mxu0
        %v2213 = vadd.f32 0.0, %v2212
        %2214 = vmatprep.mubr.bf16.mxu0 0
        %2215 = vmatmul.mubr.bf16.gmra.mrb[0].mxu0 %v2170
        %v2216 = vpop.f32.mrb[0].mxu0
        %v2217 = vadd.f32 0.0, %v2216
        %v2218 = vpop.f32.mrb[0].mxu0
        %v2219 = vadd.f32 0.0, %v2218
        %v2220 = vpop.f32.mrb[0].mxu0
        %v2221 = vadd.f32 0.0, %v2220
        %v2222 = vpop.f32.mrb[0].mxu0
        %v2223 = vadd.f32 0.0, %v2222
        %2224 = vdwg.mxu0
        %v2229 = vunpack.c.l.b16 %v2119
        %v2230 = vunpack.c.l.b16 %v2120
        %v2231 = vunpack.c.l.b16 %v2121
        %v2232 = vunpack.c.l.b16 %v2122
        %v2233 = vpack.c.b16 %v2230, %v2229
        %v2234 = vpack.c.b16 %v2232, %v2231
        %2241 = vrot.lane.b32.xlu0 %v2113, 17
        %v2242 = vpop.permute.xlu0 %2241
        %2243 = vrot.lane.b32.xlu0 %v2114, 17
        %v2244 = vpop.permute.xlu0 %2243
        %2245 = vrot.lane.b32.xlu0 %v2115, 17
        %v2246 = vpop.permute.xlu0 %2245
        %2247 = vrot.lane.b32.xlu0 %v2116, 17
        %v2248 = vpop.permute.xlu0 %2247
        %2249 = vrot.lane.b32.xlu0 %v2117, 17
        %v2250 = vpop.permute.xlu0 %2249
        %2251 = vrot.lane.b32.xlu0 %v2118, 17
        %v2252 = vpop.permute.xlu0 %2251
        %vm2253 = vcmask 138240
        %v2254 = vsel %vm2253, %v2242, %v2244
        %v2255 = vsel %vm2253, %v2244, %v2246
        %v2256 = vsel %vm2253, %v2248, %v2250
        %v2257 = vsel %vm2253, %v2250, %v2252
        %v2263 = vsel %vm2165, %v2233, 0
        %v2266 = vsel %vm2165, %v2234, 0
        %2268 = vmatprep.subr.bf16.mxu0 %v2255
        %2269 = vmatpush1.bf16.msra.mxu0 %v2254
        %2270 = vmatprep.subr.bf16.mxu0 %v2257
        %2271 = vmatpush1.bf16.msra.mxu0 %v2256
        %2272 = vmatprep.subr.bf16.mxu0 0
        %2273 = vmatpush1.bf16.msra.mxu0 0
        %2274 = vmatprep.subr.bf16.mxu0 0
        %2275 = vmatpush1.bf16.msra.mxu0 0
        %2276 = vmatprep.subr.bf16.mxu0 0
        %2277 = vmatpush1.bf16.msra.mxu0 0
        %2278 = vmatprep.subr.bf16.mxu0 0
        %2279 = vmatpush1.bf16.msra.mxu0 0
        %2280 = vmatprep.subr.bf16.mxu0 0
        %2281 = vmatpush1.bf16.msra.mxu0 0
        %2282 = vmatprep.subr.bf16.mxu0 0
        %2283 = vmatpush1.bf16.msra.mxu0 0
        %2284 = vmatprep.subr.bf16.mxu0 0
        %2285 = vmatpush1.bf16.msra.mxu0 0
        %2286 = vmatprep.subr.bf16.mxu0 0
        %2287 = vmatpush1.bf16.msra.mxu0 0
        %2288 = vmatprep.subr.bf16.mxu0 0
        %2289 = vmatpush1.bf16.msra.mxu0 0
        %2290 = vmatprep.subr.bf16.mxu0 0
        %2291 = vmatpush1.bf16.msra.mxu0 0
        %2292 = vmatprep.subr.bf16.mxu0 0
        %2293 = vmatpush1.bf16.msra.mxu0 0
        %2294 = vmatprep.subr.bf16.mxu0 0
        %2295 = vmatpush1.bf16.msra.mxu0 0
        %2296 = vmatprep.subr.bf16.mxu0 0
        %2297 = vmatpush1.bf16.msra.mxu0 0
        %2298 = vmatprep.subr.bf16.mxu0 0
        %2299 = vmatpush1.bf16.msra.mxu0 0
        %2300 = vmatprep.mubr.bf16.mxu0 0
        %2301 = vmatmul.mubr.bf16.gmra.mrb[0].mxu0 %v2263
        %v2302 = vpop.f32.mrb[0].mxu0
        %v2303 = vadd.f32 %v2207, %v2302
        %v2304 = vpop.f32.mrb[0].mxu0
        %v2305 = vadd.f32 %v2209, %v2304
        %v2306 = vpop.f32.mrb[0].mxu0
        %v2307 = vadd.f32 %v2211, %v2306
        %v2308 = vpop.f32.mrb[0].mxu0
        %v2309 = vadd.f32 %v2213, %v2308
        %2310 = vmatprep.mubr.bf16.mxu0 0
        %2311 = vmatmul.mubr.bf16.gmra.mrb[0].mxu0 %v2266
        %v2312 = vpop.f32.mrb[0].mxu0
        %v2313 = vadd.f32 %v2217, %v2312
        %v2314 = vpop.f32.mrb[0].mxu0
        %v2315 = vadd.f32 %v2219, %v2314
        %v2316 = vpop.f32.mrb[0].mxu0
        %v2317 = vadd.f32 %v2221, %v2316
        %v2318 = vpop.f32.mrb[0].mxu0
        %v2319 = vadd.f32 %v2223, %v2318
        %2320 = vdwg.mxu0
        %v2323 = vunpack.c.l.s4 1966171168
        %v2324 = vunpack.c.0.s8 %v2323
        %v2325 = vlaneseq
        %v2326 = vshrl.u32 %v2325, 7
        %v2327 = vsub.s32 %v2324, %v2326
        %v2328 = vrot.slane %v2058, %v2327
        %v2329 = vcombine.high %v2328, %v2328
        %v2331 = vunpack.c.l.s4 1966171168
        %v2332 = vunpack.c.0.s8 %v2331
        %v2333 = vlaneseq
        %v2334 = vshrl.u32 %v2333, 7
        %v2335 = vsub.s32 %v2332, %v2334
        %v2336 = vrot.slane %v2328, %v2335
        %v2338 = vunpack.c.l.s4 1966171168
        %v2339 = vunpack.c.0.s8 %v2338
        %v2340 = vlaneseq
        %v2341 = vshrl.u32 %v2340, 7
        %v2342 = vsub.s32 %v2339, %v2341
        %v2343 = vrot.slane %v2329, %v2342
        %v2345 = vpack.i.b16 %v2336, %v2336
        %v2347 = vlaneseq
        %v2348 = vshrl.u32 %v2347, 7
        %v2349 = vsub.s32 0, %v2348
        %v2350 = vrot.slane %v2345, %v2349
        %v2352 = vpack.i.b16 %v2343, %v2343
        %v2354 = vlaneseq
        %v2355 = vshrl.u32 %v2354, 7
        %v2356 = vsub.s32 0, %v2355
        %v2357 = vrot.slane %v2352, %v2356
        %2360 = vrot.lane.b32.xlu0 %v2350, 113
        %v2361 = vpop.permute.xlu0 %2360
        %2362 = vrot.lane.b32.xlu0 %v2357, 113
        %v2363 = vpop.permute.xlu0 %2362
        %vm2364 = vcmask 924672
        %v2365 = vsel %vm2364, %v2361, %v2363
        %v2369 = vmul.bf16 %v2059, %v2361
        %v2370 = vmul.bf16 %v2060, %v2365
        %v2371 = vmul.bf16 %v2061, %v2363
        %v2372 = vmul.bf16 %v2062, %v2361
        %v2373 = vmul.bf16 %v2063, %v2365
        %v2374 = vmul.bf16 %v2064, %v2363
        %s2375 = scalar_lea.vmem %s3, 32
        %v2376 = vld [vmem:[%s2375] sm:$0xf]
        %v2377 = vld [vmem:[%s2375 + $0x4] sm:$0xf]
        %v2378 = vld [vmem:[%s2375 + $0x8] sm:$0xf]
        %v2379 = vld [vmem:[%s2375 + $0xc] sm:$0xf]
        %v2384 = vunpack.c.l.b16 %v2376
        %v2385 = vunpack.c.l.b16 %v2377
        %v2386 = vunpack.c.l.b16 %v2378
        %v2387 = vunpack.c.l.b16 %v2379
        %v2388 = vpack.c.b16 %v2385, %v2384
        %v2389 = vpack.c.b16 %v2387, %v2386
        %2396 = vrot.lane.b32.xlu0 %v2369, 15
        %v2397 = vpop.permute.xlu0 %2396
        %2398 = vrot.lane.b32.xlu0 %v2370, 15
        %v2399 = vpop.permute.xlu0 %2398
        %2400 = vrot.lane.b32.xlu0 %v2371, 15
        %v2401 = vpop.permute.xlu0 %2400
        %2402 = vrot.lane.b32.xlu0 %v2372, 15
        %v2403 = vpop.permute.xlu0 %2402
        %2404 = vrot.lane.b32.xlu0 %v2373, 15
        %v2405 = vpop.permute.xlu0 %2404
        %2406 = vrot.lane.b32.xlu0 %v2374, 15
        %v2407 = vpop.permute.xlu0 %2406
        %vm2408 = vcmask 121856
        %v2409 = vsel %vm2408, %v2397, %v2399
        %v2410 = vsel %vm2408, %v2399, %v2401
        %v2411 = vsel %vm2408, %v2403, %v2405
        %v2412 = vsel %vm2408, %v2405, %v2407
        %v2418 = vsel %vm2165, %v2388, 0
        %v2421 = vsel %vm2165, %v2389, 0
        %2423 = vmatprep.subr.bf16.mxu0 %v2410
        %2424 = vmatpush1.bf16.msra.mxu0 %v2409
        %2425 = vmatprep.subr.bf16.mxu0 %v2412
        %2426 = vmatpush1.bf16.msra.mxu0 %v2411
        %2427 = vmatprep.subr.bf16.mxu0 0
        %2428 = vmatpush1.bf16.msra.mxu0 0
        %2429 = vmatprep.subr.bf16.mxu0 0
        %2430 = vmatpush1.bf16.msra.mxu0 0
        %2431 = vmatprep.subr.bf16.mxu0 0
        %2432 = vmatpush1.bf16.msra.mxu0 0
        %2433 = vmatprep.subr.bf16.mxu0 0
        %2434 = vmatpush1.bf16.msra.mxu0 0
        %2435 = vmatprep.subr.bf16.mxu0 0
        %2436 = vmatpush1.bf16.msra.mxu0 0
        %2437 = vmatprep.subr.bf16.mxu0 0
        %2438 = vmatpush1.bf16.msra.mxu0 0
        %2439 = vmatprep.subr.bf16.mxu0 0
        %2440 = vmatpush1.bf16.msra.mxu0 0
        %2441 = vmatprep.subr.bf16.mxu0 0
        %2442 = vmatpush1.bf16.msra.mxu0 0
        %2443 = vmatprep.subr.bf16.mxu0 0
        %2444 = vmatpush1.bf16.msra.mxu0 0
        %2445 = vmatprep.subr.bf16.mxu0 0
        %2446 = vmatpush1.bf16.msra.mxu0 0
        %2447 = vmatprep.subr.bf16.mxu0 0
        %2448 = vmatpush1.bf16.msra.mxu0 0
        %2449 = vmatprep.subr.bf16.mxu0 0
        %2450 = vmatpush1.bf16.msra.mxu0 0
        %2451 = vmatprep.subr.bf16.mxu0 0
        %2452 = vmatpush1.bf16.msra.mxu0 0
        %2453 = vmatprep.subr.bf16.mxu0 0
        %2454 = vmatpush1.bf16.msra.mxu0 0
        %2455 = vmatprep.mubr.bf16.mxu0 0
        %2456 = vmatmul.mubr.bf16.gmra.mrb[0].mxu0 %v2418
        %v2457 = vpop.f32.mrb[0].mxu0
        %v2458 = vadd.f32 0.0, %v2457
        %v2459 = vpop.f32.mrb[0].mxu0
        %v2460 = vadd.f32 0.0, %v2459
        %v2461 = vpop.f32.mrb[0].mxu0
        %v2462 = vadd.f32 0.0, %v2461
        %v2463 = vpop.f32.mrb[0].mxu0
        %v2464 = vadd.f32 0.0, %v2463
        %2465 = vmatprep.mubr.bf16.mxu0 0
        %2466 = vmatmul.mubr.bf16.gmra.mrb[0].mxu0 %v2421
        %v2467 = vpop.f32.mrb[0].mxu0
        %v2468 = vadd.f32 0.0, %v2467
        %v2469 = vpop.f32.mrb[0].mxu0
        %v2470 = vadd.f32 0.0, %v2469
        %v2471 = vpop.f32.mrb[0].mxu0
        %v2472 = vadd.f32 0.0, %v2471
        %v2473 = vpop.f32.mrb[0].mxu0
        %v2474 = vadd.f32 0.0, %v2473
        %2475 = vdwg.mxu0
        %v2476 = vadd.f32 %v2303, %v2458
        %v2477 = vadd.f32 %v2305, %v2460
        %v2478 = vadd.f32 %v2307, %v2462
        %v2479 = vadd.f32 %v2309, %v2464
        %v2480 = vadd.f32 %v2313, %v2468
        %v2481 = vadd.f32 %v2315, %v2470
        %v2482 = vadd.f32 %v2317, %v2472
        %v2483 = vadd.f32 %v2319, %v2474
        %v2484 = vld [vmem:[#allocation2] sm:$0xff]
        %v2485 = vld [vmem:[#allocation2 + $0x8] sm:$0xff]
        %v2486 = vld [vmem:[#allocation2 + $0x10] sm:$0xff]
        %v2487 = vld [vmem:[#allocation2 + $0x20] sm:$0xff]
        %v2488 = vld [vmem:[#allocation2 + $0x28] sm:$0xff]
        %v2489 = vld [vmem:[#allocation2 + $0x30] sm:$0xff]
        %2490 = vrot.lane.b32.xlu0 %v2094, 127
        %v2491 = vpop.permute.xlu0 %2490
        %2492 = vrot.lane.b32.xlu0 %v2101, 127
        %v2493 = vpop.permute.xlu0 %2492
        %vm2494 = vcmask 1039360
        %v2495 = vsel %vm2494, %v2491, %v2493
        %v2499 = vmul.bf16 %v2484, %v2491
        %v2500 = vmul.bf16 %v2485, %v2495
        %v2501 = vmul.bf16 %v2486, %v2493
        %v2502 = vmul.bf16 %v2487, %v2491
        %v2503 = vmul.bf16 %v2488, %v2495
        %v2504 = vmul.bf16 %v2489, %v2493
        %s2505 = scalar_lea.vmem %s3, 48
        %v2506 = vld [vmem:[%s2505] sm:$0xf]
        %v2507 = vld [vmem:[%s2505 + $0x4] sm:$0xf]
        %v2508 = vld [vmem:[%s2505 + $0x8] sm:$0xf]
        %v2509 = vld [vmem:[%s2505 + $0xc] sm:$0xf]
        %v2514 = vunpack.c.l.b16 %v2506
        %v2515 = vunpack.c.l.b16 %v2507
        %v2516 = vunpack.c.l.b16 %v2508
        %v2517 = vunpack.c.l.b16 %v2509
        %v2518 = vpack.c.b16 %v2515, %v2514
        %v2519 = vpack.c.b16 %v2517, %v2516
        %2526 = vrot.lane.b32.xlu0 %v2499, 1
        %v2527 = vpop.permute.xlu0 %2526
        %2528 = vrot.lane.b32.xlu0 %v2500, 1
        %v2529 = vpop.permute.xlu0 %2528
        %2530 = vrot.lane.b32.xlu0 %v2501, 1
        %v2531 = vpop.permute.xlu0 %2530
        %2532 = vrot.lane.b32.xlu0 %v2502, 1
        %v2533 = vpop.permute.xlu0 %2532
        %2534 = vrot.lane.b32.xlu0 %v2503, 1
        %v2535 = vpop.permute.xlu0 %2534
        %2536 = vrot.lane.b32.xlu0 %v2504, 1
        %v2537 = vpop.permute.xlu0 %2536
        %vm2538 = vcmask 7168
        %v2539 = vsel %vm2538, %v2527, %v2529
        %v2540 = vsel %vm2538, %v2529, %v2531
        %v2541 = vsel %vm2538, %v2533, %v2535
        %v2542 = vsel %vm2538, %v2535, %v2537
        %v2548 = vsel %vm2165, %v2518, 0
        %v2551 = vsel %vm2165, %v2519, 0
        %2553 = vmatprep.subr.bf16.mxu0 %v2540
        %2554 = vmatpush1.bf16.msra.mxu0 %v2539
        %2555 = vmatprep.subr.bf16.mxu0 %v2542
        %2556 = vmatpush1.bf16.msra.mxu0 %v2541
        %2557 = vmatprep.subr.bf16.mxu0 0
        %2558 = vmatpush1.bf16.msra.mxu0 0
        %2559 = vmatprep.subr.bf16.mxu0 0
        %2560 = vmatpush1.bf16.msra.mxu0 0
        %2561 = vmatprep.subr.bf16.mxu0 0
        %2562 = vmatpush1.bf16.msra.mxu0 0
        %2563 = vmatprep.subr.bf16.mxu0 0
        %2564 = vmatpush1.bf16.msra.mxu0 0
        %2565 = vmatprep.subr.bf16.mxu0 0
        %2566 = vmatpush1.bf16.msra.mxu0 0
        %2567 = vmatprep.subr.bf16.mxu0 0
        %2568 = vmatpush1.bf16.msra.mxu0 0
        %2569 = vmatprep.subr.bf16.mxu0 0
        %2570 = vmatpush1.bf16.msra.mxu0 0
        %2571 = vmatprep.subr.bf16.mxu0 0
        %2572 = vmatpush1.bf16.msra.mxu0 0
        %2573 = vmatprep.subr.bf16.mxu0 0
        %2574 = vmatpush1.bf16.msra.mxu0 0
        %2575 = vmatprep.subr.bf16.mxu0 0
        %2576 = vmatpush1.bf16.msra.mxu0 0
        %2577 = vmatprep.subr.bf16.mxu0 0
        %2578 = vmatpush1.bf16.msra.mxu0 0
        %2579 = vmatprep.subr.bf16.mxu0 0
        %2580 = vmatpush1.bf16.msra.mxu0 0
        %2581 = vmatprep.subr.bf16.mxu0 0
        %2582 = vmatpush1.bf16.msra.mxu0 0
        %2583 = vmatprep.subr.bf16.mxu0 0
        %2584 = vmatpush1.bf16.msra.mxu0 0
        %2585 = vmatprep.mubr.bf16.mxu0 0
        %2586 = vmatmul.mubr.bf16.gmra.mrb[0].mxu0 %v2548
        %v2587 = vpop.f32.mrb[0].mxu0
        %v2588 = vadd.f32 0.0, %v2587
        %v2589 = vpop.f32.mrb[0].mxu0
        %v2590 = vadd.f32 0.0, %v2589
        %v2591 = vpop.f32.mrb[0].mxu0
        %v2592 = vadd.f32 0.0, %v2591
        %v2593 = vpop.f32.mrb[0].mxu0
        %v2594 = vadd.f32 0.0, %v2593
        %2595 = vmatprep.mubr.bf16.mxu0 0
        %2596 = vmatmul.mubr.bf16.gmra.mrb[0].mxu0 %v2551
        %v2597 = vpop.f32.mrb[0].mxu0
        %v2598 = vadd.f32 0.0, %v2597
        %v2599 = vpop.f32.mrb[0].mxu0
        %v2600 = vadd.f32 0.0, %v2599
        %v2601 = vpop.f32.mrb[0].mxu0
        %v2602 = vadd.f32 0.0, %v2601
        %v2603 = vpop.f32.mrb[0].mxu0
        %v2604 = vadd.f32 0.0, %v2603
        %2605 = vdwg.mxu0
        %v2606 = vadd.f32 %v2476, %v2588
        %v2607 = vadd.f32 %v2477, %v2590
        %v2608 = vadd.f32 %v2478, %v2592
        %v2609 = vadd.f32 %v2479, %v2594
        %v2610 = vadd.f32 %v2480, %v2598
        %v2611 = vadd.f32 %v2481, %v2600
        %v2612 = vadd.f32 %v2482, %v2602
        %v2613 = vadd.f32 %v2483, %v2604
        %s2614 = scalar_lea.vmem %s3, 64
        %v2615 = vld [vmem:[%s2614] sm:$0xf]
        %v2616 = vld [vmem:[%s2614 + $0x4] sm:$0xf]
        %v2617 = vld [vmem:[%s2614 + $0x8] sm:$0xf]
        %v2618 = vld [vmem:[%s2614 + $0xc] sm:$0xf]
        %v2623 = vunpack.c.l.b16 %v2615
        %v2624 = vunpack.c.l.b16 %v2616
        %v2625 = vunpack.c.l.b16 %v2617
        %v2626 = vunpack.c.l.b16 %v2618
        %v2627 = vpack.c.b16 %v2624, %v2623
        %v2628 = vpack.c.b16 %v2626, %v2625
        %v2630 = vsel %vm2165, %v2627, 0
        %v2633 = vsel %vm2165, %v2628, 0
        %2635 = vmatprep.subr.bf16.mxu0 %v2486
        %2636 = vmatpush1.bf16.msra.mxu0 %v2485
        %2637 = vmatprep.subr.bf16.mxu0 %v2489
        %2638 = vmatpush1.bf16.msra.mxu0 %v2488
        %2639 = vmatprep.subr.bf16.mxu0 0
        %2640 = vmatpush1.bf16.msra.mxu0 0
        %2641 = vmatprep.subr.bf16.mxu0 0
        %2642 = vmatpush1.bf16.msra.mxu0 0
        %2643 = vmatprep.subr.bf16.mxu0 0
        %2644 = vmatpush1.bf16.msra.mxu0 0
        %2645 = vmatprep.subr.bf16.mxu0 0
        %2646 = vmatpush1.bf16.msra.mxu0 0
        %2647 = vmatprep.subr.bf16.mxu0 0
        %2648 = vmatpush1.bf16.msra.mxu0 0
        %2649 = vmatprep.subr.bf16.mxu0 0
        %2650 = vmatpush1.bf16.msra.mxu0 0
        %2651 = vmatprep.subr.bf16.mxu0 0
        %2652 = vmatpush1.bf16.msra.mxu0 0
        %2653 = vmatprep.subr.bf16.mxu0 0
        %2654 = vmatpush1.bf16.msra.mxu0 0
        %2655 = vmatprep.subr.bf16.mxu0 0
        %2656 = vmatpush1.bf16.msra.mxu0 0
        %2657 = vmatprep.subr.bf16.mxu0 0
        %2658 = vmatpush1.bf16.msra.mxu0 0
        %2659 = vmatprep.subr.bf16.mxu0 0
        %2660 = vmatpush1.bf16.msra.mxu0 0
        %2661 = vmatprep.subr.bf16.mxu0 0
        %2662 = vmatpush1.bf16.msra.mxu0 0
        %2663 = vmatprep.subr.bf16.mxu0 0
        %2664 = vmatpush1.bf16.msra.mxu0 0
        %2665 = vmatprep.subr.bf16.mxu0 0
        %2666 = vmatpush1.bf16.msra.mxu0 0
        %2667 = vmatprep.mubr.bf16.mxu0 0
        %2668 = vmatmul.mubr.bf16.gmra.mrb[0].mxu0 %v2630
        %v2669 = vpop.f32.mrb[0].mxu0
        %v2670 = vadd.f32 0.0, %v2669
        %v2671 = vpop.f32.mrb[0].mxu0
        %v2672 = vadd.f32 0.0, %v2671
        %v2673 = vpop.f32.mrb[0].mxu0
        %v2674 = vadd.f32 0.0, %v2673
        %v2675 = vpop.f32.mrb[0].mxu0
        %v2676 = vadd.f32 0.0, %v2675
        %2677 = vmatprep.mubr.bf16.mxu0 0
        %2678 = vmatmul.mubr.bf16.gmra.mrb[0].mxu0 %v2633
        %v2679 = vpop.f32.mrb[0].mxu0
        %v2680 = vadd.f32 0.0, %v2679
        %v2681 = vpop.f32.mrb[0].mxu0
        %v2682 = vadd.f32 0.0, %v2681
        %v2683 = vpop.f32.mrb[0].mxu0
        %v2684 = vadd.f32 0.0, %v2683
        %v2685 = vpop.f32.mrb[0].mxu0
        %v2686 = vadd.f32 0.0, %v2685
        %2687 = vdwg.mxu0
        %v2688 = vadd.f32 %v2606, %v2670
        %v2689 = vadd.f32 %v2607, %v2672
        %v2690 = vadd.f32 %v2608, %v2674
        %v2691 = vadd.f32 %v2609, %v2676
        %v2692 = vadd.f32 %v2610, %v2680
        %v2693 = vadd.f32 %v2611, %v2682
        %v2694 = vadd.f32 %v2612, %v2684
        %v2695 = vadd.f32 %v2613, %v2686
        %v2696 = vld [vmem:[#allocation2 + $0x8] sm:$0xff]
        %v2697 = vld [vmem:[#allocation2 + $0x10] sm:$0xff]
        %v2698 = vld [vmem:[#allocation2 + $0x18] sm:$0xff]
        %v2699 = vld [vmem:[#allocation2 + $0x28] sm:$0xff]
        %v2700 = vld [vmem:[#allocation2 + $0x30] sm:$0xff]
        %v2701 = vld [vmem:[#allocation2 + $0x38] sm:$0xff]
        %2702 = vrot.lane.b32.xlu0 %v2350, 1
        %v2703 = vpop.permute.xlu0 %2702
        %2704 = vrot.lane.b32.xlu0 %v2357, 1
        %v2705 = vpop.permute.xlu0 %2704
        %v2706 = vsel %vm2538, %v2703, %v2705
        %v2710 = vmul.bf16 %v2696, %v2703
        %v2711 = vmul.bf16 %v2697, %v2706
        %v2712 = vmul.bf16 %v2698, %v2705
        %v2713 = vmul.bf16 %v2699, %v2703
        %v2714 = vmul.bf16 %v2700, %v2706
        %v2715 = vmul.bf16 %v2701, %v2705
        %s2716 = scalar_lea.vmem %s3, 80
        %v2717 = vld [vmem:[%s2716] sm:$0xf]
        %v2718 = vld [vmem:[%s2716 + $0x4] sm:$0xf]
        %v2719 = vld [vmem:[%s2716 + $0x8] sm:$0xf]
        %v2720 = vld [vmem:[%s2716 + $0xc] sm:$0xf]
        %v2725 = vunpack.c.l.b16 %v2717
        %v2726 = vunpack.c.l.b16 %v2718
        %v2727 = vunpack.c.l.b16 %v2719
        %v2728 = vunpack.c.l.b16 %v2720
        %v2729 = vpack.c.b16 %v2726, %v2725
        %v2730 = vpack.c.b16 %v2728, %v2727
        %2737 = vrot.lane.b32.xlu0 %v2710, 127
        %v2738 = vpop.permute.xlu0 %2737
        %2739 = vrot.lane.b32.xlu0 %v2711, 127
        %v2740 = vpop.permute.xlu0 %2739
        %2741 = vrot.lane.b32.xlu0 %v2712, 127
        %v2742 = vpop.permute.xlu0 %2741
        %2743 = vrot.lane.b32.xlu0 %v2713, 127
        %v2744 = vpop.permute.xlu0 %2743
        %2745 = vrot.lane.b32.xlu0 %v2714, 127
        %v2746 = vpop.permute.xlu0 %2745
        %2747 = vrot.lane.b32.xlu0 %v2715, 127
        %v2748 = vpop.permute.xlu0 %2747
        %v2749 = vsel %vm2494, %v2738, %v2740
        %v2750 = vsel %vm2494, %v2740, %v2742
        %v2751 = vsel %vm2494, %v2744, %v2746
        %v2752 = vsel %vm2494, %v2746, %v2748
        %v2758 = vsel %vm2165, %v2729, 0
        %v2761 = vsel %vm2165, %v2730, 0
        %2763 = vmatprep.subr.bf16.mxu0 %v2750
        %2764 = vmatpush1.bf16.msra.mxu0 %v2749
        %2765 = vmatprep.subr.bf16.mxu0 %v2752
        %2766 = vmatpush1.bf16.msra.mxu0 %v2751
        %2767 = vmatprep.subr.bf16.mxu0 0
        %2768 = vmatpush1.bf16.msra.mxu0 0
        %2769 = vmatprep.subr.bf16.mxu0 0
        %2770 = vmatpush1.bf16.msra.mxu0 0
        %2771 = vmatprep.subr.bf16.mxu0 0
        %2772 = vmatpush1.bf16.msra.mxu0 0
        %2773 = vmatprep.subr.bf16.mxu0 0
        %2774 = vmatpush1.bf16.msra.mxu0 0
        %2775 = vmatprep.subr.bf16.mxu0 0
        %2776 = vmatpush1.bf16.msra.mxu0 0
        %2777 = vmatprep.subr.bf16.mxu0 0
        %2778 = vmatpush1.bf16.msra.mxu0 0
        %2779 = vmatprep.subr.bf16.mxu0 0
        %2780 = vmatpush1.bf16.msra.mxu0 0
        %2781 = vmatprep.subr.bf16.mxu0 0
        %2782 = vmatpush1.bf16.msra.mxu0 0
        %2783 = vmatprep.subr.bf16.mxu0 0
        %2784 = vmatpush1.bf16.msra.mxu0 0
        %2785 = vmatprep.subr.bf16.mxu0 0
        %2786 = vmatpush1.bf16.msra.mxu0 0
        %2787 = vmatprep.subr.bf16.mxu0 0
        %2788 = vmatpush1.bf16.msra.mxu0 0
        %2789 = vmatprep.subr.bf16.mxu0 0
        %2790 = vmatpush1.bf16.msra.mxu0 0
        %2791 = vmatprep.subr.bf16.mxu0 0
        %2792 = vmatpush1.bf16.msra.mxu0 0
        %2793 = vmatprep.subr.bf16.mxu0 0
        %2794 = vmatpush1.bf16.msra.mxu0 0
        %2795 = vmatprep.mubr.bf16.mxu0 0
        %2796 = vmatmul.mubr.bf16.gmra.mrb[0].mxu0 %v2758
        %v2797 = vpop.f32.mrb[0].mxu0
        %v2798 = vadd.f32 0.0, %v2797
        %v2799 = vpop.f32.mrb[0].mxu0
        %v2800 = vadd.f32 0.0, %v2799
        %v2801 = vpop.f32.mrb[0].mxu0
        %v2802 = vadd.f32 0.0, %v2801
        %v2803 = vpop.f32.mrb[0].mxu0
        %v2804 = vadd.f32 0.0, %v2803
        %2805 = vmatprep.mubr.bf16.mxu0 0
        %2806 = vmatmul.mubr.bf16.gmra.mrb[0].mxu0 %v2761
        %v2807 = vpop.f32.mrb[0].mxu0
        %v2808 = vadd.f32 0.0, %v2807
        %v2809 = vpop.f32.mrb[0].mxu0
        %v2810 = vadd.f32 0.0, %v2809
        %v2811 = vpop.f32.mrb[0].mxu0
        %v2812 = vadd.f32 0.0, %v2811
        %v2813 = vpop.f32.mrb[0].mxu0
        %v2814 = vadd.f32 0.0, %v2813
        %2815 = vdwg.mxu0
        %v2816 = vadd.f32 %v2688, %v2798
        %v2817 = vadd.f32 %v2689, %v2800
        %v2818 = vadd.f32 %v2690, %v2802
        %v2819 = vadd.f32 %v2691, %v2804
        %v2820 = vadd.f32 %v2692, %v2808
        %v2821 = vadd.f32 %v2693, %v2810
        %v2822 = vadd.f32 %v2694, %v2812
        %v2823 = vadd.f32 %v2695, %v2814
        %2824 = vrot.lane.b32.xlu0 %v2094, 15
        %v2825 = vpop.permute.xlu0 %2824
        %2826 = vrot.lane.b32.xlu0 %v2101, 15
        %v2827 = vpop.permute.xlu0 %2826
        %v2828 = vsel %vm2408, %v2825, %v2827
        %v2832 = vmul.bf16 %v2696, %v2825
        %v2833 = vmul.bf16 %v2697, %v2828
        %v2834 = vmul.bf16 %v2698, %v2827
        %v2835 = vmul.bf16 %v2699, %v2825
        %v2836 = vmul.bf16 %v2700, %v2828
        %v2837 = vmul.bf16 %v2701, %v2827
        %s2838 = scalar_lea.vmem %s3, 96
        %v2839 = vld [vmem:[%s2838] sm:$0xf]
        %v2840 = vld [vmem:[%s2838 + $0x4] sm:$0xf]
        %v2841 = vld [vmem:[%s2838 + $0x8] sm:$0xf]
        %v2842 = vld [vmem:[%s2838 + $0xc] sm:$0xf]
        %v2847 = vunpack.c.l.b16 %v2839
        %v2848 = vunpack.c.l.b16 %v2840
        %v2849 = vunpack.c.l.b16 %v2841
        %v2850 = vunpack.c.l.b16 %v2842
        %v2851 = vpack.c.b16 %v2848, %v2847
        %v2852 = vpack.c.b16 %v2850, %v2849
        %2859 = vrot.lane.b32.xlu0 %v2832, 113
        %v2860 = vpop.permute.xlu0 %2859
        %2861 = vrot.lane.b32.xlu0 %v2833, 113
        %v2862 = vpop.permute.xlu0 %2861
        %2863 = vrot.lane.b32.xlu0 %v2834, 113
        %v2864 = vpop.permute.xlu0 %2863
        %2865 = vrot.lane.b32.xlu0 %v2835, 113
        %v2866 = vpop.permute.xlu0 %2865
        %2867 = vrot.lane.b32.xlu0 %v2836, 113
        %v2868 = vpop.permute.xlu0 %2867
        %2869 = vrot.lane.b32.xlu0 %v2837, 113
        %v2870 = vpop.permute.xlu0 %2869
        %v2871 = vsel %vm2364, %v2860, %v2862
        %v2872 = vsel %vm2364, %v2862, %v2864
        %v2873 = vsel %vm2364, %v2866, %v2868
        %v2874 = vsel %vm2364, %v2868, %v2870
        %v2880 = vsel %vm2165, %v2851, 0
        %v2883 = vsel %vm2165, %v2852, 0
        %2885 = vmatprep.subr.bf16.mxu0 %v2872
        %2886 = vmatpush1.bf16.msra.mxu0 %v2871
        %2887 = vmatprep.subr.bf16.mxu0 %v2874
        %2888 = vmatpush1.bf16.msra.mxu0 %v2873
        %2889 = vmatprep.subr.bf16.mxu0 0
        %2890 = vmatpush1.bf16.msra.mxu0 0
        %2891 = vmatprep.subr.bf16.mxu0 0
        %2892 = vmatpush1.bf16.msra.mxu0 0
        %2893 = vmatprep.subr.bf16.mxu0 0
        %2894 = vmatpush1.bf16.msra.mxu0 0
        %2895 = vmatprep.subr.bf16.mxu0 0
        %2896 = vmatpush1.bf16.msra.mxu0 0
        %2897 = vmatprep.subr.bf16.mxu0 0
        %2898 = vmatpush1.bf16.msra.mxu0 0
        %2899 = vmatprep.subr.bf16.mxu0 0
        %2900 = vmatpush1.bf16.msra.mxu0 0
        %2901 = vmatprep.subr.bf16.mxu0 0
        %2902 = vmatpush1.bf16.msra.mxu0 0
        %2903 = vmatprep.subr.bf16.mxu0 0
        %2904 = vmatpush1.bf16.msra.mxu0 0
        %2905 = vmatprep.subr.bf16.mxu0 0
        %2906 = vmatpush1.bf16.msra.mxu0 0
        %2907 = vmatprep.subr.bf16.mxu0 0
        %2908 = vmatpush1.bf16.msra.mxu0 0
        %2909 = vmatprep.subr.bf16.mxu0 0
        %2910 = vmatpush1.bf16.msra.mxu0 0
        %2911 = vmatprep.subr.bf16.mxu0 0
        %2912 = vmatpush1.bf16.msra.mxu0 0
        %2913 = vmatprep.subr.bf16.mxu0 0
        %2914 = vmatpush1.bf16.msra.mxu0 0
        %2915 = vmatprep.subr.bf16.mxu0 0
        %2916 = vmatpush1.bf16.msra.mxu0 0
        %2917 = vmatprep.mubr.bf16.mxu0 0
        %2918 = vmatmul.mubr.bf16.gmra.mrb[0].mxu0 %v2880
        %v2919 = vpop.f32.mrb[0].mxu0
        %v2920 = vadd.f32 0.0, %v2919
        %v2921 = vpop.f32.mrb[0].mxu0
        %v2922 = vadd.f32 0.0, %v2921
        %v2923 = vpop.f32.mrb[0].mxu0
        %v2924 = vadd.f32 0.0, %v2923
        %v2925 = vpop.f32.mrb[0].mxu0
        %v2926 = vadd.f32 0.0, %v2925
        %2927 = vmatprep.mubr.bf16.mxu0 0
        %2928 = vmatmul.mubr.bf16.gmra.mrb[0].mxu0 %v2883
        %v2929 = vpop.f32.mrb[0].mxu0
        %v2930 = vadd.f32 0.0, %v2929
        %v2931 = vpop.f32.mrb[0].mxu0
        %v2932 = vadd.f32 0.0, %v2931
        %v2933 = vpop.f32.mrb[0].mxu0
        %v2934 = vadd.f32 0.0, %v2933
        %v2935 = vpop.f32.mrb[0].mxu0
        %v2936 = vadd.f32 0.0, %v2935
        %2937 = vdwg.mxu0
        %v2938 = vadd.f32 %v2816, %v2920
        %v2939 = vadd.f32 %v2817, %v2922
        %v2940 = vadd.f32 %v2818, %v2924
        %v2941 = vadd.f32 %v2819, %v2926
        %v2942 = vadd.f32 %v2820, %v2930
        %v2943 = vadd.f32 %v2821, %v2932
        %v2944 = vadd.f32 %v2822, %v2934
        %v2945 = vadd.f32 %v2823, %v2936
        %s2946 = scalar_lea.vmem %s3, 112
        %v2947 = vld [vmem:[%s2946] sm:$0xf]
        %v2948 = vld [vmem:[%s2946 + $0x4] sm:$0xf]
        %v2949 = vld [vmem:[%s2946 + $0x8] sm:$0xf]
        %v2950 = vld [vmem:[%s2946 + $0xc] sm:$0xf]
        %v2955 = vunpack.c.l.b16 %v2947
        %v2956 = vunpack.c.l.b16 %v2948
        %v2957 = vunpack.c.l.b16 %v2949
        %v2958 = vunpack.c.l.b16 %v2950
        %v2959 = vpack.c.b16 %v2956, %v2955
        %v2960 = vpack.c.b16 %v2958, %v2957
        %2967 = vrot.lane.b32.xlu0 %v2696, 112
        %v2968 = vpop.permute.xlu0 %2967
        %2969 = vrot.lane.b32.xlu0 %v2697, 112
        %v2970 = vpop.permute.xlu0 %2969
        %2971 = vrot.lane.b32.xlu0 %v2698, 112
        %v2972 = vpop.permute.xlu0 %2971
        %2973 = vrot.lane.b32.xlu0 %v2699, 112
        %v2974 = vpop.permute.xlu0 %2973
        %2975 = vrot.lane.b32.xlu0 %v2700, 112
        %v2976 = vpop.permute.xlu0 %2975
        %2977 = vrot.lane.b32.xlu0 %v2701, 112
        %v2978 = vpop.permute.xlu0 %2977
        %vm2979 = vcmask 916480
        %v2980 = vsel %vm2979, %v2968, %v2970
        %v2981 = vsel %vm2979, %v2970, %v2972
        %v2982 = vsel %vm2979, %v2974, %v2976
        %v2983 = vsel %vm2979, %v2976, %v2978
        %v2989 = vsel %vm2165, %v2959, 0
        %v2992 = vsel %vm2165, %v2960, 0
        %2994 = vmatprep.subr.bf16.mxu0 %v2981
        %2995 = vmatpush1.bf16.msra.mxu0 %v2980
        %2996 = vmatprep.subr.bf16.mxu0 %v2983
        %2997 = vmatpush1.bf16.msra.mxu0 %v2982
        %2998 = vmatprep.subr.bf16.mxu0 0
        %2999 = vmatpush1.bf16.msra.mxu0 0
        %3000 = vmatprep.subr.bf16.mxu0 0
        %3001 = vmatpush1.bf16.msra.mxu0 0
        %3002 = vmatprep.subr.bf16.mxu0 0
        %3003 = vmatpush1.bf16.msra.mxu0 0
        %3004 = vmatprep.subr.bf16.mxu0 0
        %3005 = vmatpush1.bf16.msra.mxu0 0
        %3006 = vmatprep.subr.bf16.mxu0 0
        %3007 = vmatpush1.bf16.msra.mxu0 0
        %3008 = vmatprep.subr.bf16.mxu0 0
        %3009 = vmatpush1.bf16.msra.mxu0 0
        %3010 = vmatprep.subr.bf16.mxu0 0
        %3011 = vmatpush1.bf16.msra.mxu0 0
        %3012 = vmatprep.subr.bf16.mxu0 0
        %3013 = vmatpush1.bf16.msra.mxu0 0
        %3014 = vmatprep.subr.bf16.mxu0 0
        %3015 = vmatpush1.bf16.msra.mxu0 0
        %3016 = vmatprep.subr.bf16.mxu0 0
        %3017 = vmatpush1.bf16.msra.mxu0 0
        %3018 = vmatprep.subr.bf16.mxu0 0
        %3019 = vmatpush1.bf16.msra.mxu0 0
        %3020 = vmatprep.subr.bf16.mxu0 0
        %3021 = vmatpush1.bf16.msra.mxu0 0
        %3022 = vmatprep.subr.bf16.mxu0 0
        %3023 = vmatpush1.bf16.msra.mxu0 0
        %3024 = vmatprep.subr.bf16.mxu0 0
        %3025 = vmatpush1.bf16.msra.mxu0 0
        %3026 = vmatprep.mubr.bf16.mxu0 0
        %3027 = vmatmul.mubr.bf16.gmra.mrb[0].mxu0 %v2989
        %v3028 = vpop.f32.mrb[0].mxu0
        %v3029 = vadd.f32 0.0, %v3028
        %v3030 = vpop.f32.mrb[0].mxu0
        %v3031 = vadd.f32 0.0, %v3030
        %v3032 = vpop.f32.mrb[0].mxu0
        %v3033 = vadd.f32 0.0, %v3032
        %v3034 = vpop.f32.mrb[0].mxu0
        %v3035 = vadd.f32 0.0, %v3034
        %3036 = vmatprep.mubr.bf16.mxu0 0
        %3037 = vmatmul.mubr.bf16.gmra.mrb[0].mxu0 %v2992
        %v3038 = vpop.f32.mrb[0].mxu0
        %v3039 = vadd.f32 0.0, %v3038
        %v3040 = vpop.f32.mrb[0].mxu0
        %v3041 = vadd.f32 0.0, %v3040
        %v3042 = vpop.f32.mrb[0].mxu0
        %v3043 = vadd.f32 0.0, %v3042
        %v3044 = vpop.f32.mrb[0].mxu0
        %v3045 = vadd.f32 0.0, %v3044
        %3046 = vdwg.mxu0
        %v3047 = vadd.f32 %v2938, %v3029
        %v3048 = vadd.f32 %v2939, %v3031
        %v3049 = vadd.f32 %v2940, %v3033
        %v3050 = vadd.f32 %v2941, %v3035
        %v3051 = vadd.f32 %v2942, %v3039
        %v3052 = vadd.f32 %v2943, %v3041
        %v3053 = vadd.f32 %v2944, %v3043
        %v3054 = vadd.f32 %v2945, %v3045
        %3055 = vrot.lane.b32.xlu0 %v2350, 17
        %v3056 = vpop.permute.xlu0 %3055
        %3057 = vrot.lane.b32.xlu0 %v2357, 17
        %v3058 = vpop.permute.xlu0 %3057
        %v3059 = vsel %vm2253, %v3056, %v3058
        %v3063 = vmul.bf16 %v2696, %v3056
        %v3064 = vmul.bf16 %v2697, %v3059
        %v3065 = vmul.bf16 %v2698, %v3058
        %v3066 = vmul.bf16 %v2699, %v3056
        %v3067 = vmul.bf16 %v2700, %v3059
        %v3068 = vmul.bf16 %v2701, %v3058
        %s3069 = scalar_lea.vmem %s3, 128
        %v3070 = vld [vmem:[%s3069] sm:$0xf]
        %v3071 = vld [vmem:[%s3069 + $0x4] sm:$0xf]
        %v3072 = vld [vmem:[%s3069 + $0x8] sm:$0xf]
        %v3073 = vld [vmem:[%s3069 + $0xc] sm:$0xf]
        %v3078 = vunpack.c.l.b16 %v3070
        %v3079 = vunpack.c.l.b16 %v3071
        %v3080 = vunpack.c.l.b16 %v3072
        %v3081 = vunpack.c.l.b16 %v3073
        %v3082 = vpack.c.b16 %v3079, %v3078
        %v3083 = vpack.c.b16 %v3081, %v3080
        %3090 = vrot.lane.b32.xlu0 %v3063, 111
        %v3091 = vpop.permute.xlu0 %3090
        %3092 = vrot.lane.b32.xlu0 %v3064, 111
        %v3093 = vpop.permute.xlu0 %3092
        %3094 = vrot.lane.b32.xlu0 %v3065, 111
        %v3095 = vpop.permute.xlu0 %3094
        %3096 = vrot.lane.b32.xlu0 %v3066, 111
        %v3097 = vpop.permute.xlu0 %3096
        %3098 = vrot.lane.b32.xlu0 %v3067, 111
        %v3099 = vpop.permute.xlu0 %3098
        %3100 = vrot.lane.b32.xlu0 %v3068, 111
        %v3101 = vpop.permute.xlu0 %3100
        %v3102 = vsel %vm2108, %v3091, %v3093
        %v3103 = vsel %vm2108, %v3093, %v3095
        %v3104 = vsel %vm2108, %v3097, %v3099
        %v3105 = vsel %vm2108, %v3099, %v3101
        %v3111 = vsel %vm2165, %v3082, 0
        %v3114 = vsel %vm2165, %v3083, 0
        %3116 = vmatprep.subr.bf16.mxu0 %v3103
        %3117 = vmatpush1.bf16.msra.mxu0 %v3102
        %3118 = vmatprep.subr.bf16.mxu0 %v3105
        %3119 = vmatpush1.bf16.msra.mxu0 %v3104
        %3120 = vmatprep.subr.bf16.mxu0 0
        %3121 = vmatpush1.bf16.msra.mxu0 0
        %3122 = vmatprep.subr.bf16.mxu0 0
        %3123 = vmatpush1.bf16.msra.mxu0 0
        %3124 = vmatprep.subr.bf16.mxu0 0
        %3125 = vmatpush1.bf16.msra.mxu0 0
        %3126 = vmatprep.subr.bf16.mxu0 0
        %3127 = vmatpush1.bf16.msra.mxu0 0
        %3128 = vmatprep.subr.bf16.mxu0 0
        %3129 = vmatpush1.bf16.msra.mxu0 0
        %3130 = vmatprep.subr.bf16.mxu0 0
        %3131 = vmatpush1.bf16.msra.mxu0 0
        %3132 = vmatprep.subr.bf16.mxu0 0
        %3133 = vmatpush1.bf16.msra.mxu0 0
        %3134 = vmatprep.subr.bf16.mxu0 0
        %3135 = vmatpush1.bf16.msra.mxu0 0
        %3136 = vmatprep.subr.bf16.mxu0 0
        %3137 = vmatpush1.bf16.msra.mxu0 0
        %3138 = vmatprep.subr.bf16.mxu0 0
        %3139 = vmatpush1.bf16.msra.mxu0 0
        %3140 = vmatprep.subr.bf16.mxu0 0
        %3141 = vmatpush1.bf16.msra.mxu0 0
        %3142 = vmatprep.subr.bf16.mxu0 0
        %3143 = vmatpush1.bf16.msra.mxu0 0
        %3144 = vmatprep.subr.bf16.mxu0 0
        %3145 = vmatpush1.bf16.msra.mxu0 0
        %3146 = vmatprep.subr.bf16.mxu0 0
        %3147 = vmatpush1.bf16.msra.mxu0 0
        %3148 = vmatprep.mubr.bf16.mxu0 0
        %3149 = vmatmul.mubr.bf16.gmra.mrb[0].mxu0 %v3111
        %v3150 = vpop.f32.mrb[0].mxu0
        %v3151 = vadd.f32 0.0, %v3150
        %v3152 = vpop.f32.mrb[0].mxu0
        %v3153 = vadd.f32 0.0, %v3152
        %v3154 = vpop.f32.mrb[0].mxu0
        %v3155 = vadd.f32 0.0, %v3154
        %v3156 = vpop.f32.mrb[0].mxu0
        %v3157 = vadd.f32 0.0, %v3156
        %3158 = vmatprep.mubr.bf16.mxu0 0
        %3159 = vmatmul.mubr.bf16.gmra.mrb[0].mxu0 %v3114
        %v3160 = vpop.f32.mrb[0].mxu0
        %v3161 = vadd.f32 0.0, %v3160
        %v3162 = vpop.f32.mrb[0].mxu0
        %v3163 = vadd.f32 0.0, %v3162
        %v3164 = vpop.f32.mrb[0].mxu0
        %v3165 = vadd.f32 0.0, %v3164
        %v3166 = vpop.f32.mrb[0].mxu0
        %v3167 = vadd.f32 0.0, %v3166
        %3168 = vdwg.mxu0
        %v3169 = vadd.f32 %v3047, %v3151
        %v3170 = vadd.f32 %v3048, %v3153
        %v3171 = vadd.f32 %v3049, %v3155
        %v3172 = vadd.f32 %v3050, %v3157
        %v3173 = vadd.f32 %v3051, %v3161
        %v3174 = vadd.f32 %v3052, %v3163
        %v3175 = vadd.f32 %v3053, %v3165
        %v3176 = vadd.f32 %v3054, %v3167
        %v3177 = vld [vmem:[%s5] sm:$0xff]
        %v3178 = vld [vmem:[%s5 + $0x8] sm:$0xff]
        %v3179 = vld [vmem:[%s5 + $0x10] sm:$0xff]
        %v3180 = vld [vmem:[%s5 + $0x18] sm:$0xff]
        %3182 = vset.pattern.permute.xlu0 0
        %3183 = vperm.xlu0 %3182, %v3177
        %v3184 = vpop.permute.xlu0 %3183
        %3187 = vset.pattern.permute.xlu0 0
        %3188 = vperm.xlu0 %3187, %v3178
        %v3189 = vpop.permute.xlu0 %3188
        %3192 = vset.pattern.permute.xlu0 0
        %3193 = vperm.xlu0 %3192, %v3179
        %v3194 = vpop.permute.xlu0 %3193
        %3197 = vset.pattern.permute.xlu0 0
        %3198 = vperm.xlu0 %3197, %v3180
        %v3199 = vpop.permute.xlu0 %3198
        %v3201 = vadd.f32 %v3169, %v3184
        %v3202 = vadd.f32 %v3170, %v3184
        %v3203 = vadd.f32 %v3171, %v3189
        %v3204 = vadd.f32 %v3172, %v3189
        %v3205 = vadd.f32 %v3173, %v3194
        %v3206 = vadd.f32 %v3174, %v3194
        %v3207 = vadd.f32 %v3175, %v3199
        %v3208 = vadd.f32 %v3176, %v3199
        %v3209 = vmax.f32 %v3201, 0.0
        %v3210 = vmax.f32 %v3202, 0.0
        %v3211 = vmax.f32 %v3203, 0.0
        %v3212 = vmax.f32 %v3204, 0.0
        %v3213 = vmax.f32 %v3205, 0.0
        %v3214 = vmax.f32 %v3206, 0.0
        %v3215 = vmax.f32 %v3207, 0.0
        %v3216 = vmax.f32 %v3208, 0.0
        %v3217 = vld [vmem:[%s4] sm:$0xf]
        %v3218 = vld [vmem:[%s4 + $0x4] sm:$0xf]
        %v3219 = vld [vmem:[%s4 + $0x8] sm:$0xf]
        %v3220 = vld [vmem:[%s4 + $0xc] sm:$0xf]
        %v3221 = vpack.c.bf16 %v3211, %v3209
        %v3222 = vpack.c.bf16 %v3212, %v3210
        %v3223 = vpack.c.bf16 %v3215, %v3213
        %v3224 = vpack.c.bf16 %v3216, %v3214
        %s3225 = scalar_lea.vmem %s5, 32
        %v3226 = vld [vmem:[%s3225] sm:$0xff]
        %v3227 = vld [vmem:[%s3225 + $0x8] sm:$0xff]
        %v3228 = vld [vmem:[%s3225 + $0x10] sm:$0xff]
        %v3229 = vld [vmem:[%s3225 + $0x18] sm:$0xff]
        %3231 = vset.pattern.permute.xlu0 0
        %3232 = vperm.xlu0 %3231, %v3226
        %v3233 = vpop.permute.xlu0 %3232
        %3236 = vset.pattern.permute.xlu0 0
        %3237 = vperm.xlu0 %3236, %v3227
        %v3238 = vpop.permute.xlu0 %3237
        %3241 = vset.pattern.permute.xlu0 0
        %3242 = vperm.xlu0 %3241, %v3228
        %v3243 = vpop.permute.xlu0 %3242
        %3246 = vset.pattern.permute.xlu0 0
        %3247 = vperm.xlu0 %3246, %v3229
        %v3248 = vpop.permute.xlu0 %3247
        %v3254 = vunpack.c.l.b16 %v3217
        %v3255 = vunpack.c.l.b16 %v3218
        %v3256 = vunpack.c.l.b16 %v3219
        %v3257 = vunpack.c.l.b16 %v3220
        %v3258 = vpack.c.b16 %v3255, %v3254
        %v3259 = vpack.c.b16 %v3257, %v3256
        %v3261 = vsel %vm2165, %v3258, 0
        %v3264 = vsel %vm2165, %v3259, 0
        %3266 = vmatprep.subr.bf16.mxu0 %v3222
        %3267 = vmatpush1.bf16.msra.mxu0 %v3221
        %3268 = vmatprep.subr.bf16.mxu0 %v3224
        %3269 = vmatpush1.bf16.msra.mxu0 %v3223
        %3270 = vmatprep.subr.bf16.mxu0 0
        %3271 = vmatpush1.bf16.msra.mxu0 0
        %3272 = vmatprep.subr.bf16.mxu0 0
        %3273 = vmatpush1.bf16.msra.mxu0 0
        %3274 = vmatprep.subr.bf16.mxu0 0
        %3275 = vmatpush1.bf16.msra.mxu0 0
        %3276 = vmatprep.subr.bf16.mxu0 0
        %3277 = vmatpush1.bf16.msra.mxu0 0
        %3278 = vmatprep.subr.bf16.mxu0 0
        %3279 = vmatpush1.bf16.msra.mxu0 0
        %3280 = vmatprep.subr.bf16.mxu0 0
        %3281 = vmatpush1.bf16.msra.mxu0 0
        %3282 = vmatprep.subr.bf16.mxu0 0
        %3283 = vmatpush1.bf16.msra.mxu0 0
        %3284 = vmatprep.subr.bf16.mxu0 0
        %3285 = vmatpush1.bf16.msra.mxu0 0
        %3286 = vmatprep.subr.bf16.mxu0 0
        %3287 = vmatpush1.bf16.msra.mxu0 0
        %3288 = vmatprep.subr.bf16.mxu0 0
        %3289 = vmatpush1.bf16.msra.mxu0 0
        %3290 = vmatprep.subr.bf16.mxu0 0
        %3291 = vmatpush1.bf16.msra.mxu0 0
        %3292 = vmatprep.subr.bf16.mxu0 0
        %3293 = vmatpush1.bf16.msra.mxu0 0
        %3294 = vmatprep.subr.bf16.mxu0 0
        %3295 = vmatpush1.bf16.msra.mxu0 0
        %3296 = vmatprep.subr.bf16.mxu0 0
        %3297 = vmatpush1.bf16.msra.mxu0 0
        %3298 = vmatprep.mubr.bf16.mxu0 0
        %3299 = vmatmul.mubr.bf16.gmra.mrb[0].mxu0 %v3261
        %v3300 = vpop.f32.mrb[0].mxu0
        %v3301 = vadd.f32 %v3233, %v3300
        %v3302 = vpop.f32.mrb[0].mxu0
        %v3303 = vadd.f32 %v3233, %v3302
        %v3304 = vpop.f32.mrb[0].mxu0
        %v3305 = vadd.f32 %v3238, %v3304
        %v3306 = vpop.f32.mrb[0].mxu0
        %v3307 = vadd.f32 %v3238, %v3306
        %3308 = vmatprep.mubr.bf16.mxu0 0
        %3309 = vmatmul.mubr.bf16.gmra.mrb[0].mxu0 %v3264
        %v3310 = vpop.f32.mrb[0].mxu0
        %v3311 = vadd.f32 %v3243, %v3310
        %v3312 = vpop.f32.mrb[0].mxu0
        %v3313 = vadd.f32 %v3243, %v3312
        %v3314 = vpop.f32.mrb[0].mxu0
        %v3315 = vadd.f32 %v3248, %v3314
        %v3316 = vpop.f32.mrb[0].mxu0
        %v3317 = vadd.f32 %v3248, %v3316
        %3318 = vdwg.mxu0
        %v3319 = vunpack.c.l.bf16 %v718
        %v3320 = vunpack.c.h.bf16 %v718
        %v3321 = vunpack.c.l.bf16 %v719
        %v3322 = vunpack.c.h.bf16 %v719
        %v3323 = vunpack.c.l.bf16 %v720
        %v3324 = vunpack.c.h.bf16 %v720
        %v3325 = vunpack.c.l.bf16 %v721
        %v3326 = vunpack.c.h.bf16 %v721
        %v3327 = vadd.f32 %v3301, %v3319
        %v3328 = vadd.f32 %v3303, %v3320
        %v3329 = vadd.f32 %v3305, %v3321
        %v3330 = vadd.f32 %v3307, %v3322
        %v3331 = vadd.f32 %v3311, %v3323
        %v3332 = vadd.f32 %v3313, %v3324
        %v3333 = vadd.f32 %v3315, %v3325
        %v3334 = vadd.f32 %v3317, %v3326
        %v3335 = vmax.f32 %v3327, 0.0
        %v3336 = vmax.f32 %v3328, 0.0
        %v3337 = vmax.f32 %v3329, 0.0
        %v3338 = vmax.f32 %v3330, 0.0
        %v3339 = vmax.f32 %v3331, 0.0
        %v3340 = vmax.f32 %v3332, 0.0
        %v3341 = vmax.f32 %v3333, 0.0
        %v3342 = vmax.f32 %v3334, 0.0
        %v3343 = vpack.c.bf16 %v3337, %v3335
        %v3344 = vpack.c.bf16 %v3338, %v3336
        %v3345 = vpack.c.bf16 %v3341, %v3339
        %v3346 = vpack.c.bf16 %v3342, %v3340
        %v3351 = vunpack.c.l.b16 %v3343
        %v3352 = vunpack.c.l.b16 %v3344
        %v3353 = vunpack.c.h.b16 %v3343
        %v3354 = vunpack.c.h.b16 %v3344
        %v3355 = vunpack.c.l.b16 %v3345
        %v3356 = vunpack.c.l.b16 %v3346
        %v3357 = vunpack.c.h.b16 %v3345
        %v3358 = vunpack.c.h.b16 %v3346
        %v3359 = vpack.c.b16 %v3352, %v3351
        %v3360 = vpack.c.b16 %v3354, %v3353
        %v3361 = vpack.c.b16 %v3356, %v3355
        %v3362 = vpack.c.b16 %v3358, %v3357
        %3367 = vst [vmem:[%s696] sm:$0xff] %v3359
        %3368 = vst [vmem:[%s696 + $0x8] sm:$0xff] %v3360
        %3369 = vst [vmem:[%s696 + $0x10] sm:$0xff] %v3361
        %3370 = vst [vmem:[%s696 + $0x18] sm:$0xff] %v3362
        %s3371 = sand.u32 %s227, 1
        %s3372 = scalar_lea.sflag [#allocation6], %s3371
        %s3373 = sand.u32 %s227, 1
        %s3374 = smul.addr %s3373, 32
        %s3375 = scalar_lea.vmem [#allocation5], %s3374
        // Predicated region
        $region131: #{tpu_custom_call.1} parent=121 // pred_check
          %p3376 = pneg %p237
        $region132: #{tpu_custom_call.1} parent=121 // pred_check_branch
          %3378 = sbr.rel (%p3376) target = $region134
        $region133: #{tpu_custom_call.1} parent=121 // pred_region
          %s3379 = smul.u32 2, %s26
          %s3381 = ssub.s32 512, 512
          %3382 = vsyncadd %s3372, %s3381
          %s3383 = smul.addr %s25, 8
          %s3384 = sadd.s32 %s3379, %s3383
          %s3385 = smul.addr %s3384, 64
          %s3386 = scalar_lea.hbm %s7, %s3385
          %s3387 = sshll.u32 %s3375, 4
          %s3388 = int_to_ptr.vmem [resolvable:$true] %s3387
          %3393 = dma.vmem_to_hbm [thread:$0]  %s3388, 512, %s3386, %s3372, 128, 128, 8
        $region134: #{tpu_custom_call.1} parent=121 // pred_fallthru
          _
      $region122: #{tpu_custom_call.1} parent=5 // pred_fallthru
        _
      %p3394 = scmp.le.s32.totalorder 2, %s16
      // Predicated region
      $region135: #{tpu_custom_call.1} parent=5 // pred_check
        %p3395 = pneg %p3394
      $region136: #{tpu_custom_call.1} parent=5 // pred_check_branch
        %3397 = sbr.rel (%p3395) target = $region138
      $region137: #{tpu_custom_call.1} parent=5 // pred_region
        %s3398 = ssub.s32 %s16, 2
        // Predicated region
        $region139: #{tpu_custom_call.1} parent=137 // pred_check
          %p3399 = pneg %p243
        $region140: #{tpu_custom_call.1} parent=137 // pred_check_branch
          %3401 = sbr.rel (%p3399) target = $region142
        $region141: #{tpu_custom_call.1} parent=137 // pred_region
          %s3402 = sand.u32 %s228, 1
          %s3403 = scalar_lea.sflag [#allocation6], %s3402
          %s3404 = sand.u32 %s228, 1
          %s3405 = smul.addr %s3404, 32
          %s3406 = scalar_lea.vmem [#allocation5], %s3405
          %3407 = dma.done %s3403, 512
        $region142: #{tpu_custom_call.1} parent=137 // pred_fallthru
          _
      $region138: #{tpu_custom_call.1} parent=5 // pred_fallthru
        _
    $region6: #{tpu_custom_call.1} parent=1 // loop_footer
      %s20 = sadd.s32 1, %s16
    $region7: #{tpu_custom_call.1} parent=1 // loop_footer_branch
      %15 = sbr.rel target = $region3
    $region8: #{tpu_custom_call.1} parent=1 // loop_exit
      _
    %3408 = vsyncpa [#allocation6], 1
    %s3409 = scalar_lea.sflag [#allocation6], 1
    %3410 = vsyncpa %s3409, 1

</llo_original>
